<compile_context>
chip_gen: v7x
topology: tpu7x:2x2x1
jax: 0.10.0
libtpu: 0.0.40
codegen_flags: <defaults>
</compile_context>

<pallas_src>
import functools

import jax
import jax.numpy as jnp
import numpy as np
from jax.experimental import pallas as pl
from jax.experimental.pallas import tpu as pltpu

EPS = 1e-5
EXPANSION = 4
_BF16 = jnp.bfloat16
LANE = 128                      # lane width: pad channel dims to a multiple

# Scoped-VMEM budget: tiles here are small; stay under v7x's 64 MiB/TensorCore
# physical VMEM (v5e/v6e have 128 MiB).
VMEM_LIMIT = 48 * 1024 * 1024


def _round_up(n, m):
    return -(-n // m) * m


def _pick_tile(m, target):
    """Largest divisor of m that is <= target, preferring multiples of 128,
    then multiples of 8 (fallback: m)."""
    t = min(m, target)
    for step in (128, 8):
        c = t - (t % step)
        while c >= step:
            if m % c == 0:
                return c
            c -= step
    return m


def _params():
    # All grids here are fully parallel (per-tile partial stats): megacore /
    # dual-TensorCore shardable.
    return pltpu.CompilerParams(dimension_semantics=("parallel",),
                                vmem_limit_bytes=VMEM_LIMIT)


def _const_spec(block_shape):
    """BlockSpec for an operand that is identical for every grid step
    (weights, scale/shift rows): constant index_map + single buffering so the
    resident block is not duplicated by the pipeline."""
    index_map = lambda *_: (0,) * len(block_shape)
    try:
        return pl.BlockSpec(block_shape, index_map,
                            pipeline_mode=pl.Buffered(1))
    except Exception:  # jax without pipeline_mode / Buffered: plain resident
        return pl.BlockSpec(block_shape, index_map)


# ---------------------------------------------------------------------------
# Kernels
# ---------------------------------------------------------------------------
def matmul_stats_kernel(*refs, fuse_bn_relu):
    """1x1-conv tile: y = a @ w (bf16 in, f32 acc), y stored bf16, plus
    per-tile partial channel sum / sumsq taken from the f32 accumulator.
    If fuse_bn_relu, the input tile is first passed through the previous
    stage's folded BN + ReLU (scale/shift rows) in-register."""
    if fuse_bn_relu:
        x_ref, sc_ref, sh_ref, w_ref, y_ref, ssum_ref, ssq_ref = refs
        a = jnp.maximum(
            x_ref[...].astype(jnp.float32) * sc_ref[...] + sh_ref[...],
            0.0).astype(_BF16)
    else:
        x_ref, w_ref, y_ref, ssum_ref, ssq_ref = refs
        a = x_ref[...]
    y = jnp.dot(a, w_ref[...], preferred_element_type=jnp.float32)
    y_ref[...] = y.astype(y_ref.dtype)
    ssum_ref[...] = jnp.sum(y, axis=0, keepdims=True).reshape(ssum_ref.shape)
    ssq_ref[...] = jnp.sum(y * y, axis=0, keepdims=True).reshape(ssq_ref.shape)


def dual_matmul_stats_kernel(y2_ref, xs_ref, sc_ref, sh_ref, wa_ref, wb_ref,
                             ya_ref, yb_ref, sa_ref, qa_ref, sb_ref, qb_ref):
    """Fused (bn2+relu -> conv3) + projection-shortcut conv over the same
    M rows.  Outputs stored bf16; per-tile partial stats in f32."""
    a = jnp.maximum(
        y2_ref[...].astype(jnp.float32) * sc_ref[...] + sh_ref[...],
        0.0).astype(_BF16)
    ya = jnp.dot(a, wa_ref[...], preferred_element_type=jnp.float32)
    yb = jnp.dot(xs_ref[...], wb_ref[...], preferred_element_type=jnp.float32)
    ya_ref[...] = ya.astype(ya_ref.dtype)
    yb_ref[...] = yb.astype(yb_ref.dtype)
    sa_ref[...] = jnp.sum(ya, axis=0, keepdims=True).reshape(sa_ref.shape)
    qa_ref[...] = jnp.sum(ya * ya, axis=0, keepdims=True).reshape(qa_ref.shape)
    sb_ref[...] = jnp.sum(yb, axis=0, keepdims=True).reshape(sb_ref.shape)
    qb_ref[...] = jnp.sum(yb * yb, axis=0, keepdims=True).reshape(qb_ref.shape)


def conv3x3_stats_kernel(xq_ref, w_ref, y_ref, ssum_ref, ssq_ref,
                         *, s, Hq, Ho, Wo):
    """3x3 / stride-s conv for one image as a single K=9*Cin MXU matmul.

    xq_ref holds the zero-padded activation, space-to-depth'd by the stride,
    so every tap is a unit-stride static slice.  Everything stays bf16 until
    the MXU (f32 accumulation)."""
    xq = xq_ref[...]                                     # (s*s*Hq, Wq, C) bf16
    c = xq.shape[-1]
    slabs = []
    for kh in range(3):
        for kw in range(3):
            p = (kh % s) * s + (kw % s)                  # parity plane
            a, b = kh // s, kw // s                      # offset in plane
            slabs.append(xq[p * Hq + a: p * Hq + a + Ho, b: b + Wo, :])
    patch = jnp.concatenate(slabs, axis=-1).reshape(Ho * Wo, 9 * c)
    y = jnp.dot(patch, w_ref[...], preferred_element_type=jnp.float32)
    y_ref[...] = y.astype(y_ref.dtype)
    ssum_ref[...] = jnp.sum(y, axis=0, keepdims=True).reshape(ssum_ref.shape)
    ssq_ref[...] = jnp.sum(y * y, axis=0, keepdims=True).reshape(ssq_ref.shape)


def dual_bn_add_relu_kernel(ya_ref, yb_ref, sa_ref, ta_ref, sb_ref, tb_ref,
                            o_ref):
    """out = relu(bn3(y3) + bn_s(y_sc)); identity shortcut uses sb=1, tb=0."""
    v = (ya_ref[...].astype(jnp.float32) * sa_ref[...] + ta_ref[...]
         + yb_ref[...].astype(jnp.float32) * sb_ref[...] + tb_ref[...])
    o_ref[...] = jnp.maximum(v, 0.0).astype(o_ref.dtype)


# ---------------------------------------------------------------------------
# pallas_call wrappers
# ---------------------------------------------------------------------------
def matmul_stats(x2d, w, tile_m, *, scale=None, shift=None, out_dtype=_BF16):
    M, K = x2d.shape
    C = w.shape[1]
    tm = _pick_tile(M, tile_m)
    nt = M // tm
    fuse = scale is not None
    in_specs = [pl.BlockSpec((tm, K), lambda i: (i, 0))]
    args = [x2d]
    if fuse:
        in_specs += [_const_spec((1, K)), _const_spec((1, K))]
        args += [scale, shift]
    in_specs.append(_const_spec((K, C)))
    args.append(w)
    kern = functools.partial(matmul_stats_kernel, fuse_bn_relu=fuse)
    return pl.pallas_call(
        kern,
        out_shape=(jax.ShapeDtypeStruct((M, C), out_dtype),
                   jax.ShapeDtypeStruct((nt, 1, C), jnp.float32),
                   jax.ShapeDtypeStruct((nt, 1, C), jnp.float32)),
        grid=(nt,),
        in_specs=in_specs,
        out_specs=(pl.BlockSpec((tm, C), lambda i: (i, 0)),
                   pl.BlockSpec((1, 1, C), lambda i: (i, 0, 0)),
                   pl.BlockSpec((1, 1, C), lambda i: (i, 0, 0))),
        compiler_params=_params(),
    )(*args)


def dual_matmul_stats(y2, xs, sc2, sh2, wa, wb, tile_m):
    M, Ka = y2.shape
    Kb = xs.shape[1]
    C = wa.shape[1]
    tm = _pick_tile(M, tile_m)
    nt = M // tm
    return pl.pallas_call(
        dual_matmul_stats_kernel,
        out_shape=(jax.ShapeDtypeStruct((M, C), _BF16),
                   jax.ShapeDtypeStruct((M, C), _BF16),
                   jax.ShapeDtypeStruct((nt, 1, C), jnp.float32),
                   jax.ShapeDtypeStruct((nt, 1, C), jnp.float32),
                   jax.ShapeDtypeStruct((nt, 1, C), jnp.float32),
                   jax.ShapeDtypeStruct((nt, 1, C), jnp.float32)),
        grid=(nt,),
        in_specs=[pl.BlockSpec((tm, Ka), lambda i: (i, 0)),
                  pl.BlockSpec((tm, Kb), lambda i: (i, 0)),
                  _const_spec((1, Ka)), _const_spec((1, Ka)),
                  _const_spec((Ka, C)), _const_spec((Kb, C))],
        out_specs=(pl.BlockSpec((tm, C), lambda i: (i, 0)),
                   pl.BlockSpec((tm, C), lambda i: (i, 0)),
                   pl.BlockSpec((1, 1, C), lambda i: (i, 0, 0)),
                   pl.BlockSpec((1, 1, C), lambda i: (i, 0, 0)),
                   pl.BlockSpec((1, 1, C), lambda i: (i, 0, 0)),
                   pl.BlockSpec((1, 1, C), lambda i: (i, 0, 0))),
        compiler_params=_params(),
    )(y2, xs, sc2, sh2, wa, wb)


def conv3x3_stats(xq, w2r, *, s, Hq, Ho, Wo):
    N_img, SH, Wq, C = xq.shape
    Cout = w2r.shape[1]
    Mimg = Ho * Wo
    kern = functools.partial(conv3x3_stats_kernel, s=s, Hq=Hq, Ho=Ho, Wo=Wo)
    return pl.pallas_call(
        kern,
        out_shape=(jax.ShapeDtypeStruct((N_img * Mimg, Cout), _BF16),
                   jax.ShapeDtypeStruct((N_img, 1, Cout), jnp.float32),
                   jax.ShapeDtypeStruct((N_img, 1, Cout), jnp.float32)),
        grid=(N_img,),
        in_specs=[pl.BlockSpec((None, SH, Wq, C), lambda n: (n, 0, 0, 0)),
                  _const_spec((9 * C, Cout))],
        out_specs=(pl.BlockSpec((Mimg, Cout), lambda n: (n, 0)),
                   pl.BlockSpec((1, 1, Cout), lambda n: (n, 0, 0)),
                   pl.BlockSpec((1, 1, Cout), lambda n: (n, 0, 0))),
        compiler_params=_params(),
    )(xq, w2r)


def dual_bn_add_relu(ya, yb, sa, ta, sb, tb, tile_m):
    M, C = ya.shape
    tm = _pick_tile(M, tile_m)
    return pl.pallas_call(
        dual_bn_add_relu_kernel,
        out_shape=jax.ShapeDtypeStruct((M, C), jnp.float32),
        grid=(M // tm,),
        in_specs=[pl.BlockSpec((tm, C), lambda i: (i, 0)),
                  pl.BlockSpec((tm, C), lambda i: (i, 0)),
                  _const_spec((1, C)), _const_spec((1, C)),
                  _const_spec((1, C)), _const_spec((1, C))],
        out_specs=pl.BlockSpec((tm, C), lambda i: (i, 0)),
        compiler_params=_params(),
    )(ya, yb, sa, ta, sb, tb)


# ---------------------------------------------------------------------------
# Host-side glue
# ---------------------------------------------------------------------------
def _fold_bn(psum, psq, gamma, beta, m):
    """Reduce per-tile partial sums and fold mean/var/gamma/beta into a single
    per-channel scale & shift (tiny XLA op)."""
    ssum = jnp.sum(psum, axis=0)                    # (1, C)
    ssq = jnp.sum(psq, axis=0)                      # (1, C)
    mean = ssum / m
    var = jnp.maximum(ssq / m - mean * mean, 0.0)   # one-pass, f32
    scale = gamma * jax.lax.rsqrt(var + EPS)
    shift = beta - mean * scale
    return scale, shift


def _build_tap_planes(o1_nhwc, s):
    """Zero-pad by 1 and space-to-depth by the stride so every 3x3 tap becomes
    a unit-stride static slice inside the kernel (no 9x im2col duplication).
    Stays in bf16 end to end."""
    N, H, W, C = o1_nhwc.shape
    xp = jnp.pad(o1_nhwc, ((0, 0), (1, 1), (1, 1), (0, 0)))
    Hp, Wp = H + 2, W + 2
    Hq, Wq = -(-Hp // s), -(-Wp // s)
    subs = []
    for ph in range(s):
        for pw in range(s):
            sub = xp[:, ph::s, pw::s, :]
            dh, dw = Hq - sub.shape[1], Wq - sub.shape[2]
            if dh or dw:
                sub = jnp.pad(sub, ((0, 0), (0, dh), (0, dw), (0, 0)))
            subs.append(sub)
    xq = jnp.stack(subs, axis=1)                    # (N, s*s, Hq, Wq, C)
    return xq.reshape(N, s * s * Hq, Wq, C), Hq


def _pad_last(a, target):
    d = target - a.shape[-1]
    if d == 0:
        return a
    return jnp.pad(a, [(0, 0)] * (a.ndim - 1) + [(0, d)])


def _pad_mat(w, rows, cols):
    return jnp.pad(w, ((0, rows - w.shape[0]), (0, cols - w.shape[1])))


def init_params(key, in_planes, planes):
    out_c = EXPANSION * planes
    ks = jax.random.split(key, 12)
    p = {}
    # conv weights stored channels-last: 1x1 -> (Cin, Cout); 3x3 -> HWIO.
    p["w1"] = jax.random.normal(ks[0], (in_planes, planes), jnp.float32) / np.sqrt(in_planes)
    p["w2"] = jax.random.normal(ks[1], (3, 3, planes, planes), jnp.float32) / np.sqrt(9 * planes)
    p["w3"] = jax.random.normal(ks[2], (planes, out_c), jnp.float32) / np.sqrt(planes)
    p["ws"] = jax.random.normal(ks[3], (in_planes, out_c), jnp.float32) / np.sqrt(in_planes)
    chans = {"1": planes, "2": planes, "3": out_c, "s": out_c}
    for i, name in enumerate(["1", "2", "3", "s"]):
        c = chans[name]
        p["g" + name] = 1.0 + 0.1 * jax.random.normal(ks[4 + 2 * i], (1, c), jnp.float32)
        p["b" + name] = 0.1 * jax.random.normal(ks[5 + 2 * i], (1, c), jnp.float32)
    return p


def bottleneck_forward(x_nchw, params, stride, tile_m=512):
    # tile_m=512: ~85%+ of HBM roofline on the mem-bound passes (v6e) while
    # still fitting v7x's 64 MiB VMEM with bf16 outputs.
    N, Cin, H, W = x_nchw.shape
    planes = params["w1"].shape[1]
    out_c = params["w3"].shape[1]
    s = stride

    # Pad all channel (lane) dims to a multiple of 128 with zero weights so
    # every block store is lane-dense; padded channels stay exactly 0 and are
    # sliced off at the end (zero beta => BN keeps them at 0).
    cin_p = _round_up(Cin, LANE)
    pln_p = _round_up(planes, LANE)
    oc_p = _round_up(out_c, LANE)

    x = jnp.transpose(x_nchw, (0, 2, 3, 1))              # NHWC, f32
    xp = _pad_last(x, cin_p)
    x_bf = xp.astype(_BF16)

    w1 = _pad_mat(params["w1"], cin_p, pln_p).astype(_BF16)
    w2 = jnp.pad(params["w2"], ((0, 0), (0, 0),
                                (0, pln_p - planes), (0, pln_p - planes)))
    w2r = w2.reshape(9 * pln_p, pln_p).astype(_BF16)      # (kh,kw,cin)-major
    w3 = _pad_mat(params["w3"], pln_p, oc_p).astype(_BF16)

    g1, b1 = _pad_last(params["g1"], pln_p), _pad_last(params["b1"], pln_p)
    g2, b2 = _pad_last(params["g2"], pln_p), _pad_last(params["b2"], pln_p)
    g3, b3 = _pad_last(params["g3"], oc_p), _pad_last(params["b3"], oc_p)

    # --- stage 1: 1x1 conv (+ per-tile BN partial stats) --------------------
    M1 = N * H * W
    y1, s1, q1 = matmul_stats(x_bf.reshape(M1, cin_p), w1, tile_m)
    sc1, sh1 = _fold_bn(s1, q1, g1, b1, M1)
    # bn1+relu as plain jnp so XLA fuses it into the pad / space-to-depth.
    o1 = jnp.maximum(y1.astype(jnp.float32) * sc1 + sh1, 0.0).astype(_BF16)

    # --- stage 2: 3x3 conv (stride s, pad 1) + per-image BN partial stats ---
    Ho = (H - 1) // s + 1
    Wo = (W - 1) // s + 1
    M2 = N * Ho * Wo
    xq, Hq = _build_tap_planes(o1.reshape(N, H, W, pln_p), s)
    y2, s2, q2 = conv3x3_stats(xq, w2r, s=s, Hq=Hq, Ho=Ho, Wo=Wo)
    sc2, sh2 = _fold_bn(s2, q2, g2, b2, M2)

    # --- stage 3 (+ shortcut): bn2+relu fused into conv3 matmul -------------
    if s != 1 or Cin != out_c:
        ws = _pad_mat(params["ws"], cin_p, oc_p).astype(_BF16)
        gs, bs = _pad_last(params["gs"], oc_p), _pad_last(params["bs"], oc_p)
        xs = x_bf[:, ::s, ::s, :].reshape(M2, cin_p)
        y3, ysc, s3, q3, ss, qs = dual_matmul_stats(y2, xs, sc2, sh2, w3, ws,
                                                    tile_m)
        sc3, sh3 = _fold_bn(s3, q3, g3, b3, M2)
        scs, shs = _fold_bn(ss, qs, gs, bs, M2)
        out = dual_bn_add_relu(y3, ysc, sc3, sh3, scs, shs, tile_m)
    else:
        y3, s3, q3 = matmul_stats(y2, w3, tile_m, scale=sc2, shift=sh2)
        sc3, sh3 = _fold_bn(s3, q3, g3, b3, M2)
        res = xp.reshape(M2, oc_p)                        # identity shortcut (f32)
        ones = jnp.ones((1, oc_p), jnp.float32)
        zeros = jnp.zeros((1, oc_p), jnp.float32)
        out = dual_bn_add_relu(y3, res, sc3, sh3, ones, zeros, tile_m)

    out = out.reshape(N, Ho, Wo, oc_p)[..., :out_c]
    return jnp.transpose(out, (0, 3, 1, 2))               # -> NCHW


# ---------------------------------------------------------------------------
# Pure-JAX reference (lax.conv), mirroring bf16-operand / f32-accum numerics
# and the bf16 storage of the raw conv outputs.
# ---------------------------------------------------------------------------
def reference_forward(x_nchw, params, stride):
    s = stride
    x = jnp.transpose(x_nchw, (0, 2, 3, 1))

    def conv(a, w, st, pad):
        return jax.lax.conv_general_dilated(
            a.astype(_BF16), w.astype(_BF16), (st, st), pad,
            dimension_numbers=("NHWC", "HWIO", "NHWC"),
            preferred_element_type=jnp.float32)

    def bn(y, g, b):
        # Stats from the f32 accumulator; apply to the bf16-rounded tensor
        # (mirrors the kernel's bf16 intermediate storage).
        mean = y.mean(axis=(0, 1, 2))
        var = ((y - mean) ** 2).mean(axis=(0, 1, 2))
        scale = g.reshape(-1) * jax.lax.rsqrt(var + EPS)
        shift = b.reshape(-1) - mean * scale
        yq = y.astype(_BF16).astype(jnp.float32)
        return yq * scale + shift

    o1 = jax.nn.relu(bn(conv(x, params["w1"][None, None], 1, "VALID"),
                        params["g1"], params["b1"])).astype(_BF16)
    o2 = jax.nn.relu(bn(conv(o1, params["w2"], s, [(1, 1), (1, 1)]),
                        params["g2"], params["b2"])).astype(_BF16)
    o3 = bn(conv(o2, params["w3"][None, None], 1, "VALID"),
            params["g3"], params["b3"])
    in_c = params["w1"].shape[0]
    out_c = params["w3"].shape[1]
    if s != 1 or in_c != out_c:
        sc = bn(conv(x, params["ws"][None, None], s, "VALID"),
                params["gs"], params["bs"])
    else:
        sc = x
    return jnp.transpose(jax.nn.relu(o3 + sc), (0, 3, 1, 2))


# ---------------------------------------------------------------------------
if __name__ == "__main__":
    key = jax.random.PRNGKey(0)
    k_x1, k_p1, k_x2, k_p2 = jax.random.split(key, 4)

    # Config A: stride-2 downsampling bottleneck with projection shortcut.
    in_planes, planes, stride = 4, 4, 2
    x = jax.random.normal(k_x1, (2, in_planes, 16, 16), jnp.float32)   # NCHW
    params = init_params(k_p1, in_planes, planes)
    fwd = jax.jit(functools.partial(bottleneck_forward, stride=stride))
    out = jax.block_until_ready(fwd(x, params))
    ref = reference_forward(x, params, stride)
    np.testing.assert_allclose(np.asarray(out), np.asarray(ref),
                               rtol=1e-2, atol=1e-2)
    assert out.shape == (2, EXPANSION * planes, 8, 8)

    # Config B: stride-1 bottleneck with identity shortcut (in == 4*planes).
    in_planes, planes, stride = 16, 4, 1
    x2 = jax.random.normal(k_x2, (2, in_planes, 8, 8), jnp.float32)
    params2 = init_params(k_p2, in_planes, planes)
    fwd2 = jax.jit(functools.partial(bottleneck_forward, stride=stride))
    out2 = jax.block_until_ready(fwd2(x2, params2))
    ref2 = reference_forward(x2, params2, stride)
    np.testing.assert_allclose(np.asarray(out2), np.asarray(ref2),
                               rtol=1e-2, atol=1e-2)
    assert out2.shape == (2, EXPANSION * planes, 8, 8)

    print("KERNEL_OK")
</pallas_src>

<mosaic_0001>
module attributes {stable_mosaic.version = 11 : i64} {
  func.func @matmul_stats_kernel(%arg0: i32, %arg1: memref<512x128xbf16, #tpu.memory_space<vmem>>, %arg2: memref<128x128xbf16, #tpu.memory_space<vmem>>, %arg3: memref<512x128xbf16, #tpu.memory_space<vmem>>, %arg4: memref<1x1x128xf32, #tpu.memory_space<vmem>>, %arg5: memref<1x1x128xf32, #tpu.memory_space<vmem>>) attributes {dimension_semantics = [#tpu.dimension_semantics<parallel>], iteration_bounds = array<i64: 1>, scalar_prefetch = 0 : i64, scratch_operands = 0 : i64, tpu.core_type = #tpu.core_type<tc>, window_params = [{transform_indices = @transform_0, window_bounds = array<i64: 512, 128>}, {pipeline_mode = #tpu.pipeline_mode<synchronous>, transform_indices = @transform_1, window_bounds = array<i64: 128, 128>}, {transform_indices = @transform_2, window_bounds = array<i64: 512, 128>}, {transform_indices = @transform_3, window_bounds = array<i64: 1, 1, 128>}, {transform_indices = @transform_4, window_bounds = array<i64: 1, 1, 128>}]} {
    %c0 = arith.constant 0 : index
    %c0_0 = arith.constant 0 : index
    %0 = vector.load %arg1[%c0, %c0_0] : memref<512x128xbf16, #tpu.memory_space<vmem>>, vector<512x128xbf16>
    %c0_1 = arith.constant 0 : index
    %c0_2 = arith.constant 0 : index
    %1 = vector.load %arg2[%c0_1, %c0_2] : memref<128x128xbf16, #tpu.memory_space<vmem>>, vector<128x128xbf16>
    %cst = arith.constant dense<0.000000e+00> : vector<512x128xf32>
    %2 = tpu.matmul %0, %1, %cst {dimension_numbers = #tpu.dot_dimension_numbers<[1], [0], [0], [1], [0, 0, 1, 1], [], []>} : vector<512x128xbf16>, vector<128x128xbf16>, vector<512x128xf32> -> vector<512x128xf32>
    %3 = arith.truncf %2 : vector<512x128xf32> to vector<512x128xbf16>
    %c0_3 = arith.constant 0 : index
    %c0_4 = arith.constant 0 : index
    %4 = vector.load %arg3[%c0_3, %c0_4] : memref<512x128xbf16, #tpu.memory_space<vmem>>, vector<512x128xbf16>
    tpu.vector_store %arg3[%c0_3, %c0_4], %3 {strides = array<i32>} : memref<512x128xbf16, #tpu.memory_space<vmem>>, vector<512x128xbf16>,
    %cst_5 = arith.constant dense<0.000000e+00> : vector<128xf32>
    %5 = vector.multi_reduction <add>, %2, %cst_5 [0] : vector<512x128xf32> to vector<128xf32>
    %6 = vector.shape_cast %5 : vector<128xf32> to vector<1x128xf32>
    %7 = vector.shape_cast %6 : vector<1x128xf32> to vector<1x1x128xf32>
    %c0_6 = arith.constant 0 : index
    %c0_7 = arith.constant 0 : index
    %c0_8 = arith.constant 0 : index
    %8 = vector.load %arg4[%c0_6, %c0_7, %c0_8] : memref<1x1x128xf32, #tpu.memory_space<vmem>>, vector<1x1x128xf32>
    tpu.vector_store %arg4[%c0_6, %c0_7, %c0_8], %7 {strides = array<i32>} : memref<1x1x128xf32, #tpu.memory_space<vmem>>, vector<1x1x128xf32>,
    %9 = arith.mulf %2, %2 : vector<512x128xf32>
    %cst_9 = arith.constant dense<0.000000e+00> : vector<128xf32>
    %10 = vector.multi_reduction <add>, %9, %cst_9 [0] : vector<512x128xf32> to vector<128xf32>
    %11 = vector.shape_cast %10 : vector<128xf32> to vector<1x128xf32>
    %12 = vector.shape_cast %11 : vector<1x128xf32> to vector<1x1x128xf32>
    %c0_10 = arith.constant 0 : index
    %c0_11 = arith.constant 0 : index
    %c0_12 = arith.constant 0 : index
    %13 = vector.load %arg5[%c0_10, %c0_11, %c0_12] : memref<1x1x128xf32, #tpu.memory_space<vmem>>, vector<1x1x128xf32>
    tpu.vector_store %arg5[%c0_10, %c0_11, %c0_12], %12 {strides = array<i32>} : memref<1x1x128xf32, #tpu.memory_space<vmem>>, vector<1x1x128xf32>,
    return
  }
  func.func @transform_0(%arg0: i32) -> (i32, i32) {
    %c0_i32 = arith.constant 0 : i32
    %c0_i32_0 = arith.constant 0 : i32
    return %arg0, %c0_i32 : i32, i32
  }
  func.func @transform_1(%arg0: i32) -> (i32, i32) {
    %c0_i32 = arith.constant 0 : i32
    %c0_i32_0 = arith.constant 0 : i32
    %c0_i32_1 = arith.constant 0 : i32
    return %c0_i32, %c0_i32_0 : i32, i32
  }
  func.func @transform_2(%arg0: i32) -> (i32, i32) {
    %c0_i32 = arith.constant 0 : i32
    %c0_i32_0 = arith.constant 0 : i32
    return %arg0, %c0_i32 : i32, i32
  }
  func.func @transform_3(%arg0: i32) -> (i32, i32, i32) {
    %c0_i32 = arith.constant 0 : i32
    %c0_i32_0 = arith.constant 0 : i32
    %c0_i32_1 = arith.constant 0 : i32
    return %arg0, %c0_i32, %c0_i32_0 : i32, i32, i32
  }
  func.func @transform_4(%arg0: i32) -> (i32, i32, i32) {
    %c0_i32 = arith.constant 0 : i32
    %c0_i32_0 = arith.constant 0 : i32
    %c0_i32_1 = arith.constant 0 : i32
    return %arg0, %c0_i32, %c0_i32_0 : i32, i32, i32
  }
}

module attributes {stable_mosaic.version = 11 : i64} {
  func.func @conv3x3_stats_kernel(%arg0: i32, %arg1: memref<1x36x9x128xbf16, #tpu.memory_space<vmem>>, %arg2: memref<1152x128xbf16, #tpu.memory_space<vmem>>, %arg3: memref<64x128xbf16, #tpu.memory_space<vmem>>, %arg4: memref<1x1x128xf32, #tpu.memory_space<vmem>>, %arg5: memref<1x1x128xf32, #tpu.memory_space<vmem>>) attributes {dimension_semantics = [#tpu.dimension_semantics<parallel>], iteration_bounds = array<i64: 2>, scalar_prefetch = 0 : i64, scratch_operands = 0 : i64, tpu.core_type = #tpu.core_type<tc>, window_params = [{transform_indices = @transform_0, window_bounds = array<i64: 1, 36, 9, 128>}, {pipeline_mode = #tpu.pipeline_mode<synchronous>, transform_indices = @transform_1, window_bounds = array<i64: 1152, 128>}, {transform_indices = @transform_2, window_bounds = array<i64: 64, 128>}, {transform_indices = @transform_3, window_bounds = array<i64: 1, 1, 128>}, {transform_indices = @transform_4, window_bounds = array<i64: 1, 1, 128>}]} {
    %c0 = arith.constant 0 : index
    %c0_0 = arith.constant 0 : index
    %c0_1 = arith.constant 0 : index
    %c0_2 = arith.constant 0 : index
    %0 = vector.load %arg1[%c0, %c0_0, %c0_1, %c0_2] : memref<1x36x9x128xbf16, #tpu.memory_space<vmem>>, vector<1x36x9x128xbf16>
    %1 = vector.shape_cast %0 : vector<1x36x9x128xbf16> to vector<36x9x128xbf16>
    %2 = vector.extract_strided_slice %1 {offsets = [0, 0, 0], sizes = [8, 8, 128], strides = [1, 1, 1]} : vector<36x9x128xbf16> to vector<8x8x128xbf16>
    %3 = vector.extract_strided_slice %1 {offsets = [9, 0, 0], sizes = [8, 8, 128], strides = [1, 1, 1]} : vector<36x9x128xbf16> to vector<8x8x128xbf16>
    %4 = vector.extract_strided_slice %1 {offsets = [0, 1, 0], sizes = [8, 8, 128], strides = [1, 1, 1]} : vector<36x9x128xbf16> to vector<8x8x128xbf16>
    %5 = vector.extract_strided_slice %1 {offsets = [18, 0, 0], sizes = [8, 8, 128], strides = [1, 1, 1]} : vector<36x9x128xbf16> to vector<8x8x128xbf16>
    %6 = vector.extract_strided_slice %1 {offsets = [27, 0, 0], sizes = [8, 8, 128], strides = [1, 1, 1]} : vector<36x9x128xbf16> to vector<8x8x128xbf16>
    %7 = vector.extract_strided_slice %1 {offsets = [18, 1, 0], sizes = [8, 8, 128], strides = [1, 1, 1]} : vector<36x9x128xbf16> to vector<8x8x128xbf16>
    %8 = vector.extract_strided_slice %1 {offsets = [1, 0, 0], sizes = [8, 8, 128], strides = [1, 1, 1]} : vector<36x9x128xbf16> to vector<8x8x128xbf16>
    %9 = vector.extract_strided_slice %1 {offsets = [10, 0, 0], sizes = [8, 8, 128], strides = [1, 1, 1]} : vector<36x9x128xbf16> to vector<8x8x128xbf16>
    %10 = vector.extract_strided_slice %1 {offsets = [1, 1, 0], sizes = [8, 8, 128], strides = [1, 1, 1]} : vector<36x9x128xbf16> to vector<8x8x128xbf16>
    %11 = tpu.concatenate %2, %3, %4, %5, %6, %7, %8, %9, %10 in 2 : vector<8x8x128xbf16>, vector<8x8x128xbf16>, vector<8x8x128xbf16>, vector<8x8x128xbf16>, vector<8x8x128xbf16>, vector<8x8x128xbf16>, vector<8x8x128xbf16>, vector<8x8x128xbf16>, vector<8x8x128xbf16> -> vector<8x8x1152xbf16>
    %12 = vector.shape_cast %11 : vector<8x8x1152xbf16> to vector<64x1152xbf16>
    %c0_3 = arith.constant 0 : index
    %c0_4 = arith.constant 0 : index
    %13 = vector.load %arg2[%c0_3, %c0_4] : memref<1152x128xbf16, #tpu.memory_space<vmem>>, vector<1152x128xbf16>
    %cst = arith.constant dense<0.000000e+00> : vector<64x128xf32>
    %14 = tpu.matmul %12, %13, %cst {dimension_numbers = #tpu.dot_dimension_numbers<[1], [0], [0], [1], [0, 0, 1, 1], [], []>} : vector<64x1152xbf16>, vector<1152x128xbf16>, vector<64x128xf32> -> vector<64x128xf32>
    %15 = arith.truncf %14 : vector<64x128xf32> to vector<64x128xbf16>
    %c0_5 = arith.constant 0 : index
    %c0_6 = arith.constant 0 : index
    %16 = vector.load %arg3[%c0_5, %c0_6] : memref<64x128xbf16, #tpu.memory_space<vmem>>, vector<64x128xbf16>
    tpu.vector_store %arg3[%c0_5, %c0_6], %15 {strides = array<i32>} : memref<64x128xbf16, #tpu.memory_space<vmem>>, vector<64x128xbf16>,
    %cst_7 = arith.constant dense<0.000000e+00> : vector<128xf32>
    %17 = vector.multi_reduction <add>, %14, %cst_7 [0] : vector<64x128xf32> to vector<128xf32>
    %18 = vector.shape_cast %17 : vector<128xf32> to vector<1x128xf32>
    %19 = vector.shape_cast %18 : vector<1x128xf32> to vector<1x1x128xf32>
    %c0_8 = arith.constant 0 : index
    %c0_9 = arith.constant 0 : index
    %c0_10 = arith.constant 0 : index
    %20 = vector.load %arg4[%c0_8, %c0_9, %c0_10] : memref<1x1x128xf32, #tpu.memory_space<vmem>>, vector<1x1x128xf32>
    tpu.vector_store %arg4[%c0_8, %c0_9, %c0_10], %19 {strides = array<i32>} : memref<1x1x128xf32, #tpu.memory_space<vmem>>, vector<1x1x128xf32>,
    %21 = arith.mulf %14, %14 : vector<64x128xf32>
    %cst_11 = arith.constant dense<0.000000e+00> : vector<128xf32>
    %22 = vector.multi_reduction <add>, %21, %cst_11 [0] : vector<64x128xf32> to vector<128xf32>
    %23 = vector.shape_cast %22 : vector<128xf32> to vector<1x128xf32>
    %24 = vector.shape_cast %23 : vector<1x128xf32> to vector<1x1x128xf32>
    %c0_12 = arith.constant 0 : index
    %c0_13 = arith.constant 0 : index
    %c0_14 = arith.constant 0 : index
    %25 = vector.load %arg5[%c0_12, %c0_13, %c0_14] : memref<1x1x128xf32, #tpu.memory_space<vmem>>, vector<1x1x128xf32>
    tpu.vector_store %arg5[%c0_12, %c0_13, %c0_14], %24 {strides = array<i32>} : memref<1x1x128xf32, #tpu.memory_space<vmem>>, vector<1x1x128xf32>,
    return
  }
  func.func @transform_0(%arg0: i32) -> (i32, i32, i32, i32) {
    %c0_i32 = arith.constant 0 : i32
    %c0_i32_0 = arith.constant 0 : i32
    %c0_i32_1 = arith.constant 0 : i32
    %c0_i32_2 = arith.constant 0 : i32
    return %arg0, %c0_i32, %c0_i32_0, %c0_i32_1 : i32, i32, i32, i32
  }
  func.func @transform_1(%arg0: i32) -> (i32, i32) {
    %c0_i32 = arith.constant 0 : i32
    %c0_i32_0 = arith.constant 0 : i32
    %c0_i32_1 = arith.constant 0 : i32
    return %c0_i32, %c0_i32_0 : i32, i32
  }
  func.func @transform_2(%arg0: i32) -> (i32, i32) {
    %c0_i32 = arith.constant 0 : i32
    %c0_i32_0 = arith.constant 0 : i32
    return %arg0, %c0_i32 : i32, i32
  }
  func.func @transform_3(%arg0: i32) -> (i32, i32, i32) {
    %c0_i32 = arith.constant 0 : i32
    %c0_i32_0 = arith.constant 0 : i32
    %c0_i32_1 = arith.constant 0 : i32
    return %arg0, %c0_i32, %c0_i32_0 : i32, i32, i32
  }
  func.func @transform_4(%arg0: i32) -> (i32, i32, i32) {
    %c0_i32 = arith.constant 0 : i32
    %c0_i32_0 = arith.constant 0 : i32
    %c0_i32_1 = arith.constant 0 : i32
    return %arg0, %c0_i32, %c0_i32_0 : i32, i32, i32
  }
}

module attributes {stable_mosaic.version = 11 : i64} {
  func.func @dual_matmul_stats_kernel(%arg0: i32, %arg1: memref<128x128xbf16, #tpu.memory_space<vmem>>, %arg2: memref<128x128xbf16, #tpu.memory_space<vmem>>, %arg3: memref<1x128xf32, #tpu.memory_space<vmem>>, %arg4: memref<1x128xf32, #tpu.memory_space<vmem>>, %arg5: memref<128x128xbf16, #tpu.memory_space<vmem>>, %arg6: memref<128x128xbf16, #tpu.memory_space<vmem>>, %arg7: memref<128x128xbf16, #tpu.memory_space<vmem>>, %arg8: memref<128x128xbf16, #tpu.memory_space<vmem>>, %arg9: memref<1x1x128xf32, #tpu.memory_space<vmem>>, %arg10: memref<1x1x128xf32, #tpu.memory_space<vmem>>, %arg11: memref<1x1x128xf32, #tpu.memory_space<vmem>>, %arg12: memref<1x1x128xf32, #tpu.memory_space<vmem>>) attributes {dimension_semantics = [#tpu.dimension_semantics<parallel>], iteration_bounds = array<i64: 1>, scalar_prefetch = 0 : i64, scratch_operands = 0 : i64, tpu.core_type = #tpu.core_type<tc>, window_params = [{transform_indices = @transform_0, window_bounds = array<i64: 128, 128>}, {transform_indices = @transform_1, window_bounds = array<i64: 128, 128>}, {pipeline_mode = #tpu.pipeline_mode<synchronous>, transform_indices = @transform_2, window_bounds = array<i64: 1, 128>}, {pipeline_mode = #tpu.pipeline_mode<synchronous>, transform_indices = @transform_3, window_bounds = array<i64: 1, 128>}, {pipeline_mode = #tpu.pipeline_mode<synchronous>, transform_indices = @transform_4, window_bounds = array<i64: 128, 128>}, {pipeline_mode = #tpu.pipeline_mode<synchronous>, transform_indices = @transform_5, window_bounds = array<i64: 128, 128>}, {transform_indices = @transform_6, window_bounds = array<i64: 128, 128>}, {transform_indices = @transform_7, window_bounds = array<i64: 128, 128>}, {transform_indices = @transform_8, window_bounds = array<i64: 1, 1, 128>}, {transform_indices = @transform_9, window_bounds = array<i64: 1, 1, 128>}, {transform_indices = @transform_10, window_bounds = array<i64: 1, 1, 128>}, {transform_indices = @transform_11, window_bounds = array<i64: 1, 1, 128>}]} {
    %c0 = arith.constant 0 : index
    %c0_0 = arith.constant 0 : index
    %0 = vector.load %arg1[%c0, %c0_0] : memref<128x128xbf16, #tpu.memory_space<vmem>>, vector<128x128xbf16>
    %1 = arith.extf %0 : vector<128x128xbf16> to vector<128x128xf32>
    %c0_1 = arith.constant 0 : index
    %c0_2 = arith.constant 0 : index
    %2 = vector.load %arg3[%c0_1, %c0_2] : memref<1x128xf32, #tpu.memory_space<vmem>>, vector<1x128xf32>
    %3 = vector.broadcast %2 : vector<1x128xf32> to vector<128x128xf32>
    %4 = arith.mulf %1, %3 : vector<128x128xf32>
    %c0_3 = arith.constant 0 : index
    %c0_4 = arith.constant 0 : index
    %5 = vector.load %arg4[%c0_3, %c0_4] : memref<1x128xf32, #tpu.memory_space<vmem>>, vector<1x128xf32>
    %6 = vector.broadcast %5 : vector<1x128xf32> to vector<128x128xf32>
    %7 = arith.addf %4, %6 : vector<128x128xf32>
    %cst = arith.constant 0.000000e+00 : f32
    %8 = vector.broadcast %cst : f32 to vector<128x128xf32>
    %9 = arith.maximumf %7, %8 : vector<128x128xf32>
    %10 = arith.truncf %9 : vector<128x128xf32> to vector<128x128xbf16>
    %c0_5 = arith.constant 0 : index
    %c0_6 = arith.constant 0 : index
    %11 = vector.load %arg5[%c0_5, %c0_6] : memref<128x128xbf16, #tpu.memory_space<vmem>>, vector<128x128xbf16>
    %cst_7 = arith.constant dense<0.000000e+00> : vector<128x128xf32>
    %12 = tpu.matmul %10, %11, %cst_7 {dimension_numbers = #tpu.dot_dimension_numbers<[1], [0], [0], [1], [0, 0, 1, 1], [], []>} : vector<128x128xbf16>, vector<128x128xbf16>, vector<128x128xf32> -> vector<128x128xf32>
    %c0_8 = arith.constant 0 : index
    %c0_9 = arith.constant 0 : index
    %13 = vector.load %arg2[%c0_8, %c0_9] : memref<128x128xbf16, #tpu.memory_space<vmem>>, vector<128x128xbf16>
    %c0_10 = arith.constant 0 : index
    %c0_11 = arith.constant 0 : index
    %14 = vector.load %arg6[%c0_10, %c0_11] : memref<128x128xbf16, #tpu.memory_space<vmem>>, vector<128x128xbf16>
    %cst_12 = arith.constant dense<0.000000e+00> : vector<128x128xf32>
    %15 = tpu.matmul %13, %14, %cst_12 {dimension_numbers = #tpu.dot_dimension_numbers<[1], [0], [0], [1], [0, 0, 1, 1], [], []>} : vector<128x128xbf16>, vector<128x128xbf16>, vector<128x128xf32> -> vector<128x128xf32>
    %16 = arith.truncf %12 : vector<128x128xf32> to vector<128x128xbf16>
    %c0_13 = arith.constant 0 : index
    %c0_14 = arith.constant 0 : index
    %17 = vector.load %arg7[%c0_13, %c0_14] : memref<128x128xbf16, #tpu.memory_space<vmem>>, vector<128x128xbf16>
    tpu.vector_store %arg7[%c0_13, %c0_14], %16 {strides = array<i32>} : memref<128x128xbf16, #tpu.memory_space<vmem>>, vector<128x128xbf16>,
    %18 = arith.truncf %15 : vector<128x128xf32> to vector<128x128xbf16>
    %c0_15 = arith.constant 0 : index
    %c0_16 = arith.constant 0 : index
    %19 = vector.load %arg8[%c0_15, %c0_16] : memref<128x128xbf16, #tpu.memory_space<vmem>>, vector<128x128xbf16>
    tpu.vector_store %arg8[%c0_15, %c0_16], %18 {strides = array<i32>} : memref<128x128xbf16, #tpu.memory_space<vmem>>, vector<128x128xbf16>,
    %cst_17 = arith.constant dense<0.000000e+00> : vector<128xf32>
    %20 = vector.multi_reduction <add>, %12, %cst_17 [0] : vector<128x128xf32> to vector<128xf32>
    %21 = vector.shape_cast %20 : vector<128xf32> to vector<1x128xf32>
    %22 = vector.shape_cast %21 : vector<1x128xf32> to vector<1x1x128xf32>
    %c0_18 = arith.constant 0 : index
    %c0_19 = arith.constant 0 : index
    %c0_20 = arith.constant 0 : index
    %23 = vector.load %arg9[%c0_18, %c0_19, %c0_20] : memref<1x1x128xf32, #tpu.memory_space<vmem>>, vector<1x1x128xf32>
    tpu.vector_store %arg9[%c0_18, %c0_19, %c0_20], %22 {strides = array<i32>} : memref<1x1x128xf32, #tpu.memory_space<vmem>>, vector<1x1x128xf32>,
    %24 = arith.mulf %12, %12 : vector<128x128xf32>
    %cst_21 = arith.constant dense<0.000000e+00> : vector<128xf32>
    %25 = vector.multi_reduction <add>, %24, %cst_21 [0] : vector<128x128xf32> to vector<128xf32>
    %26 = vector.shape_cast %25 : vector<128xf32> to vector<1x128xf32>
    %27 = vector.shape_cast %26 : vector<1x128xf32> to vector<1x1x128xf32>
    %c0_22 = arith.constant 0 : index
    %c0_23 = arith.constant 0 : index
    %c0_24 = arith.constant 0 : index
    %28 = vector.load %arg10[%c0_22, %c0_23, %c0_24] : memref<1x1x128xf32, #tpu.memory_space<vmem>>, vector<1x1x128xf32>
    tpu.vector_store %arg10[%c0_22, %c0_23, %c0_24], %27 {strides = array<i32>} : memref<1x1x128xf32, #tpu.memory_space<vmem>>, vector<1x1x128xf32>,
    %cst_25 = arith.constant dense<0.000000e+00> : vector<128xf32>
    %29 = vector.multi_reduction <add>, %15, %cst_25 [0] : vector<128x128xf32> to vector<128xf32>
    %30 = vector.shape_cast %29 : vector<128xf32> to vector<1x128xf32>
    %31 = vector.shape_cast %30 : vector<1x128xf32> to vector<1x1x128xf32>
    %c0_26 = arith.constant 0 : index
    %c0_27 = arith.constant 0 : index
    %c0_28 = arith.constant 0 : index
    %32 = vector.load %arg11[%c0_26, %c0_27, %c0_28] : memref<1x1x128xf32, #tpu.memory_space<vmem>>, vector<1x1x128xf32>
    tpu.vector_store %arg11[%c0_26, %c0_27, %c0_28], %31 {strides = array<i32>} : memref<1x1x128xf32, #tpu.memory_space<vmem>>, vector<1x1x128xf32>,
    %33 = arith.mulf %15, %15 : vector<128x128xf32>
    %cst_29 = arith.constant dense<0.000000e+00> : vector<128xf32>
    %34 = vector.multi_reduction <add>, %33, %cst_29 [0] : vector<128x128xf32> to vector<128xf32>
    %35 = vector.shape_cast %34 : vector<128xf32> to vector<1x128xf32>
    %36 = vector.shape_cast %35 : vector<1x128xf32> to vector<1x1x128xf32>
    %c0_30 = arith.constant 0 : index
    %c0_31 = arith.constant 0 : index
    %c0_32 = arith.constant 0 : index
    %37 = vector.load %arg12[%c0_30, %c0_31, %c0_32] : memref<1x1x128xf32, #tpu.memory_space<vmem>>, vector<1x1x128xf32>
    tpu.vector_store %arg12[%c0_30, %c0_31, %c0_32], %36 {strides = array<i32>} : memref<1x1x128xf32, #tpu.memory_space<vmem>>, vector<1x1x128xf32>,
    return
  }
  func.func @transform_0(%arg0: i32) -> (i32, i32) {
    %c0_i32 = arith.constant 0 : i32
    %c0_i32_0 = arith.constant 0 : i32
    return %arg0, %c0_i32 : i32, i32
  }
  func.func @transform_1(%arg0: i32) -> (i32, i32) {
    %c0_i32 = arith.constant 0 : i32
    %c0_i32_0 = arith.constant 0 : i32
    return %arg0, %c0_i32 : i32, i32
  }
  func.func @transform_2(%arg0: i32) -> (i32, i32) {
    %c0_i32 = arith.constant 0 : i32
    %c0_i32_0 = arith.constant 0 : i32
    %c0_i32_1 = arith.constant 0 : i32
    return %c0_i32, %c0_i32_0 : i32, i32
  }
  func.func @transform_3(%arg0: i32) -> (i32, i32) {
    %c0_i32 = arith.constant 0 : i32
    %c0_i32_0 = arith.constant 0 : i32
    %c0_i32_1 = arith.constant 0 : i32
    return %c0_i32, %c0_i32_0 : i32, i32
  }
  func.func @transform_4(%arg0: i32) -> (i32, i32) {
    %c0_i32 = arith.constant 0 : i32
    %c0_i32_0 = arith.constant 0 : i32
    %c0_i32_1 = arith.constant 0 : i32
    return %c0_i32, %c0_i32_0 : i32, i32
  }
  func.func @transform_5(%arg0: i32) -> (i32, i32) {
    %c0_i32 = arith.constant 0 : i32
    %c0_i32_0 = arith.constant 0 : i32
    %c0_i32_1 = arith.constant 0 : i32
    return %c0_i32, %c0_i32_0 : i32, i32
  }
  func.func @transform_6(%arg0: i32) -> (i32, i32) {
    %c0_i32 = arith.constant 0 : i32
    %c0_i32_0 = arith.constant 0 : i32
    return %arg0, %c0_i32 : i32, i32
  }
  func.func @transform_7(%arg0: i32) -> (i32, i32) {
    %c0_i32 = arith.constant 0 : i32
    %c0_i32_0 = arith.constant 0 : i32
    return %arg0, %c0_i32 : i32, i32
  }
  func.func @transform_8(%arg0: i32) -> (i32, i32, i32) {
    %c0_i32 = arith.constant 0 : i32
    %c0_i32_0 = arith.constant 0 : i32
    %c0_i32_1 = arith.constant 0 : i32
    return %arg0, %c0_i32, %c0_i32_0 : i32, i32, i32
  }
  func.func @transform_9(%arg0: i32) -> (i32, i32, i32) {
    %c0_i32 = arith.constant 0 : i32
    %c0_i32_0 = arith.constant 0 : i32
    %c0_i32_1 = arith.constant 0 : i32
    return %arg0, %c0_i32, %c0_i32_0 : i32, i32, i32
  }
  func.func @transform_10(%arg0: i32) -> (i32, i32, i32) {
    %c0_i32 = arith.constant 0 : i32
    %c0_i32_0 = arith.constant 0 : i32
    %c0_i32_1 = arith.constant 0 : i32
    return %arg0, %c0_i32, %c0_i32_0 : i32, i32, i32
  }
  func.func @transform_11(%arg0: i32) -> (i32, i32, i32) {
    %c0_i32 = arith.constant 0 : i32
    %c0_i32_0 = arith.constant 0 : i32
    %c0_i32_1 = arith.constant 0 : i32
    return %arg0, %c0_i32, %c0_i32_0 : i32, i32, i32
  }
}

module attributes {stable_mosaic.version = 11 : i64} {
  func.func @dual_bn_add_relu_kernel(%arg0: i32, %arg1: memref<128x128xbf16, #tpu.memory_space<vmem>>, %arg2: memref<128x128xbf16, #tpu.memory_space<vmem>>, %arg3: memref<1x128xf32, #tpu.memory_space<vmem>>, %arg4: memref<1x128xf32, #tpu.memory_space<vmem>>, %arg5: memref<1x128xf32, #tpu.memory_space<vmem>>, %arg6: memref<1x128xf32, #tpu.memory_space<vmem>>, %arg7: memref<128x128xf32, #tpu.memory_space<vmem>>) attributes {dimension_semantics = [#tpu.dimension_semantics<parallel>], iteration_bounds = array<i64: 1>, scalar_prefetch = 0 : i64, scratch_operands = 0 : i64, tpu.core_type = #tpu.core_type<tc>, window_params = [{transform_indices = @transform_0, window_bounds = array<i64: 128, 128>}, {transform_indices = @transform_1, window_bounds = array<i64: 128, 128>}, {pipeline_mode = #tpu.pipeline_mode<synchronous>, transform_indices = @transform_2, window_bounds = array<i64: 1, 128>}, {pipeline_mode = #tpu.pipeline_mode<synchronous>, transform_indices = @transform_3, window_bounds = array<i64: 1, 128>}, {pipeline_mode = #tpu.pipeline_mode<synchronous>, transform_indices = @transform_4, window_bounds = array<i64: 1, 128>}, {pipeline_mode = #tpu.pipeline_mode<synchronous>, transform_indices = @transform_5, window_bounds = array<i64: 1, 128>}, {transform_indices = @transform_6, window_bounds = array<i64: 128, 128>}]} {
    %c0 = arith.constant 0 : index
    %c0_0 = arith.constant 0 : index
    %0 = vector.load %arg1[%c0, %c0_0] : memref<128x128xbf16, #tpu.memory_space<vmem>>, vector<128x128xbf16>
    %1 = arith.extf %0 : vector<128x128xbf16> to vector<128x128xf32>
    %c0_1 = arith.constant 0 : index
    %c0_2 = arith.constant 0 : index
    %2 = vector.load %arg3[%c0_1, %c0_2] : memref<1x128xf32, #tpu.memory_space<vmem>>, vector<1x128xf32>
    %3 = vector.broadcast %2 : vector<1x128xf32> to vector<128x128xf32>
    %4 = arith.mulf %1, %3 : vector<128x128xf32>
    %c0_3 = arith.constant 0 : index
    %c0_4 = arith.constant 0 : index
    %5 = vector.load %arg4[%c0_3, %c0_4] : memref<1x128xf32, #tpu.memory_space<vmem>>, vector<1x128xf32>
    %6 = vector.broadcast %5 : vector<1x128xf32> to vector<128x128xf32>
    %7 = arith.addf %4, %6 : vector<128x128xf32>
    %c0_5 = arith.constant 0 : index
    %c0_6 = arith.constant 0 : index
    %8 = vector.load %arg2[%c0_5, %c0_6] : memref<128x128xbf16, #tpu.memory_space<vmem>>, vector<128x128xbf16>
    %9 = arith.extf %8 : vector<128x128xbf16> to vector<128x128xf32>
    %c0_7 = arith.constant 0 : index
    %c0_8 = arith.constant 0 : index
    %10 = vector.load %arg5[%c0_7, %c0_8] : memref<1x128xf32, #tpu.memory_space<vmem>>, vector<1x128xf32>
    %11 = vector.broadcast %10 : vector<1x128xf32> to vector<128x128xf32>
    %12 = arith.mulf %9, %11 : vector<128x128xf32>
    %13 = arith.addf %7, %12 : vector<128x128xf32>
    %c0_9 = arith.constant 0 : index
    %c0_10 = arith.constant 0 : index
    %14 = vector.load %arg6[%c0_9, %c0_10] : memref<1x128xf32, #tpu.memory_space<vmem>>, vector<1x128xf32>
    %15 = vector.broadcast %14 : vector<1x128xf32> to vector<128x128xf32>
    %16 = arith.addf %13, %15 : vector<128x128xf32>
    %cst = arith.constant 0.000000e+00 : f32
    %17 = vector.broadcast %cst : f32 to vector<128x128xf32>
    %18 = arith.maximumf %16, %17 : vector<128x128xf32>
    %c0_11 = arith.constant 0 : index
    %c0_12 = arith.constant 0 : index
    %19 = vector.load %arg7[%c0_11, %c0_12] : memref<128x128xf32, #tpu.memory_space<vmem>>, vector<128x128xf32>
    tpu.vector_store %arg7[%c0_11, %c0_12], %18 {strides = array<i32>} : memref<128x128xf32, #tpu.memory_space<vmem>>, vector<128x128xf32>,
    return
  }
  func.func @transform_0(%arg0: i32) -> (i32, i32) {
    %c0_i32 = arith.constant 0 : i32
    %c0_i32_0 = arith.constant 0 : i32
    return %arg0, %c0_i32 : i32, i32
  }
  func.func @transform_1(%arg0: i32) -> (i32, i32) {
    %c0_i32 = arith.constant 0 : i32
    %c0_i32_0 = arith.constant 0 : i32
    return %arg0, %c0_i32 : i32, i32
  }
  func.func @transform_2(%arg0: i32) -> (i32, i32) {
    %c0_i32 = arith.constant 0 : i32
    %c0_i32_0 = arith.constant 0 : i32
    %c0_i32_1 = arith.constant 0 : i32
    return %c0_i32, %c0_i32_0 : i32, i32
  }
  func.func @transform_3(%arg0: i32) -> (i32, i32) {
    %c0_i32 = arith.constant 0 : i32
    %c0_i32_0 = arith.constant 0 : i32
    %c0_i32_1 = arith.constant 0 : i32
    return %c0_i32, %c0_i32_0 : i32, i32
  }
  func.func @transform_4(%arg0: i32) -> (i32, i32) {
    %c0_i32 = arith.constant 0 : i32
    %c0_i32_0 = arith.constant 0 : i32
    %c0_i32_1 = arith.constant 0 : i32
    return %c0_i32, %c0_i32_0 : i32, i32
  }
  func.func @transform_5(%arg0: i32) -> (i32, i32) {
    %c0_i32 = arith.constant 0 : i32
    %c0_i32_0 = arith.constant 0 : i32
    %c0_i32_1 = arith.constant 0 : i32
    return %c0_i32, %c0_i32_0 : i32, i32
  }
  func.func @transform_6(%arg0: i32) -> (i32, i32) {
    %c0_i32 = arith.constant 0 : i32
    %c0_i32_0 = arith.constant 0 : i32
    return %arg0, %c0_i32 : i32, i32
  }
}

</mosaic_0001>

<llo_original>
// kernel: bottleneck_forward.4
$region0: #{bottleneck_forward.4}
  #allocation0 [shape = 'u32[]', space=smem, size = 0x4, offset = 0x4, fixed_abs, tag = 'smem constant byte address 0x4 - core index']
  #allocation1 [shape = 'u32[144,128]{1,0:T(1,128)}', space=vmem, size = 0x12000, scoped, tag = 'internal scratch']
  %s0 = inlined_call_operand.vmem [shape: bf16[512,128], index: 0, kind: input, shape index: {}]
  %s1 = inlined_call_operand.vmem [shape: bf16[128,128], index: 1, kind: input, shape index: {}]
  %s2 = inlined_call_operand.vmem [shape: bf16[512,128], index: 2, kind: output, shape index: {0}]
  %s3 = inlined_call_operand.vmem [shape: f32[1,1,128], index: 3, kind: output, shape index: {1}]
  %s4 = inlined_call_operand.vmem [shape: f32[1,1,128], index: 4, kind: output, shape index: {2}]
  %5 = xla_tuple %s2, %s3, %s4
  %s6 = sld [smem:[#allocation0]]
  $region34: #{bottleneck_forward.4} parent=0
    _
  %s8 = ssub.s32 1, %s6
  %s9 = scalar_select 0, %s8, %s6
  // Predicated region
  $region2: #{bottleneck_forward.4} parent=0 // pred_check
    _
  $region3: #{bottleneck_forward.4} parent=0 // pred_check_branch
    %11 = sbr.rel (0) target = $region5
  $region4: #{bottleneck_forward.4} parent=0 // pred_region
    _
  $region5: #{bottleneck_forward.4} parent=0 // pred_fallthru
    _
  // Predicated region
  $region6: #{bottleneck_forward.4} parent=0 // pred_check
    _
  $region7: #{bottleneck_forward.4} parent=0 // pred_check_branch
    %13 = sbr.rel (0) target = $region9
  $region8: #{bottleneck_forward.4} parent=0 // pred_region
    _
  $region9: #{bottleneck_forward.4} parent=0 // pred_fallthru
    _
  %v15 = vld [vmem:[%s0] sm:$0xf]
  %v16 = vld [vmem:[%s0 + $0x4] sm:$0xf]
  %v17 = vld [vmem:[%s0 + $0x8] sm:$0xf]
  %v18 = vld [vmem:[%s0 + $0xc] sm:$0xf]
  %v19 = vld [vmem:[%s0 + $0x10] sm:$0xf]
  %v20 = vld [vmem:[%s0 + $0x14] sm:$0xf]
  %v21 = vld [vmem:[%s0 + $0x18] sm:$0xf]
  %v22 = vld [vmem:[%s0 + $0x1c] sm:$0xf]
  %v23 = vld [vmem:[%s0 + $0x20] sm:$0xf]
  %v24 = vld [vmem:[%s0 + $0x24] sm:$0xf]
  %v25 = vld [vmem:[%s0 + $0x28] sm:$0xf]
  %v26 = vld [vmem:[%s0 + $0x2c] sm:$0xf]
  %v27 = vld [vmem:[%s0 + $0x30] sm:$0xf]
  %v28 = vld [vmem:[%s0 + $0x34] sm:$0xf]
  %v29 = vld [vmem:[%s0 + $0x38] sm:$0xf]
  %v30 = vld [vmem:[%s0 + $0x3c] sm:$0xf]
  %v31 = vld [vmem:[%s0 + $0x40] sm:$0xf]
  %v32 = vld [vmem:[%s0 + $0x44] sm:$0xf]
  %v33 = vld [vmem:[%s0 + $0x48] sm:$0xf]
  %v34 = vld [vmem:[%s0 + $0x4c] sm:$0xf]
  %v35 = vld [vmem:[%s0 + $0x50] sm:$0xf]
  %v36 = vld [vmem:[%s0 + $0x54] sm:$0xf]
  %v37 = vld [vmem:[%s0 + $0x58] sm:$0xf]
  %v38 = vld [vmem:[%s0 + $0x5c] sm:$0xf]
  %v39 = vld [vmem:[%s0 + $0x60] sm:$0xf]
  %v40 = vld [vmem:[%s0 + $0x64] sm:$0xf]
  %v41 = vld [vmem:[%s0 + $0x68] sm:$0xf]
  %v42 = vld [vmem:[%s0 + $0x6c] sm:$0xf]
  %v43 = vld [vmem:[%s0 + $0x70] sm:$0xf]
  %v44 = vld [vmem:[%s0 + $0x74] sm:$0xf]
  %v45 = vld [vmem:[%s0 + $0x78] sm:$0xf]
  %v46 = vld [vmem:[%s0 + $0x7c] sm:$0xf]
  %v47 = vld [vmem:[%s0 + $0x80] sm:$0xf]
  %v48 = vld [vmem:[%s0 + $0x84] sm:$0xf]
  %v49 = vld [vmem:[%s0 + $0x88] sm:$0xf]
  %v50 = vld [vmem:[%s0 + $0x8c] sm:$0xf]
  %v51 = vld [vmem:[%s0 + $0x90] sm:$0xf]
  %v52 = vld [vmem:[%s0 + $0x94] sm:$0xf]
  %v53 = vld [vmem:[%s0 + $0x98] sm:$0xf]
  %v54 = vld [vmem:[%s0 + $0x9c] sm:$0xf]
  %v55 = vld [vmem:[%s0 + $0xa0] sm:$0xf]
  %v56 = vld [vmem:[%s0 + $0xa4] sm:$0xf]
  %v57 = vld [vmem:[%s0 + $0xa8] sm:$0xf]
  %v58 = vld [vmem:[%s0 + $0xac] sm:$0xf]
  %v59 = vld [vmem:[%s0 + $0xb0] sm:$0xf]
  %v60 = vld [vmem:[%s0 + $0xb4] sm:$0xf]
  %v61 = vld [vmem:[%s0 + $0xb8] sm:$0xf]
  %v62 = vld [vmem:[%s0 + $0xbc] sm:$0xf]
  %v63 = vld [vmem:[%s0 + $0xc0] sm:$0xf]
  %v64 = vld [vmem:[%s0 + $0xc4] sm:$0xf]
  %v65 = vld [vmem:[%s0 + $0xc8] sm:$0xf]
  %v66 = vld [vmem:[%s0 + $0xcc] sm:$0xf]
  %v67 = vld [vmem:[%s0 + $0xd0] sm:$0xf]
  %v68 = vld [vmem:[%s0 + $0xd4] sm:$0xf]
  %v69 = vld [vmem:[%s0 + $0xd8] sm:$0xf]
  %v70 = vld [vmem:[%s0 + $0xdc] sm:$0xf]
  %v71 = vld [vmem:[%s0 + $0xe0] sm:$0xf]
  %v72 = vld [vmem:[%s0 + $0xe4] sm:$0xf]
  %v73 = vld [vmem:[%s0 + $0xe8] sm:$0xf]
  %v74 = vld [vmem:[%s0 + $0xec] sm:$0xf]
  %v75 = vld [vmem:[%s0 + $0xf0] sm:$0xf]
  %v76 = vld [vmem:[%s0 + $0xf4] sm:$0xf]
  %v77 = vld [vmem:[%s0 + $0xf8] sm:$0xf]
  %v78 = vld [vmem:[%s0 + $0xfc] sm:$0xf]
  %v79 = vld [vmem:[%s1] sm:$0xf]
  %v80 = vld [vmem:[%s1 + $0x4] sm:$0xf]
  %v81 = vld [vmem:[%s1 + $0x8] sm:$0xf]
  %v82 = vld [vmem:[%s1 + $0xc] sm:$0xf]
  %v83 = vld [vmem:[%s1 + $0x10] sm:$0xf]
  %v84 = vld [vmem:[%s1 + $0x14] sm:$0xf]
  %v85 = vld [vmem:[%s1 + $0x18] sm:$0xf]
  %v86 = vld [vmem:[%s1 + $0x1c] sm:$0xf]
  %v87 = vld [vmem:[%s1 + $0x20] sm:$0xf]
  %v88 = vld [vmem:[%s1 + $0x24] sm:$0xf]
  %v89 = vld [vmem:[%s1 + $0x28] sm:$0xf]
  %v90 = vld [vmem:[%s1 + $0x2c] sm:$0xf]
  %v91 = vld [vmem:[%s1 + $0x30] sm:$0xf]
  %v92 = vld [vmem:[%s1 + $0x34] sm:$0xf]
  %v93 = vld [vmem:[%s1 + $0x38] sm:$0xf]
  %v94 = vld [vmem:[%s1 + $0x3c] sm:$0xf]
  %v159 = vunpack.c.l.b16 %v15
  %v160 = vunpack.c.l.b16 %v16
  %v161 = vunpack.c.l.b16 %v17
  %v162 = vunpack.c.l.b16 %v18
  %v163 = vunpack.c.l.b16 %v19
  %v164 = vunpack.c.l.b16 %v20
  %v165 = vunpack.c.l.b16 %v21
  %v166 = vunpack.c.l.b16 %v22
  %v167 = vunpack.c.l.b16 %v23
  %v168 = vunpack.c.l.b16 %v24
  %v169 = vunpack.c.l.b16 %v25
  %v170 = vunpack.c.l.b16 %v26
  %v171 = vunpack.c.l.b16 %v27
  %v172 = vunpack.c.l.b16 %v28
  %v173 = vunpack.c.l.b16 %v29
  %v174 = vunpack.c.l.b16 %v30
  %v175 = vunpack.c.l.b16 %v31
  %v176 = vunpack.c.l.b16 %v32
  %v177 = vunpack.c.l.b16 %v33
  %v178 = vunpack.c.l.b16 %v34
  %v179 = vunpack.c.l.b16 %v35
  %v180 = vunpack.c.l.b16 %v36
  %v181 = vunpack.c.l.b16 %v37
  %v182 = vunpack.c.l.b16 %v38
  %v183 = vunpack.c.l.b16 %v39
  %v184 = vunpack.c.l.b16 %v40
  %v185 = vunpack.c.l.b16 %v41
  %v186 = vunpack.c.l.b16 %v42
  %v187 = vunpack.c.l.b16 %v43
  %v188 = vunpack.c.l.b16 %v44
  %v189 = vunpack.c.l.b16 %v45
  %v190 = vunpack.c.l.b16 %v46
  %v191 = vunpack.c.l.b16 %v47
  %v192 = vunpack.c.l.b16 %v48
  %v193 = vunpack.c.l.b16 %v49
  %v194 = vunpack.c.l.b16 %v50
  %v195 = vunpack.c.l.b16 %v51
  %v196 = vunpack.c.l.b16 %v52
  %v197 = vunpack.c.l.b16 %v53
  %v198 = vunpack.c.l.b16 %v54
  %v199 = vunpack.c.l.b16 %v55
  %v200 = vunpack.c.l.b16 %v56
  %v201 = vunpack.c.l.b16 %v57
  %v202 = vunpack.c.l.b16 %v58
  %v203 = vunpack.c.l.b16 %v59
  %v204 = vunpack.c.l.b16 %v60
  %v205 = vunpack.c.l.b16 %v61
  %v206 = vunpack.c.l.b16 %v62
  %v207 = vunpack.c.l.b16 %v63
  %v208 = vunpack.c.l.b16 %v64
  %v209 = vunpack.c.l.b16 %v65
  %v210 = vunpack.c.l.b16 %v66
  %v211 = vunpack.c.l.b16 %v67
  %v212 = vunpack.c.l.b16 %v68
  %v213 = vunpack.c.l.b16 %v69
  %v214 = vunpack.c.l.b16 %v70
  %v215 = vunpack.c.l.b16 %v71
  %v216 = vunpack.c.l.b16 %v72
  %v217 = vunpack.c.l.b16 %v73
  %v218 = vunpack.c.l.b16 %v74
  %v219 = vunpack.c.l.b16 %v75
  %v220 = vunpack.c.l.b16 %v76
  %v221 = vunpack.c.l.b16 %v77
  %v222 = vunpack.c.l.b16 %v78
  %v223 = vpack.c.b16 %v160, %v159
  %v224 = vpack.c.b16 %v162, %v161
  %v225 = vpack.c.b16 %v164, %v163
  %v226 = vpack.c.b16 %v166, %v165
  %v227 = vpack.c.b16 %v168, %v167
  %v228 = vpack.c.b16 %v170, %v169
  %v229 = vpack.c.b16 %v172, %v171
  %v230 = vpack.c.b16 %v174, %v173
  %v231 = vpack.c.b16 %v176, %v175
  %v232 = vpack.c.b16 %v178, %v177
  %v233 = vpack.c.b16 %v180, %v179
  %v234 = vpack.c.b16 %v182, %v181
  %v235 = vpack.c.b16 %v184, %v183
  %v236 = vpack.c.b16 %v186, %v185
  %v237 = vpack.c.b16 %v188, %v187
  %v238 = vpack.c.b16 %v190, %v189
  %v239 = vpack.c.b16 %v192, %v191
  %v240 = vpack.c.b16 %v194, %v193
  %v241 = vpack.c.b16 %v196, %v195
  %v242 = vpack.c.b16 %v198, %v197
  %v243 = vpack.c.b16 %v200, %v199
  %v244 = vpack.c.b16 %v202, %v201
  %v245 = vpack.c.b16 %v204, %v203
  %v246 = vpack.c.b16 %v206, %v205
  %v247 = vpack.c.b16 %v208, %v207
  %v248 = vpack.c.b16 %v210, %v209
  %v249 = vpack.c.b16 %v212, %v211
  %v250 = vpack.c.b16 %v214, %v213
  %v251 = vpack.c.b16 %v216, %v215
  %v252 = vpack.c.b16 %v218, %v217
  %v253 = vpack.c.b16 %v220, %v219
  %v254 = vpack.c.b16 %v222, %v221
  %v303 = vunpack.c.l.b16 %v79
  %v304 = vunpack.c.l.b16 %v80
  %v305 = vunpack.c.l.b16 %v81
  %v306 = vunpack.c.l.b16 %v82
  %v307 = vunpack.c.l.b16 %v83
  %v308 = vunpack.c.l.b16 %v84
  %v309 = vunpack.c.l.b16 %v85
  %v310 = vunpack.c.l.b16 %v86
  %v311 = vunpack.c.l.b16 %v87
  %v312 = vunpack.c.l.b16 %v88
  %v313 = vunpack.c.l.b16 %v89
  %v314 = vunpack.c.l.b16 %v90
  %v315 = vunpack.c.l.b16 %v91
  %v316 = vunpack.c.l.b16 %v92
  %v317 = vunpack.c.l.b16 %v93
  %v318 = vunpack.c.l.b16 %v94
  %v319 = vpack.c.b16 %v304, %v303
  %v320 = vpack.c.b16 %v306, %v305
  %v321 = vpack.c.b16 %v308, %v307
  %v322 = vpack.c.b16 %v310, %v309
  %v323 = vpack.c.b16 %v312, %v311
  %v324 = vpack.c.b16 %v314, %v313
  %v325 = vpack.c.b16 %v316, %v315
  %v326 = vpack.c.b16 %v318, %v317
  %335 = vmatprep.subr.bf16.mxu0 0
  %336 = vmatpush1.bf16.msra.mxu0 %v319
  %337 = vmatprep.subr.bf16.mxu0 0
  %338 = vmatpush1.bf16.msra.mxu0 %v320
  %339 = vmatprep.subr.bf16.mxu0 0
  %340 = vmatpush1.bf16.msra.mxu0 %v321
  %341 = vmatprep.subr.bf16.mxu0 0
  %342 = vmatpush1.bf16.msra.mxu0 %v322
  %343 = vmatprep.subr.bf16.mxu0 0
  %344 = vmatpush1.bf16.msra.mxu0 %v323
  %345 = vmatprep.subr.bf16.mxu0 0
  %346 = vmatpush1.bf16.msra.mxu0 %v324
  %347 = vmatprep.subr.bf16.mxu0 0
  %348 = vmatpush1.bf16.msra.mxu0 %v325
  %349 = vmatprep.subr.bf16.mxu0 0
  %350 = vmatpush1.bf16.msra.mxu0 %v326
  %351 = vmatprep.subr.bf16.mxu0 0
  %352 = vmatpush1.bf16.msra.mxu0 0
  %353 = vmatprep.subr.bf16.mxu0 0
  %354 = vmatpush1.bf16.msra.mxu0 0
  %355 = vmatprep.subr.bf16.mxu0 0
  %356 = vmatpush1.bf16.msra.mxu0 0
  %357 = vmatprep.subr.bf16.mxu0 0
  %358 = vmatpush1.bf16.msra.mxu0 0
  %359 = vmatprep.subr.bf16.mxu0 0
  %360 = vmatpush1.bf16.msra.mxu0 0
  %361 = vmatprep.subr.bf16.mxu0 0
  %362 = vmatpush1.bf16.msra.mxu0 0
  %363 = vmatprep.subr.bf16.mxu0 0
  %364 = vmatpush1.bf16.msra.mxu0 0
  %365 = vmatprep.subr.bf16.mxu0 0
  %366 = vmatpush1.bf16.msra.mxu0 0
  %367 = vmatprep.mubr.bf16.mxu0 0
  %368 = vmatmul.mubr.bf16.gmra.mrb[0].mxu0 %v223
  %v369 = vpop.f32.mrb[0].mxu0
  %v370 = vadd.f32 0.0, %v369
  %v371 = vpop.f32.mrb[0].mxu0
  %v372 = vpop.f32.mrb[0].mxu0
  %v373 = vadd.f32 0.0, %v372
  %v374 = vpop.f32.mrb[0].mxu0
  %375 = vmatprep.mubr.bf16.mxu0 0
  %376 = vmatmul.mubr.bf16.gmra.mrb[0].mxu0 %v224
  %v377 = vpop.f32.mrb[0].mxu0
  %v378 = vadd.f32 0.0, %v377
  %v379 = vpop.f32.mrb[0].mxu0
  %v380 = vpop.f32.mrb[0].mxu0
  %v381 = vadd.f32 0.0, %v380
  %v382 = vpop.f32.mrb[0].mxu0
  %383 = vmatprep.mubr.bf16.mxu0 0
  %384 = vmatmul.mubr.bf16.gmra.mrb[0].mxu0 %v225
  %v385 = vpop.f32.mrb[0].mxu0
  %v386 = vadd.f32 0.0, %v385
  %v387 = vpop.f32.mrb[0].mxu0
  %v388 = vpop.f32.mrb[0].mxu0
  %v389 = vadd.f32 0.0, %v388
  %v390 = vpop.f32.mrb[0].mxu0
  %391 = vmatprep.mubr.bf16.mxu0 0
  %392 = vmatmul.mubr.bf16.gmra.mrb[0].mxu0 %v226
  %v393 = vpop.f32.mrb[0].mxu0
  %v394 = vadd.f32 0.0, %v393
  %v395 = vpop.f32.mrb[0].mxu0
  %v396 = vpop.f32.mrb[0].mxu0
  %v397 = vadd.f32 0.0, %v396
  %v398 = vpop.f32.mrb[0].mxu0
  %399 = vmatprep.mubr.bf16.mxu0 0
  %400 = vmatmul.mubr.bf16.gmra.mrb[0].mxu0 %v227
  %v401 = vpop.f32.mrb[0].mxu0
  %v402 = vadd.f32 0.0, %v401
  %v403 = vpop.f32.mrb[0].mxu0
  %v404 = vpop.f32.mrb[0].mxu0
  %v405 = vadd.f32 0.0, %v404
  %v406 = vpop.f32.mrb[0].mxu0
  %407 = vmatprep.mubr.bf16.mxu0 0
  %408 = vmatmul.mubr.bf16.gmra.mrb[0].mxu0 %v228
  %v409 = vpop.f32.mrb[0].mxu0
  %v410 = vadd.f32 0.0, %v409
  %v411 = vpop.f32.mrb[0].mxu0
  %v412 = vpop.f32.mrb[0].mxu0
  %v413 = vadd.f32 0.0, %v412
  %v414 = vpop.f32.mrb[0].mxu0
  %415 = vmatprep.mubr.bf16.mxu0 0
  %416 = vmatmul.mubr.bf16.gmra.mrb[0].mxu0 %v229
  %v417 = vpop.f32.mrb[0].mxu0
  %v418 = vadd.f32 0.0, %v417
  %v419 = vpop.f32.mrb[0].mxu0
  %v420 = vpop.f32.mrb[0].mxu0
  %v421 = vadd.f32 0.0, %v420
  %v422 = vpop.f32.mrb[0].mxu0
  %423 = vmatprep.mubr.bf16.mxu0 0
  %424 = vmatmul.mubr.bf16.gmra.mrb[0].mxu0 %v230
  %v425 = vpop.f32.mrb[0].mxu0
  %v426 = vadd.f32 0.0, %v425
  %v427 = vpop.f32.mrb[0].mxu0
  %v428 = vpop.f32.mrb[0].mxu0
  %v429 = vadd.f32 0.0, %v428
  %v430 = vpop.f32.mrb[0].mxu0
  %431 = vmatprep.mubr.bf16.mxu0 0
  %432 = vmatmul.mubr.bf16.gmra.mrb[0].mxu0 %v231
  %v433 = vpop.f32.mrb[0].mxu0
  %v434 = vadd.f32 0.0, %v433
  %v435 = vpop.f32.mrb[0].mxu0
  %v436 = vpop.f32.mrb[0].mxu0
  %v437 = vadd.f32 0.0, %v436
  %v438 = vpop.f32.mrb[0].mxu0
  %439 = vmatprep.mubr.bf16.mxu0 0
  %440 = vmatmul.mubr.bf16.gmra.mrb[0].mxu0 %v232
  %v441 = vpop.f32.mrb[0].mxu0
  %v442 = vadd.f32 0.0, %v441
  %v443 = vpop.f32.mrb[0].mxu0
  %v444 = vpop.f32.mrb[0].mxu0
  %v445 = vadd.f32 0.0, %v444
  %v446 = vpop.f32.mrb[0].mxu0
  %447 = vmatprep.mubr.bf16.mxu0 0
  %448 = vmatmul.mubr.bf16.gmra.mrb[0].mxu0 %v233
  %v449 = vpop.f32.mrb[0].mxu0
  %v450 = vadd.f32 0.0, %v449
  %v451 = vpop.f32.mrb[0].mxu0
  %v452 = vpop.f32.mrb[0].mxu0
  %v453 = vadd.f32 0.0, %v452
  %v454 = vpop.f32.mrb[0].mxu0
  %455 = vmatprep.mubr.bf16.mxu0 0
  %456 = vmatmul.mubr.bf16.gmra.mrb[0].mxu0 %v234
  %v457 = vpop.f32.mrb[0].mxu0
  %v458 = vadd.f32 0.0, %v457
  %v459 = vpop.f32.mrb[0].mxu0
  %v460 = vpop.f32.mrb[0].mxu0
  %v461 = vadd.f32 0.0, %v460
  %v462 = vpop.f32.mrb[0].mxu0
  %463 = vmatprep.mubr.bf16.mxu0 0
  %464 = vmatmul.mubr.bf16.gmra.mrb[0].mxu0 %v235
  %v465 = vpop.f32.mrb[0].mxu0
  %v466 = vadd.f32 0.0, %v465
  %v467 = vpop.f32.mrb[0].mxu0
  %v468 = vpop.f32.mrb[0].mxu0
  %v469 = vadd.f32 0.0, %v468
  %v470 = vpop.f32.mrb[0].mxu0
  %471 = vmatprep.mubr.bf16.mxu0 0
  %472 = vmatmul.mubr.bf16.gmra.mrb[0].mxu0 %v236
  %v473 = vpop.f32.mrb[0].mxu0
  %v474 = vadd.f32 0.0, %v473
  %v475 = vpop.f32.mrb[0].mxu0
  %v476 = vpop.f32.mrb[0].mxu0
  %v477 = vadd.f32 0.0, %v476
  %v478 = vpop.f32.mrb[0].mxu0
  %479 = vmatprep.mubr.bf16.mxu0 0
  %480 = vmatmul.mubr.bf16.gmra.mrb[0].mxu0 %v237
  %v481 = vpop.f32.mrb[0].mxu0
  %v482 = vadd.f32 0.0, %v481
  %v483 = vpop.f32.mrb[0].mxu0
  %v484 = vpop.f32.mrb[0].mxu0
  %v485 = vadd.f32 0.0, %v484
  %v486 = vpop.f32.mrb[0].mxu0
  %487 = vmatprep.mubr.bf16.mxu0 0
  %488 = vmatmul.mubr.bf16.gmra.mrb[0].mxu0 %v238
  %v489 = vpop.f32.mrb[0].mxu0
  %v490 = vadd.f32 0.0, %v489
  %v491 = vpop.f32.mrb[0].mxu0
  %v492 = vpop.f32.mrb[0].mxu0
  %v493 = vadd.f32 0.0, %v492
  %v494 = vpop.f32.mrb[0].mxu0
  %495 = vmatprep.mubr.bf16.mxu0 0
  %496 = vmatmul.mubr.bf16.gmra.mrb[0].mxu0 %v239
  %v497 = vpop.f32.mrb[0].mxu0
  %v498 = vadd.f32 0.0, %v497
  %v499 = vpop.f32.mrb[0].mxu0
  %v500 = vpop.f32.mrb[0].mxu0
  %v501 = vadd.f32 0.0, %v500
  %v502 = vpop.f32.mrb[0].mxu0
  %503 = vmatprep.mubr.bf16.mxu0 0
  %504 = vmatmul.mubr.bf16.gmra.mrb[0].mxu0 %v240
  %v505 = vpop.f32.mrb[0].mxu0
  %v506 = vadd.f32 0.0, %v505
  %v507 = vpop.f32.mrb[0].mxu0
  %v508 = vpop.f32.mrb[0].mxu0
  %v509 = vadd.f32 0.0, %v508
  %v510 = vpop.f32.mrb[0].mxu0
  %511 = vmatprep.mubr.bf16.mxu0 0
  %512 = vmatmul.mubr.bf16.gmra.mrb[0].mxu0 %v241
  %v513 = vpop.f32.mrb[0].mxu0
  %v514 = vadd.f32 0.0, %v513
  %v515 = vpop.f32.mrb[0].mxu0
  %v516 = vpop.f32.mrb[0].mxu0
  %v517 = vadd.f32 0.0, %v516
  %v518 = vpop.f32.mrb[0].mxu0
  %519 = vmatprep.mubr.bf16.mxu0 0
  %520 = vmatmul.mubr.bf16.gmra.mrb[0].mxu0 %v242
  %v521 = vpop.f32.mrb[0].mxu0
  %v522 = vadd.f32 0.0, %v521
  %v523 = vpop.f32.mrb[0].mxu0
  %v524 = vpop.f32.mrb[0].mxu0
  %v525 = vadd.f32 0.0, %v524
  %v526 = vpop.f32.mrb[0].mxu0
  %527 = vmatprep.mubr.bf16.mxu0 0
  %528 = vmatmul.mubr.bf16.gmra.mrb[0].mxu0 %v243
  %v529 = vpop.f32.mrb[0].mxu0
  %v530 = vadd.f32 0.0, %v529
  %v531 = vpop.f32.mrb[0].mxu0
  %v532 = vpop.f32.mrb[0].mxu0
  %v533 = vadd.f32 0.0, %v532
  %v534 = vpop.f32.mrb[0].mxu0
  %535 = vmatprep.mubr.bf16.mxu0 0
  %536 = vmatmul.mubr.bf16.gmra.mrb[0].mxu0 %v244
  %v537 = vpop.f32.mrb[0].mxu0
  %v538 = vadd.f32 0.0, %v537
  %v539 = vpop.f32.mrb[0].mxu0
  %v540 = vpop.f32.mrb[0].mxu0
  %v541 = vadd.f32 0.0, %v540
  %v542 = vpop.f32.mrb[0].mxu0
  %543 = vmatprep.mubr.bf16.mxu0 0
  %544 = vmatmul.mubr.bf16.gmra.mrb[0].mxu0 %v245
  %v545 = vpop.f32.mrb[0].mxu0
  %v546 = vadd.f32 0.0, %v545
  %v547 = vpop.f32.mrb[0].mxu0
  %v548 = vpop.f32.mrb[0].mxu0
  %v549 = vadd.f32 0.0, %v548
  %v550 = vpop.f32.mrb[0].mxu0
  %551 = vmatprep.mubr.bf16.mxu0 0
  %552 = vmatmul.mubr.bf16.gmra.mrb[0].mxu0 %v246
  %v553 = vpop.f32.mrb[0].mxu0
  %v554 = vadd.f32 0.0, %v553
  %v555 = vpop.f32.mrb[0].mxu0
  %v556 = vpop.f32.mrb[0].mxu0
  %v557 = vadd.f32 0.0, %v556
  %v558 = vpop.f32.mrb[0].mxu0
  %559 = vmatprep.mubr.bf16.mxu0 0
  %560 = vmatmul.mubr.bf16.gmra.mrb[0].mxu0 %v247
  %v561 = vpop.f32.mrb[0].mxu0
  %v562 = vadd.f32 0.0, %v561
  %v563 = vpop.f32.mrb[0].mxu0
  %v564 = vpop.f32.mrb[0].mxu0
  %v565 = vadd.f32 0.0, %v564
  %v566 = vpop.f32.mrb[0].mxu0
  %567 = vmatprep.mubr.bf16.mxu0 0
  %568 = vmatmul.mubr.bf16.gmra.mrb[0].mxu0 %v248
  %v569 = vpop.f32.mrb[0].mxu0
  %v570 = vadd.f32 0.0, %v569
  %v571 = vpop.f32.mrb[0].mxu0
  %v572 = vpop.f32.mrb[0].mxu0
  %v573 = vadd.f32 0.0, %v572
  %v574 = vpop.f32.mrb[0].mxu0
  %575 = vmatprep.mubr.bf16.mxu0 0
  %576 = vmatmul.mubr.bf16.gmra.mrb[0].mxu0 %v249
  %v577 = vpop.f32.mrb[0].mxu0
  %v578 = vadd.f32 0.0, %v577
  %v579 = vpop.f32.mrb[0].mxu0
  %v580 = vpop.f32.mrb[0].mxu0
  %v581 = vadd.f32 0.0, %v580
  %v582 = vpop.f32.mrb[0].mxu0
  %583 = vmatprep.mubr.bf16.mxu0 0
  %584 = vmatmul.mubr.bf16.gmra.mrb[0].mxu0 %v250
  %v585 = vpop.f32.mrb[0].mxu0
  %v586 = vadd.f32 0.0, %v585
  %v587 = vpop.f32.mrb[0].mxu0
  %v588 = vpop.f32.mrb[0].mxu0
  %v589 = vadd.f32 0.0, %v588
  %v590 = vpop.f32.mrb[0].mxu0
  %591 = vmatprep.mubr.bf16.mxu0 0
  %592 = vmatmul.mubr.bf16.gmra.mrb[0].mxu0 %v251
  %v593 = vpop.f32.mrb[0].mxu0
  %v594 = vadd.f32 0.0, %v593
  %v595 = vpop.f32.mrb[0].mxu0
  %v596 = vpop.f32.mrb[0].mxu0
  %v597 = vadd.f32 0.0, %v596
  %v598 = vpop.f32.mrb[0].mxu0
  %599 = vmatprep.mubr.bf16.mxu0 0
  %600 = vmatmul.mubr.bf16.gmra.mrb[0].mxu0 %v252
  %v601 = vpop.f32.mrb[0].mxu0
  %v602 = vadd.f32 0.0, %v601
  %v603 = vpop.f32.mrb[0].mxu0
  %v604 = vpop.f32.mrb[0].mxu0
  %v605 = vadd.f32 0.0, %v604
  %v606 = vpop.f32.mrb[0].mxu0
  %607 = vmatprep.mubr.bf16.mxu0 0
  %608 = vmatmul.mubr.bf16.gmra.mrb[0].mxu0 %v253
  %v609 = vpop.f32.mrb[0].mxu0
  %v610 = vadd.f32 0.0, %v609
  %v611 = vpop.f32.mrb[0].mxu0
  %v612 = vpop.f32.mrb[0].mxu0
  %v613 = vadd.f32 0.0, %v612
  %v614 = vpop.f32.mrb[0].mxu0
  %615 = vmatprep.mubr.bf16.mxu0 0
  %616 = vmatmul.mubr.bf16.gmra.mrb[0].mxu0 %v254
  %v617 = vpop.f32.mrb[0].mxu0
  %v618 = vadd.f32 0.0, %v617
  %v619 = vpop.f32.mrb[0].mxu0
  %v620 = vpop.f32.mrb[0].mxu0
  %v621 = vadd.f32 0.0, %v620
  %v622 = vpop.f32.mrb[0].mxu0
  %623 = vdwg.mxu0
  %v624 = vpack.c.bf16 %v373, %v370
  %v625 = vpack.c.bf16 %v381, %v378
  %v626 = vpack.c.bf16 %v389, %v386
  %v627 = vpack.c.bf16 %v397, %v394
  %v628 = vpack.c.bf16 %v405, %v402
  %v629 = vpack.c.bf16 %v413, %v410
  %v630 = vpack.c.bf16 %v421, %v418
  %v631 = vpack.c.bf16 %v429, %v426
  %v632 = vpack.c.bf16 %v437, %v434
  %v633 = vpack.c.bf16 %v445, %v442
  %v634 = vpack.c.bf16 %v453, %v450
  %v635 = vpack.c.bf16 %v461, %v458
  %v636 = vpack.c.bf16 %v469, %v466
  %v637 = vpack.c.bf16 %v477, %v474
  %v638 = vpack.c.bf16 %v485, %v482
  %v639 = vpack.c.bf16 %v493, %v490
  %v640 = vpack.c.bf16 %v501, %v498
  %v641 = vpack.c.bf16 %v509, %v506
  %v642 = vpack.c.bf16 %v517, %v514
  %v643 = vpack.c.bf16 %v525, %v522
  %v644 = vpack.c.bf16 %v533, %v530
  %v645 = vpack.c.bf16 %v541, %v538
  %v646 = vpack.c.bf16 %v549, %v546
  %v647 = vpack.c.bf16 %v557, %v554
  %v648 = vpack.c.bf16 %v565, %v562
  %v649 = vpack.c.bf16 %v573, %v570
  %v650 = vpack.c.bf16 %v581, %v578
  %v651 = vpack.c.bf16 %v589, %v586
  %v652 = vpack.c.bf16 %v597, %v594
  %v653 = vpack.c.bf16 %v605, %v602
  %v654 = vpack.c.bf16 %v613, %v610
  %v655 = vpack.c.bf16 %v621, %v618
  %v688 = vunpack.c.l.b16 %v624
  %v689 = vunpack.c.h.b16 %v624
  %v690 = vunpack.c.l.b16 %v625
  %v691 = vunpack.c.h.b16 %v625
  %v692 = vunpack.c.l.b16 %v626
  %v693 = vunpack.c.h.b16 %v626
  %v694 = vunpack.c.l.b16 %v627
  %v695 = vunpack.c.h.b16 %v627
  %v696 = vunpack.c.l.b16 %v628
  %v697 = vunpack.c.h.b16 %v628
  %v698 = vunpack.c.l.b16 %v629
  %v699 = vunpack.c.h.b16 %v629
  %v700 = vunpack.c.l.b16 %v630
  %v701 = vunpack.c.h.b16 %v630
  %v702 = vunpack.c.l.b16 %v631
  %v703 = vunpack.c.h.b16 %v631
  %v704 = vunpack.c.l.b16 %v632
  %v705 = vunpack.c.h.b16 %v632
  %v706 = vunpack.c.l.b16 %v633
  %v707 = vunpack.c.h.b16 %v633
  %v708 = vunpack.c.l.b16 %v634
  %v709 = vunpack.c.h.b16 %v634
  %v710 = vunpack.c.l.b16 %v635
  %v711 = vunpack.c.h.b16 %v635
  %v712 = vunpack.c.l.b16 %v636
  %v713 = vunpack.c.h.b16 %v636
  %v714 = vunpack.c.l.b16 %v637
  %v715 = vunpack.c.h.b16 %v637
  %v716 = vunpack.c.l.b16 %v638
  %v717 = vunpack.c.h.b16 %v638
  %v718 = vunpack.c.l.b16 %v639
  %v719 = vunpack.c.h.b16 %v639
  %v720 = vunpack.c.l.b16 %v640
  %v721 = vunpack.c.h.b16 %v640
  %v722 = vunpack.c.l.b16 %v641
  %v723 = vunpack.c.h.b16 %v641
  %v724 = vunpack.c.l.b16 %v642
  %v725 = vunpack.c.h.b16 %v642
  %v726 = vunpack.c.l.b16 %v643
  %v727 = vunpack.c.h.b16 %v643
  %v728 = vunpack.c.l.b16 %v644
  %v729 = vunpack.c.h.b16 %v644
  %v730 = vunpack.c.l.b16 %v645
  %v731 = vunpack.c.h.b16 %v645
  %v732 = vunpack.c.l.b16 %v646
  %v733 = vunpack.c.h.b16 %v646
  %v734 = vunpack.c.l.b16 %v647
  %v735 = vunpack.c.h.b16 %v647
  %v736 = vunpack.c.l.b16 %v648
  %v737 = vunpack.c.h.b16 %v648
  %v738 = vunpack.c.l.b16 %v649
  %v739 = vunpack.c.h.b16 %v649
  %v740 = vunpack.c.l.b16 %v650
  %v741 = vunpack.c.h.b16 %v650
  %v742 = vunpack.c.l.b16 %v651
  %v743 = vunpack.c.h.b16 %v651
  %v744 = vunpack.c.l.b16 %v652
  %v745 = vunpack.c.h.b16 %v652
  %v746 = vunpack.c.l.b16 %v653
  %v747 = vunpack.c.h.b16 %v653
  %v748 = vunpack.c.l.b16 %v654
  %v749 = vunpack.c.h.b16 %v654
  %v750 = vunpack.c.l.b16 %v655
  %v751 = vunpack.c.h.b16 %v655
  %v752 = vpack.c.b16 %v688, %v688
  %v753 = vpack.c.b16 %v689, %v689
  %v754 = vpack.c.b16 %v690, %v690
  %v755 = vpack.c.b16 %v691, %v691
  %v756 = vpack.c.b16 %v692, %v692
  %v757 = vpack.c.b16 %v693, %v693
  %v758 = vpack.c.b16 %v694, %v694
  %v759 = vpack.c.b16 %v695, %v695
  %v760 = vpack.c.b16 %v696, %v696
  %v761 = vpack.c.b16 %v697, %v697
  %v762 = vpack.c.b16 %v698, %v698
  %v763 = vpack.c.b16 %v699, %v699
  %v764 = vpack.c.b16 %v700, %v700
  %v765 = vpack.c.b16 %v701, %v701
  %v766 = vpack.c.b16 %v702, %v702
  %v767 = vpack.c.b16 %v703, %v703
  %v768 = vpack.c.b16 %v704, %v704
  %v769 = vpack.c.b16 %v705, %v705
  %v770 = vpack.c.b16 %v706, %v706
  %v771 = vpack.c.b16 %v707, %v707
  %v772 = vpack.c.b16 %v708, %v708
  %v773 = vpack.c.b16 %v709, %v709
  %v774 = vpack.c.b16 %v710, %v710
  %v775 = vpack.c.b16 %v711, %v711
  %v776 = vpack.c.b16 %v712, %v712
  %v777 = vpack.c.b16 %v713, %v713
  %v778 = vpack.c.b16 %v714, %v714
  %v779 = vpack.c.b16 %v715, %v715
  %v780 = vpack.c.b16 %v716, %v716
  %v781 = vpack.c.b16 %v717, %v717
  %v782 = vpack.c.b16 %v718, %v718
  %v783 = vpack.c.b16 %v719, %v719
  %v784 = vpack.c.b16 %v720, %v720
  %v785 = vpack.c.b16 %v721, %v721
  %v786 = vpack.c.b16 %v722, %v722
  %v787 = vpack.c.b16 %v723, %v723
  %v788 = vpack.c.b16 %v724, %v724
  %v789 = vpack.c.b16 %v725, %v725
  %v790 = vpack.c.b16 %v726, %v726
  %v791 = vpack.c.b16 %v727, %v727
  %v792 = vpack.c.b16 %v728, %v728
  %v793 = vpack.c.b16 %v729, %v729
  %v794 = vpack.c.b16 %v730, %v730
  %v795 = vpack.c.b16 %v731, %v731
  %v796 = vpack.c.b16 %v732, %v732
  %v797 = vpack.c.b16 %v733, %v733
  %v798 = vpack.c.b16 %v734, %v734
  %v799 = vpack.c.b16 %v735, %v735
  %v800 = vpack.c.b16 %v736, %v736
  %v801 = vpack.c.b16 %v737, %v737
  %v802 = vpack.c.b16 %v738, %v738
  %v803 = vpack.c.b16 %v739, %v739
  %v804 = vpack.c.b16 %v740, %v740
  %v805 = vpack.c.b16 %v741, %v741
  %v806 = vpack.c.b16 %v742, %v742
  %v807 = vpack.c.b16 %v743, %v743
  %v808 = vpack.c.b16 %v744, %v744
  %v809 = vpack.c.b16 %v745, %v745
  %v810 = vpack.c.b16 %v746, %v746
  %v811 = vpack.c.b16 %v747, %v747
  %v812 = vpack.c.b16 %v748, %v748
  %v813 = vpack.c.b16 %v749, %v749
  %v814 = vpack.c.b16 %v750, %v750
  %v815 = vpack.c.b16 %v751, %v751
  %880 = vst [vmem:[%s2] sm:$0xf] %v752
  %881 = vst [vmem:[%s2 + $0x4] sm:$0xf] %v753
  %882 = vst [vmem:[%s2 + $0x8] sm:$0xf] %v754
  %883 = vst [vmem:[%s2 + $0xc] sm:$0xf] %v755
  %884 = vst [vmem:[%s2 + $0x10] sm:$0xf] %v756
  %885 = vst [vmem:[%s2 + $0x14] sm:$0xf] %v757
  %886 = vst [vmem:[%s2 + $0x18] sm:$0xf] %v758
  %887 = vst [vmem:[%s2 + $0x1c] sm:$0xf] %v759
  %888 = vst [vmem:[%s2 + $0x20] sm:$0xf] %v760
  %889 = vst [vmem:[%s2 + $0x24] sm:$0xf] %v761
  %890 = vst [vmem:[%s2 + $0x28] sm:$0xf] %v762
  %891 = vst [vmem:[%s2 + $0x2c] sm:$0xf] %v763
  %892 = vst [vmem:[%s2 + $0x30] sm:$0xf] %v764
  %893 = vst [vmem:[%s2 + $0x34] sm:$0xf] %v765
  %894 = vst [vmem:[%s2 + $0x38] sm:$0xf] %v766
  %895 = vst [vmem:[%s2 + $0x3c] sm:$0xf] %v767
  %896 = vst [vmem:[%s2 + $0x40] sm:$0xf] %v768
  %897 = vst [vmem:[%s2 + $0x44] sm:$0xf] %v769
  %898 = vst [vmem:[%s2 + $0x48] sm:$0xf] %v770
  %899 = vst [vmem:[%s2 + $0x4c] sm:$0xf] %v771
  %900 = vst [vmem:[%s2 + $0x50] sm:$0xf] %v772
  %901 = vst [vmem:[%s2 + $0x54] sm:$0xf] %v773
  %902 = vst [vmem:[%s2 + $0x58] sm:$0xf] %v774
  %903 = vst [vmem:[%s2 + $0x5c] sm:$0xf] %v775
  %904 = vst [vmem:[%s2 + $0x60] sm:$0xf] %v776
  %905 = vst [vmem:[%s2 + $0x64] sm:$0xf] %v777
  %906 = vst [vmem:[%s2 + $0x68] sm:$0xf] %v778
  %907 = vst [vmem:[%s2 + $0x6c] sm:$0xf] %v779
  %908 = vst [vmem:[%s2 + $0x70] sm:$0xf] %v780
  %909 = vst [vmem:[%s2 + $0x74] sm:$0xf] %v781
  %910 = vst [vmem:[%s2 + $0x78] sm:$0xf] %v782
  %911 = vst [vmem:[%s2 + $0x7c] sm:$0xf] %v783
  %912 = vst [vmem:[%s2 + $0x80] sm:$0xf] %v784
  %913 = vst [vmem:[%s2 + $0x84] sm:$0xf] %v785
  %914 = vst [vmem:[%s2 + $0x88] sm:$0xf] %v786
  %915 = vst [vmem:[%s2 + $0x8c] sm:$0xf] %v787
  %916 = vst [vmem:[%s2 + $0x90] sm:$0xf] %v788
  %917 = vst [vmem:[%s2 + $0x94] sm:$0xf] %v789
  %918 = vst [vmem:[%s2 + $0x98] sm:$0xf] %v790
  %919 = vst [vmem:[%s2 + $0x9c] sm:$0xf] %v791
  %920 = vst [vmem:[%s2 + $0xa0] sm:$0xf] %v792
  %921 = vst [vmem:[%s2 + $0xa4] sm:$0xf] %v793
  %922 = vst [vmem:[%s2 + $0xa8] sm:$0xf] %v794
  %923 = vst [vmem:[%s2 + $0xac] sm:$0xf] %v795
  %924 = vst [vmem:[%s2 + $0xb0] sm:$0xf] %v796
  %925 = vst [vmem:[%s2 + $0xb4] sm:$0xf] %v797
  %926 = vst [vmem:[%s2 + $0xb8] sm:$0xf] %v798
  %927 = vst [vmem:[%s2 + $0xbc] sm:$0xf] %v799
  %928 = vst [vmem:[%s2 + $0xc0] sm:$0xf] %v800
  %929 = vst [vmem:[%s2 + $0xc4] sm:$0xf] %v801
  %930 = vst [vmem:[%s2 + $0xc8] sm:$0xf] %v802
  %931 = vst [vmem:[%s2 + $0xcc] sm:$0xf] %v803
  %932 = vst [vmem:[%s2 + $0xd0] sm:$0xf] %v804
  %933 = vst [vmem:[%s2 + $0xd4] sm:$0xf] %v805
  %934 = vst [vmem:[%s2 + $0xd8] sm:$0xf] %v806
  %935 = vst [vmem:[%s2 + $0xdc] sm:$0xf] %v807
  %936 = vst [vmem:[%s2 + $0xe0] sm:$0xf] %v808
  %937 = vst [vmem:[%s2 + $0xe4] sm:$0xf] %v809
  %938 = vst [vmem:[%s2 + $0xe8] sm:$0xf] %v810
  %939 = vst [vmem:[%s2 + $0xec] sm:$0xf] %v811
  %940 = vst [vmem:[%s2 + $0xf0] sm:$0xf] %v812
  %941 = vst [vmem:[%s2 + $0xf4] sm:$0xf] %v813
  %942 = vst [vmem:[%s2 + $0xf8] sm:$0xf] %v814
  %943 = vst [vmem:[%s2 + $0xfc] sm:$0xf] %v815
  %v944 = vadd.f32 %v370, %v373
  %v945 = vadd.f32 %v944, %v378
  %v946 = vadd.f32 %v945, %v381
  %v947 = vadd.f32 %v946, %v386
  %v948 = vadd.f32 %v947, %v389
  %v949 = vadd.f32 %v948, %v394
  %v950 = vadd.f32 %v949, %v397
  %v951 = vadd.f32 %v950, %v402
  %v952 = vadd.f32 %v951, %v405
  %v953 = vadd.f32 %v952, %v410
  %v954 = vadd.f32 %v953, %v413
  %v955 = vadd.f32 %v954, %v418
  %v956 = vadd.f32 %v955, %v421
  %v957 = vadd.f32 %v956, %v426
  %v958 = vadd.f32 %v957, %v429
  %v959 = vadd.f32 %v958, %v434
  %v960 = vadd.f32 %v959, %v437
  %v961 = vadd.f32 %v960, %v442
  %v962 = vadd.f32 %v961, %v445
  %v963 = vadd.f32 %v962, %v450
  %v964 = vadd.f32 %v963, %v453
  %v965 = vadd.f32 %v964, %v458
  %v966 = vadd.f32 %v965, %v461
  %v967 = vadd.f32 %v966, %v466
  %v968 = vadd.f32 %v967, %v469
  %v969 = vadd.f32 %v968, %v474
  %v970 = vadd.f32 %v969, %v477
  %v971 = vadd.f32 %v970, %v482
  %v972 = vadd.f32 %v971, %v485
  %v973 = vadd.f32 %v972, %v490
  %v974 = vadd.f32 %v973, %v493
  %v975 = vadd.f32 %v974, %v498
  %v976 = vadd.f32 %v975, %v501
  %v977 = vadd.f32 %v976, %v506
  %v978 = vadd.f32 %v977, %v509
  %v979 = vadd.f32 %v978, %v514
  %v980 = vadd.f32 %v979, %v517
  %v981 = vadd.f32 %v980, %v522
  %v982 = vadd.f32 %v981, %v525
  %v983 = vadd.f32 %v982, %v530
  %v984 = vadd.f32 %v983, %v533
  %v985 = vadd.f32 %v984, %v538
  %v986 = vadd.f32 %v985, %v541
  %v987 = vadd.f32 %v986, %v546
  %v988 = vadd.f32 %v987, %v549
  %v989 = vadd.f32 %v988, %v554
  %v990 = vadd.f32 %v989, %v557
  %v991 = vadd.f32 %v990, %v562
  %v992 = vadd.f32 %v991, %v565
  %v993 = vadd.f32 %v992, %v570
  %v994 = vadd.f32 %v993, %v573
  %v995 = vadd.f32 %v994, %v578
  %v996 = vadd.f32 %v995, %v581
  %v997 = vadd.f32 %v996, %v586
  %v998 = vadd.f32 %v997, %v589
  %v999 = vadd.f32 %v998, %v594
  %v1000 = vadd.f32 %v999, %v597
  %v1001 = vadd.f32 %v1000, %v602
  %v1002 = vadd.f32 %v1001, %v605
  %v1003 = vadd.f32 %v1002, %v610
  %v1004 = vadd.f32 %v1003, %v613
  %v1005 = vadd.f32 %v1004, %v618
  %v1006 = vadd.f32 %v1005, %v621
  %v1007 = vrot.slane %v1006, 4
  %v1008 = vadd.f32 %v1006, %v1007
  %v1009 = vrot.slane %v1008, 2
  %v1010 = vadd.f32 %v1008, %v1009
  %v1011 = vrot.slane %v1010, 1
  %v1012 = vadd.f32 %v1010, %v1011
  %1013 = vst [vmem:[%s3] sm:$0x1] %v1012
  %v1014 = vmul.f32 %v370, %v370
  %v1015 = vmul.f32 %v373, %v373
  %v1016 = vmul.f32 %v378, %v378
  %v1017 = vmul.f32 %v381, %v381
  %v1018 = vmul.f32 %v386, %v386
  %v1019 = vmul.f32 %v389, %v389
  %v1020 = vmul.f32 %v394, %v394
  %v1021 = vmul.f32 %v397, %v397
  %v1022 = vmul.f32 %v402, %v402
  %v1023 = vmul.f32 %v405, %v405
  %v1024 = vmul.f32 %v410, %v410
  %v1025 = vmul.f32 %v413, %v413
  %v1026 = vmul.f32 %v418, %v418
  %v1027 = vmul.f32 %v421, %v421
  %v1028 = vmul.f32 %v426, %v426
  %v1029 = vmul.f32 %v429, %v429
  %v1030 = vmul.f32 %v434, %v434
  %v1031 = vmul.f32 %v437, %v437
  %v1032 = vmul.f32 %v442, %v442
  %v1033 = vmul.f32 %v445, %v445
  %v1034 = vmul.f32 %v450, %v450
  %v1035 = vmul.f32 %v453, %v453
  %v1036 = vmul.f32 %v458, %v458
  %v1037 = vmul.f32 %v461, %v461
  %v1038 = vmul.f32 %v466, %v466
  %v1039 = vmul.f32 %v469, %v469
  %v1040 = vmul.f32 %v474, %v474
  %v1041 = vmul.f32 %v477, %v477
  %v1042 = vmul.f32 %v482, %v482
  %v1043 = vmul.f32 %v485, %v485
  %v1044 = vmul.f32 %v490, %v490
  %v1045 = vmul.f32 %v493, %v493
  %v1046 = vmul.f32 %v498, %v498
  %v1047 = vmul.f32 %v501, %v501
  %v1048 = vmul.f32 %v506, %v506
  %v1049 = vmul.f32 %v509, %v509
  %v1050 = vmul.f32 %v514, %v514
  %v1051 = vmul.f32 %v517, %v517
  %v1052 = vmul.f32 %v522, %v522
  %v1053 = vmul.f32 %v525, %v525
  %v1054 = vmul.f32 %v530, %v530
  %v1055 = vmul.f32 %v533, %v533
  %v1056 = vmul.f32 %v538, %v538
  %v1057 = vmul.f32 %v541, %v541
  %v1058 = vmul.f32 %v546, %v546
  %v1059 = vmul.f32 %v549, %v549
  %v1060 = vmul.f32 %v554, %v554
  %v1061 = vmul.f32 %v557, %v557
  %v1062 = vmul.f32 %v562, %v562
  %v1063 = vmul.f32 %v565, %v565
  %v1064 = vmul.f32 %v570, %v570
  %v1065 = vmul.f32 %v573, %v573
  %v1066 = vmul.f32 %v578, %v578
  %v1067 = vmul.f32 %v581, %v581
  %v1068 = vmul.f32 %v586, %v586
  %v1069 = vmul.f32 %v589, %v589
  %v1070 = vmul.f32 %v594, %v594
  %v1071 = vmul.f32 %v597, %v597
  %v1072 = vmul.f32 %v602, %v602
  %v1073 = vmul.f32 %v605, %v605
  %v1074 = vmul.f32 %v610, %v610
  %v1075 = vmul.f32 %v613, %v613
  %v1076 = vmul.f32 %v618, %v618
  %v1077 = vmul.f32 %v621, %v621
  %v1078 = vadd.f32 %v1014, %v1015
  %v1079 = vadd.f32 %v1078, %v1016
  %v1080 = vadd.f32 %v1079, %v1017
  %v1081 = vadd.f32 %v1080, %v1018
  %v1082 = vadd.f32 %v1081, %v1019
  %v1083 = vadd.f32 %v1082, %v1020
  %v1084 = vadd.f32 %v1083, %v1021
  %v1085 = vadd.f32 %v1084, %v1022
  %v1086 = vadd.f32 %v1085, %v1023
  %v1087 = vadd.f32 %v1086, %v1024
  %v1088 = vadd.f32 %v1087, %v1025
  %v1089 = vadd.f32 %v1088, %v1026
  %v1090 = vadd.f32 %v1089, %v1027
  %v1091 = vadd.f32 %v1090, %v1028
  %v1092 = vadd.f32 %v1091, %v1029
  %v1093 = vadd.f32 %v1092, %v1030
  %v1094 = vadd.f32 %v1093, %v1031
  %v1095 = vadd.f32 %v1094, %v1032
  %v1096 = vadd.f32 %v1095, %v1033
  %v1097 = vadd.f32 %v1096, %v1034
  %v1098 = vadd.f32 %v1097, %v1035
  %v1099 = vadd.f32 %v1098, %v1036
  %v1100 = vadd.f32 %v1099, %v1037
  %v1101 = vadd.f32 %v1100, %v1038
  %v1102 = vadd.f32 %v1101, %v1039
  %v1103 = vadd.f32 %v1102, %v1040
  %v1104 = vadd.f32 %v1103, %v1041
  %v1105 = vadd.f32 %v1104, %v1042
  %v1106 = vadd.f32 %v1105, %v1043
  %v1107 = vadd.f32 %v1106, %v1044
  %v1108 = vadd.f32 %v1107, %v1045
  %v1109 = vadd.f32 %v1108, %v1046
  %v1110 = vadd.f32 %v1109, %v1047
  %v1111 = vadd.f32 %v1110, %v1048
  %v1112 = vadd.f32 %v1111, %v1049
  %v1113 = vadd.f32 %v1112, %v1050
  %v1114 = vadd.f32 %v1113, %v1051
  %v1115 = vadd.f32 %v1114, %v1052
  %v1116 = vadd.f32 %v1115, %v1053
  %v1117 = vadd.f32 %v1116, %v1054
  %v1118 = vadd.f32 %v1117, %v1055
  %v1119 = vadd.f32 %v1118, %v1056
  %v1120 = vadd.f32 %v1119, %v1057
  %v1121 = vadd.f32 %v1120, %v1058
  %v1122 = vadd.f32 %v1121, %v1059
  %v1123 = vadd.f32 %v1122, %v1060
  %v1124 = vadd.f32 %v1123, %v1061
  %v1125 = vadd.f32 %v1124, %v1062
  %v1126 = vadd.f32 %v1125, %v1063
  %v1127 = vadd.f32 %v1126, %v1064
  %v1128 = vadd.f32 %v1127, %v1065
  %v1129 = vadd.f32 %v1128, %v1066
  %v1130 = vadd.f32 %v1129, %v1067
  %v1131 = vadd.f32 %v1130, %v1068
  %v1132 = vadd.f32 %v1131, %v1069
  %v1133 = vadd.f32 %v1132, %v1070
  %v1134 = vadd.f32 %v1133, %v1071
  %v1135 = vadd.f32 %v1134, %v1072
  %v1136 = vadd.f32 %v1135, %v1073
  %v1137 = vadd.f32 %v1136, %v1074
  %v1138 = vadd.f32 %v1137, %v1075
  %v1139 = vadd.f32 %v1138, %v1076
  %v1140 = vadd.f32 %v1139, %v1077
  %v1141 = vrot.slane %v1140, 4
  %v1142 = vadd.f32 %v1140, %v1141
  %v1143 = vrot.slane %v1142, 2
  %v1144 = vadd.f32 %v1142, %v1143
  %v1145 = vrot.slane %v1144, 1
  %v1146 = vadd.f32 %v1144, %v1145
  %1147 = vst [vmem:[%s4] sm:$0x1] %v1146
  // Predicated region
  $region10: #{bottleneck_forward.4} parent=0 // pred_check
    _
  $region11: #{bottleneck_forward.4} parent=0 // pred_check_branch
    %1149 = sbr.rel (0) target = $region13
  $region12: #{bottleneck_forward.4} parent=0 // pred_region
    _
  $region13: #{bottleneck_forward.4} parent=0 // pred_fallthru
    _
  // Predicated region
  $region14: #{bottleneck_forward.4} parent=0 // pred_check
    _
  $region15: #{bottleneck_forward.4} parent=0 // pred_check_branch
    %1151 = sbr.rel (0) target = $region17
  $region16: #{bottleneck_forward.4} parent=0 // pred_region
    _
  $region17: #{bottleneck_forward.4} parent=0 // pred_fallthru
    _
  // Predicated region
  $region18: #{bottleneck_forward.4} parent=0 // pred_check
    _
  $region19: #{bottleneck_forward.4} parent=0 // pred_check_branch
    %1153 = sbr.rel (0) target = $region21
  $region20: #{bottleneck_forward.4} parent=0 // pred_region
    _
  $region21: #{bottleneck_forward.4} parent=0 // pred_fallthru
    _
  // Predicated region
  $region22: #{bottleneck_forward.4} parent=0 // pred_check
    _
  $region23: #{bottleneck_forward.4} parent=0 // pred_check_branch
    %1155 = sbr.rel (0) target = $region25
  $region24: #{bottleneck_forward.4} parent=0 // pred_region
    _
  $region25: #{bottleneck_forward.4} parent=0 // pred_fallthru
    _
  // Predicated region
  $region26: #{bottleneck_forward.4} parent=0 // pred_check
    _
  $region27: #{bottleneck_forward.4} parent=0 // pred_check_branch
    %1157 = sbr.rel (0) target = $region29
  $region28: #{bottleneck_forward.4} parent=0 // pred_region
    _
  $region29: #{bottleneck_forward.4} parent=0 // pred_fallthru
    _
  // Predicated region
  $region30: #{bottleneck_forward.4} parent=0 // pred_check
    _
  $region31: #{bottleneck_forward.4} parent=0 // pred_check_branch
    %1159 = sbr.rel (0) target = $region33
  $region32: #{bottleneck_forward.4} parent=0 // pred_region
    _
  $region33: #{bottleneck_forward.4} parent=0 // pred_fallthru
    _

// kernel: bottleneck_forward.5
$region0: #{bottleneck_forward.5}
  #allocation0 [shape = 'u32[]', space=smem, size = 0x4, offset = 0x4, fixed_abs, tag = 'smem constant byte address 0x4 - core index']
  #allocation1 [shape = 'u32[144,128]{1,0:T(1,128)}', space=vmem, size = 0x12000, scoped, tag = 'internal scratch']
  %s0 = inlined_call_operand.vmem [shape: bf16[2,36,9,128], index: 0, kind: input, shape index: {}]
  %s1 = inlined_call_operand.vmem [shape: bf16[1152,128], index: 1, kind: input, shape index: {}]
  %s2 = inlined_call_operand.vmem [shape: bf16[128,128], index: 2, kind: output, shape index: {0}]
  %s3 = inlined_call_operand.vmem [shape: f32[2,1,128], index: 3, kind: output, shape index: {1}]
  %s4 = inlined_call_operand.vmem [shape: f32[2,1,128], index: 4, kind: output, shape index: {2}]
  %5 = xla_tuple %s2, %s3, %s4
  %s6 = sld [smem:[#allocation0]]
  $region57: #{bottleneck_forward.5} parent=0
    _
  %s8 = ssub.s32 1, %s6
  %s9 = scalar_select 0, %s8, %s6
  loop: start=0, step=1, limit=4
  $region2: #{bottleneck_forward.5} parent=0 // loop_pre_header
    _
  $region3: #{bottleneck_forward.5} parent=0 // loop_header
    %s11 = sphi 0, %s15
    %p12 = scmp.ge.s32.totalorder %s11, 4
    %s21 = sphi 0, %s23
    %s24 = sphi 0, %s21
    %s25 = sphi 0, %s24
    %s41 = sphi 0, %s25
    %s45 = sphi 0, %s45
    %s47 = sphi 0, %s45
    %s48 = sphi 0, %s47
    %s62 = sphi 0, %s48
    %s68 = sphi 0, %s70
    %s71 = sphi 0, %s68
    %s72 = sphi 0, %s71
    %s88 = sphi 0, %s72
    %s94 = sphi 0, %s96
    %s97 = sphi 0, %s94
    %s98 = sphi 0, %s97
    %s114 = sphi 0, %s98
    %s120 = sphi 0, %s122
    %s123 = sphi 0, %s120
    %s124 = sphi 0, %s123
    %s140 = sphi 0, %s124
  $region4: #{bottleneck_forward.5} parent=0 // loop_header_branch
    %14 = sbr.rel (%p12) target = $region8
  $region5: #{bottleneck_forward.5} parent=0 // loop_body
    %s16 = ssub.s32 %s11, 1
    %s17 = ssub.s32 %s11, 2
    %s18 = sadd.s32 %s11, 1
    %s19 = ssub.s32 %s11, %s18
    %p20 = scmp.eq.s32.totalorder %s19, 0
    %s22 = sadd.s32 %s21, 1
    %s23 = scalar_select %p20, %s21, %s22
    %p26 = pneg %p20
    %p27 = scmp.eq.s32.totalorder %s11, 1
    %p28 = por %p26, %p27
    %p29 = scmp.ne.s32.totalorder %s21, %s24
    %p30 = scmp.eq.s32.totalorder %s11, 0
    %p31 = por %p29, %p30
    %p32 = scmp.ne.s32.totalorder %s21, %s24
    %p33 = scmp.eq.s32.totalorder %s16, 1
    %p34 = por %p32, %p33
    %p35 = scmp.ne.s32.totalorder %s24, %s25
    %p36 = scmp.eq.s32.totalorder %s16, 0
    %p37 = por %p35, %p36
    %p38 = scmp.ne.s32.totalorder %s24, %s25
    %p39 = scmp.eq.s32.totalorder %s17, 1
    %p40 = por %p38, %p39
    %p42 = scmp.ne.s32.totalorder %s25, %s41
    %p43 = scmp.eq.s32.totalorder %s17, 0
    %p44 = por %p42, %p43
    %s46 = sadd.s32 %s45, 1
    %p49 = scmp.eq.s32.totalorder %s11, 1
    %p50 = scmp.ne.s32.totalorder %s45, %s47
    %p51 = scmp.eq.s32.totalorder %s11, 0
    %p52 = por %p50, %p51
    %p53 = scmp.ne.s32.totalorder %s45, %s47
    %p54 = scmp.eq.s32.totalorder %s16, 1
    %p55 = por %p53, %p54
    %p56 = scmp.ne.s32.totalorder %s47, %s48
    %p57 = scmp.eq.s32.totalorder %s16, 0
    %p58 = por %p56, %p57
    %p59 = scmp.ne.s32.totalorder %s47, %s48
    %p60 = scmp.eq.s32.totalorder %s17, 1
    %p61 = por %p59, %p60
    %p63 = scmp.ne.s32.totalorder %s48, %s62
    %p64 = scmp.eq.s32.totalorder %s17, 0
    %p65 = por %p63, %p64
    %s66 = ssub.s32 %s11, %s18
    %p67 = scmp.eq.s32.totalorder %s66, 0
    %s69 = sadd.s32 %s68, 1
    %s70 = scalar_select %p67, %s68, %s69
    %p73 = pneg %p67
    %p74 = scmp.eq.s32.totalorder %s11, 1
    %p75 = por %p73, %p74
    %p76 = scmp.ne.s32.totalorder %s68, %s71
    %p77 = scmp.eq.s32.totalorder %s11, 0
    %p78 = por %p76, %p77
    %p79 = scmp.ne.s32.totalorder %s68, %s71
    %p80 = scmp.eq.s32.totalorder %s16, 1
    %p81 = por %p79, %p80
    %p82 = scmp.ne.s32.totalorder %s71, %s72
    %p83 = scmp.eq.s32.totalorder %s16, 0
    %p84 = por %p82, %p83
    %p85 = scmp.ne.s32.totalorder %s71, %s72
    %p86 = scmp.eq.s32.totalorder %s17, 1
    %p87 = por %p85, %p86
    %p89 = scmp.ne.s32.totalorder %s72, %s88
    %p90 = scmp.eq.s32.totalorder %s17, 0
    %p91 = por %p89, %p90
    %s92 = ssub.s32 %s11, %s18
    %p93 = scmp.eq.s32.totalorder %s92, 0
    %s95 = sadd.s32 %s94, 1
    %s96 = scalar_select %p93, %s94, %s95
    %p99 = pneg %p93
    %p100 = scmp.eq.s32.totalorder %s11, 1
    %p101 = por %p99, %p100
    %p102 = scmp.ne.s32.totalorder %s94, %s97
    %p103 = scmp.eq.s32.totalorder %s11, 0
    %p104 = por %p102, %p103
    %p105 = scmp.ne.s32.totalorder %s94, %s97
    %p106 = scmp.eq.s32.totalorder %s16, 1
    %p107 = por %p105, %p106
    %p108 = scmp.ne.s32.totalorder %s97, %s98
    %p109 = scmp.eq.s32.totalorder %s16, 0
    %p110 = por %p108, %p109
    %p111 = scmp.ne.s32.totalorder %s97, %s98
    %p112 = scmp.eq.s32.totalorder %s17, 1
    %p113 = por %p111, %p112
    %p115 = scmp.ne.s32.totalorder %s98, %s114
    %p116 = scmp.eq.s32.totalorder %s17, 0
    %p117 = por %p115, %p116
    %s118 = ssub.s32 %s11, %s18
    %p119 = scmp.eq.s32.totalorder %s118, 0
    %s121 = sadd.s32 %s120, 1
    %s122 = scalar_select %p119, %s120, %s121
    %p125 = pneg %p119
    %p126 = scmp.eq.s32.totalorder %s11, 1
    %p127 = por %p125, %p126
    %p128 = scmp.ne.s32.totalorder %s120, %s123
    %p129 = scmp.eq.s32.totalorder %s11, 0
    %p130 = por %p128, %p129
    %p131 = scmp.ne.s32.totalorder %s120, %s123
    %p132 = scmp.eq.s32.totalorder %s16, 1
    %p133 = por %p131, %p132
    %p134 = scmp.ne.s32.totalorder %s123, %s124
    %p135 = scmp.eq.s32.totalorder %s16, 0
    %p136 = por %p134, %p135
    %p137 = scmp.ne.s32.totalorder %s123, %s124
    %p138 = scmp.eq.s32.totalorder %s17, 1
    %p139 = por %p137, %p138
    %p141 = scmp.ne.s32.totalorder %s124, %s140
    %p142 = scmp.eq.s32.totalorder %s17, 0
    %p143 = por %p141, %p142
    %p144 = scmp.le.s32.totalorder 1, %s11
    %p145 = scmp.lt.s32.totalorder %s11, 3
    %p146 = pnand %p144, %p145
    %p147 = pneg %p146
    // Predicated region
    $region9: #{bottleneck_forward.5} parent=5 // pred_check
      _
    $region10: #{bottleneck_forward.5} parent=5 // pred_check_branch
      %149 = sbr.rel (%p146) target = $region12
    $region11: #{bottleneck_forward.5} parent=5 // pred_region
      %s150 = ssub.s32 %s11, 1
      // Predicated region
      $region13: #{bottleneck_forward.5} parent=11 // pred_check
        %p151 = pneg %p58
      $region14: #{bottleneck_forward.5} parent=11 // pred_check_branch
        %153 = sbr.rel (%p151) target = $region16
      $region15: #{bottleneck_forward.5} parent=11 // pred_region
        _
      $region16: #{bottleneck_forward.5} parent=11 // pred_fallthru
        _
    $region12: #{bottleneck_forward.5} parent=5 // pred_fallthru
      _
    %p154 = scmp.lt.s32.totalorder %s11, 2
    // Predicated region
    $region17: #{bottleneck_forward.5} parent=5 // pred_check
      %p155 = pneg %p154
    $region18: #{bottleneck_forward.5} parent=5 // pred_check_branch
      %157 = sbr.rel (%p155) target = $region20
    $region19: #{bottleneck_forward.5} parent=5 // pred_region
      // Predicated region
      $region21: #{bottleneck_forward.5} parent=19 // pred_check
        %p158 = pneg %p31
      $region22: #{bottleneck_forward.5} parent=19 // pred_check_branch
        %160 = sbr.rel (%p158) target = $region24
      $region23: #{bottleneck_forward.5} parent=19 // pred_region
        %p161 = scmp.lt.s32.totalorder %s11, 1
        %s162 = scalar_select %p161, %s11, 1
        %s163 = smul.addr %s162, 72
        %s164 = smul.addr %s163, 4
        %s165 = scalar_lea.vmem %s0, %s164
      $region24: #{bottleneck_forward.5} parent=19 // pred_fallthru
        _
    $region20: #{bottleneck_forward.5} parent=5 // pred_fallthru
      _
    %p166 = scmp.le.s32.totalorder 1, %s11
    %p167 = scmp.lt.s32.totalorder %s11, 3
    %p168 = pnand %p166, %p167
    %p169 = pneg %p168
    // Predicated region
    $region25: #{bottleneck_forward.5} parent=5 // pred_check
      _
    $region26: #{bottleneck_forward.5} parent=5 // pred_check_branch
      %171 = sbr.rel (%p168) target = $region28
    $region27: #{bottleneck_forward.5} parent=5 // pred_region
      %s172 = ssub.s32 %s11, 1
      %p173 = scmp.lt.s32.totalorder %s16, 1
      %s174 = scalar_select %p173, %s16, 1
      %s175 = smul.addr %s174, 72
      %s176 = smul.addr %s175, 4
      %s177 = scalar_lea.vmem %s0, %s176
      %p178 = pneg %p37
      %p179 = pneg %p34
      %p180 = pneg %p58
      %p181 = pneg %p55
      %p182 = pneg %p84
      %p183 = pneg %p81
      %s184 = smul.u32 8, %s16
      %p185 = scmp.lt.s32.totalorder %s184, 15
      %s186 = scalar_select %p185, %s184, 15
      %s187 = smul.addr %s186, 4
      %s188 = scalar_lea.vmem %s2, %s187
      %p189 = pneg %p110
      %p190 = pneg %p107
      %p191 = scmp.lt.s32.totalorder %s16, 1
      %s192 = scalar_select %p191, %s16, 1
      %s193 = scalar_lea.vmem %s3, %s192
      %p194 = pneg %p136
      %p195 = pneg %p133
      %p196 = scmp.lt.s32.totalorder %s16, 1
      %s197 = scalar_select %p196, %s16, 1
      %s198 = scalar_lea.vmem %s4, %s197
      %p199 = scmp.lt.s32.totalorder %s16, 1
      %s200 = scalar_select %p199, %s16, 1
      %s201 = smul.addr %s200, 72
      %s202 = smul.addr %s201, 4
      %s203 = scalar_lea.vmem %s0, %s202
      %s204 = smul.u32 8, %s16
      %p205 = scmp.lt.s32.totalorder %s204, 15
      %s206 = scalar_select %p205, %s204, 15
      %s207 = smul.addr %s206, 4
      %s208 = scalar_lea.vmem %s2, %s207
      %s209 = smul.u32 8, %s16
      %p210 = scmp.lt.s32.totalorder %s16, 1
      %s211 = scalar_select %p210, %s16, 1
      %s212 = scalar_lea.vmem %s3, %s211
      %p213 = scmp.lt.s32.totalorder %s16, 1
      %s214 = scalar_select %p213, %s16, 1
      %s215 = scalar_lea.vmem %s4, %s214
      %v217 = vld [vmem:[%s203] sm:$0xf]
      %v218 = vld [vmem:[%s203 + $0x4] sm:$0x1]
      %v219 = vld [vmem:[%s203 + $0x8] sm:$0xf]
      %v220 = vld [vmem:[%s203 + $0xc] sm:$0x1]
      %v221 = vld [vmem:[%s203 + $0x10] sm:$0xf]
      %v222 = vld [vmem:[%s203 + $0x14] sm:$0x1]
      %v223 = vld [vmem:[%s203 + $0x18] sm:$0xf]
      %v224 = vld [vmem:[%s203 + $0x1c] sm:$0x1]
      %v225 = vld [vmem:[%s203 + $0x20] sm:$0xf]
      %v226 = vld [vmem:[%s203 + $0x24] sm:$0x1]
      %v227 = vld [vmem:[%s203 + $0x28] sm:$0xf]
      %v228 = vld [vmem:[%s203 + $0x2c] sm:$0x1]
      %v229 = vld [vmem:[%s203 + $0x30] sm:$0xf]
      %v230 = vld [vmem:[%s203 + $0x34] sm:$0x1]
      %v231 = vld [vmem:[%s203 + $0x38] sm:$0xf]
      %v232 = vld [vmem:[%s203 + $0x3c] sm:$0x1]
      %v233 = vld [vmem:[%s203 + $0x40] sm:$0xf]
      %v234 = vld [vmem:[%s203 + $0x44] sm:$0x1]
      %v235 = vld [vmem:[%s203 + $0x48] sm:$0xf]
      %v236 = vld [vmem:[%s203 + $0x50] sm:$0xf]
      %v237 = vld [vmem:[%s203 + $0x58] sm:$0xf]
      %v238 = vld [vmem:[%s203 + $0x60] sm:$0xf]
      %v239 = vld [vmem:[%s203 + $0x68] sm:$0xf]
      %v240 = vld [vmem:[%s203 + $0x70] sm:$0xf]
      %v241 = vld [vmem:[%s203 + $0x78] sm:$0xf]
      %v242 = vld [vmem:[%s203 + $0x80] sm:$0xf]
      %v243 = vld [vmem:[%s203 + $0x88] sm:$0xf]
      %v244 = vld [vmem:[%s203 + $0x90] sm:$0xf]
      %v245 = vld [vmem:[%s203 + $0x94] sm:$0x1]
      %v246 = vld [vmem:[%s203 + $0x98] sm:$0xf]
      %v247 = vld [vmem:[%s203 + $0x9c] sm:$0x1]
      %v248 = vld [vmem:[%s203 + $0xa0] sm:$0xf]
      %v249 = vld [vmem:[%s203 + $0xa4] sm:$0x1]
      %v250 = vld [vmem:[%s203 + $0xa8] sm:$0xf]
      %v251 = vld [vmem:[%s203 + $0xac] sm:$0x1]
      %v252 = vld [vmem:[%s203 + $0xb0] sm:$0xf]
      %v253 = vld [vmem:[%s203 + $0xb4] sm:$0x1]
      %v254 = vld [vmem:[%s203 + $0xb8] sm:$0xf]
      %v255 = vld [vmem:[%s203 + $0xbc] sm:$0x1]
      %v256 = vld [vmem:[%s203 + $0xc0] sm:$0xf]
      %v257 = vld [vmem:[%s203 + $0xc4] sm:$0x1]
      %v258 = vld [vmem:[%s203 + $0xc8] sm:$0xf]
      %v259 = vld [vmem:[%s203 + $0xcc] sm:$0x1]
      %v260 = vld [vmem:[%s203 + $0xd8] sm:$0xf]
      %v261 = vld [vmem:[%s203 + $0xe0] sm:$0xf]
      %v262 = vld [vmem:[%s203 + $0xe8] sm:$0xf]
      %v263 = vld [vmem:[%s203 + $0xf0] sm:$0xf]
      %v264 = vld [vmem:[%s203 + $0xf8] sm:$0xf]
      %v265 = vld [vmem:[%s203 + $0x100] sm:$0xf]
      %v266 = vld [vmem:[%s203 + $0x108] sm:$0xf]
      %v267 = vld [vmem:[%s203 + $0x110] sm:$0xf]
      %v284 = vunpack.c.l.b16 %v217
      %v285 = vunpack.c.l.b16 %v218
      %v286 = vunpack.c.l.b16 %v219
      %v287 = vunpack.c.l.b16 %v220
      %v288 = vunpack.c.l.b16 %v221
      %v289 = vunpack.c.l.b16 %v222
      %v290 = vunpack.c.l.b16 %v223
      %v291 = vunpack.c.l.b16 %v224
      %v292 = vunpack.c.l.b16 %v225
      %v293 = vunpack.c.l.b16 %v226
      %v294 = vunpack.c.l.b16 %v227
      %v295 = vunpack.c.l.b16 %v228
      %v296 = vunpack.c.l.b16 %v229
      %v297 = vunpack.c.l.b16 %v230
      %v298 = vunpack.c.l.b16 %v231
      %v299 = vunpack.c.l.b16 %v232
      %v300 = vpack.c.b16 %v285, %v284
      %v301 = vpack.c.b16 %v287, %v286
      %v302 = vpack.c.b16 %v289, %v288
      %v303 = vpack.c.b16 %v291, %v290
      %v304 = vpack.c.b16 %v293, %v292
      %v305 = vpack.c.b16 %v295, %v294
      %v306 = vpack.c.b16 %v297, %v296
      %v307 = vpack.c.b16 %v299, %v298
      %v309 = vshrl.u32 %v300, 16
      %v311 = vshll.u32 %v300, 16
      %v313 = vrot.slane %v311, 1
      %v314 = vor.u32 %v309, %v313
      %v316 = vshrl.u32 %v301, 16
      %v318 = vshll.u32 %v301, 16
      %v320 = vrot.slane %v318, 1
      %v321 = vor.u32 %v316, %v320
      %v323 = vshrl.u32 %v302, 16
      %v325 = vshll.u32 %v302, 16
      %v327 = vrot.slane %v325, 1
      %v328 = vor.u32 %v323, %v327
      %v330 = vshrl.u32 %v303, 16
      %v332 = vshll.u32 %v303, 16
      %v334 = vrot.slane %v332, 1
      %v335 = vor.u32 %v330, %v334
      %v337 = vshrl.u32 %v304, 16
      %v339 = vshll.u32 %v304, 16
      %v341 = vrot.slane %v339, 1
      %v342 = vor.u32 %v337, %v341
      %v344 = vshrl.u32 %v305, 16
      %v346 = vshll.u32 %v305, 16
      %v348 = vrot.slane %v346, 1
      %v349 = vor.u32 %v344, %v348
      %v351 = vshrl.u32 %v306, 16
      %v353 = vshll.u32 %v306, 16
      %v355 = vrot.slane %v353, 1
      %v356 = vor.u32 %v351, %v355
      %v358 = vshrl.u32 %v307, 16
      %v360 = vshll.u32 %v307, 16
      %v362 = vrot.slane %v360, 1
      %v363 = vor.u32 %v358, %v362
      %v380 = vunpack.c.l.b16 %v244
      %v381 = vunpack.c.l.b16 %v245
      %v382 = vunpack.c.l.b16 %v246
      %v383 = vunpack.c.l.b16 %v247
      %v384 = vunpack.c.l.b16 %v248
      %v385 = vunpack.c.l.b16 %v249
      %v386 = vunpack.c.l.b16 %v250
      %v387 = vunpack.c.l.b16 %v251
      %v388 = vunpack.c.l.b16 %v252
      %v389 = vunpack.c.l.b16 %v253
      %v390 = vunpack.c.l.b16 %v254
      %v391 = vunpack.c.l.b16 %v255
      %v392 = vunpack.c.l.b16 %v256
      %v393 = vunpack.c.l.b16 %v257
      %v394 = vunpack.c.l.b16 %v258
      %v395 = vunpack.c.l.b16 %v259
      %v396 = vpack.c.b16 %v381, %v380
      %v397 = vpack.c.b16 %v383, %v382
      %v398 = vpack.c.b16 %v385, %v384
      %v399 = vpack.c.b16 %v387, %v386
      %v400 = vpack.c.b16 %v389, %v388
      %v401 = vpack.c.b16 %v391, %v390
      %v402 = vpack.c.b16 %v393, %v392
      %v403 = vpack.c.b16 %v395, %v394
      %v405 = vshrl.u32 %v396, 16
      %v407 = vshll.u32 %v396, 16
      %v409 = vrot.slane %v407, 1
      %v410 = vor.u32 %v405, %v409
      %v412 = vshrl.u32 %v397, 16
      %v414 = vshll.u32 %v397, 16
      %v416 = vrot.slane %v414, 1
      %v417 = vor.u32 %v412, %v416
      %v419 = vshrl.u32 %v398, 16
      %v421 = vshll.u32 %v398, 16
      %v423 = vrot.slane %v421, 1
      %v424 = vor.u32 %v419, %v423
      %v426 = vshrl.u32 %v399, 16
      %v428 = vshll.u32 %v399, 16
      %v430 = vrot.slane %v428, 1
      %v431 = vor.u32 %v426, %v430
      %v433 = vshrl.u32 %v400, 16
      %v435 = vshll.u32 %v400, 16
      %v437 = vrot.slane %v435, 1
      %v438 = vor.u32 %v433, %v437
      %v440 = vshrl.u32 %v401, 16
      %v442 = vshll.u32 %v401, 16
      %v444 = vrot.slane %v442, 1
      %v445 = vor.u32 %v440, %v444
      %v447 = vshrl.u32 %v402, 16
      %v449 = vshll.u32 %v402, 16
      %v451 = vrot.slane %v449, 1
      %v452 = vor.u32 %v447, %v451
      %v454 = vshrl.u32 %v403, 16
      %v456 = vshll.u32 %v403, 16
      %v458 = vrot.slane %v456, 1
      %v459 = vor.u32 %v454, %v458
      %v462 = vunpack.c.l.b16 %v233
      %v463 = vunpack.c.l.b16 %v234
      %v464 = vpack.c.b16 %v463, %v462
      %v466 = vshrl.u32 %v464, 16
      %v468 = vshll.u32 %v464, 16
      %v470 = vrot.slane %v468, 1
      %v471 = vor.u32 %v466, %v470
      %v489 = vunpack.c.l.b16 %v235
      %v490 = vunpack.c.l.b16 %v314
      %v491 = vunpack.c.l.b16 %v260
      %v492 = vunpack.c.l.b16 %v410
      %v493 = vunpack.c.l.b16 %v236
      %v494 = vunpack.c.l.b16 %v321
      %v495 = vunpack.c.l.b16 %v261
      %v496 = vunpack.c.l.b16 %v417
      %v497 = vunpack.c.l.b16 %v237
      %v498 = vunpack.c.l.b16 %v328
      %v499 = vunpack.c.l.b16 %v262
      %v500 = vunpack.c.l.b16 %v424
      %v501 = vunpack.c.l.b16 %v238
      %v502 = vunpack.c.l.b16 %v335
      %v503 = vunpack.c.l.b16 %v263
      %v504 = vunpack.c.l.b16 %v431
      %v505 = vunpack.c.l.b16 %v239
      %v506 = vunpack.c.l.b16 %v342
      %v507 = vunpack.c.l.b16 %v264
      %v508 = vunpack.c.l.b16 %v438
      %v509 = vunpack.c.l.b16 %v240
      %v510 = vunpack.c.l.b16 %v349
      %v511 = vunpack.c.l.b16 %v265
      %v512 = vunpack.c.l.b16 %v445
      %v513 = vunpack.c.l.b16 %v241
      %v514 = vunpack.c.l.b16 %v356
      %v515 = vunpack.c.l.b16 %v266
      %v516 = vunpack.c.l.b16 %v452
      %v517 = vunpack.c.l.b16 %v242
      %v518 = vunpack.c.l.b16 %v363
      %v519 = vunpack.c.l.b16 %v267
      %v520 = vunpack.c.l.b16 %v459
      %v521 = vunpack.c.l.b16 %v243
      %v522 = vunpack.c.l.b16 %v471
      %v523 = vld [vmem:[%s1] sm:$0xf]
      %v524 = vld [vmem:[%s1 + $0x4] sm:$0xf]
      %v525 = vld [vmem:[%s1 + $0x8] sm:$0xf]
      %v526 = vld [vmem:[%s1 + $0xc] sm:$0xf]
      %v527 = vld [vmem:[%s1 + $0x10] sm:$0xf]
      %v528 = vld [vmem:[%s1 + $0x14] sm:$0xf]
      %v529 = vld [vmem:[%s1 + $0x18] sm:$0xf]
      %v530 = vld [vmem:[%s1 + $0x1c] sm:$0xf]
      %v531 = vld [vmem:[%s1 + $0x20] sm:$0xf]
      %v532 = vld [vmem:[%s1 + $0x24] sm:$0xf]
      %v533 = vld [vmem:[%s1 + $0x28] sm:$0xf]
      %v534 = vld [vmem:[%s1 + $0x2c] sm:$0xf]
      %v535 = vld [vmem:[%s1 + $0x30] sm:$0xf]
      %v536 = vld [vmem:[%s1 + $0x34] sm:$0xf]
      %v537 = vld [vmem:[%s1 + $0x38] sm:$0xf]
      %v538 = vld [vmem:[%s1 + $0x3c] sm:$0xf]
      %v539 = vld [vmem:[%s1 + $0x40] sm:$0xf]
      %v540 = vld [vmem:[%s1 + $0x44] sm:$0xf]
      %v541 = vld [vmem:[%s1 + $0x48] sm:$0xf]
      %v542 = vld [vmem:[%s1 + $0x4c] sm:$0xf]
      %v543 = vld [vmem:[%s1 + $0x50] sm:$0xf]
      %v544 = vld [vmem:[%s1 + $0x54] sm:$0xf]
      %v545 = vld [vmem:[%s1 + $0x58] sm:$0xf]
      %v546 = vld [vmem:[%s1 + $0x5c] sm:$0xf]
      %v547 = vld [vmem:[%s1 + $0x60] sm:$0xf]
      %v548 = vld [vmem:[%s1 + $0x64] sm:$0xf]
      %v549 = vld [vmem:[%s1 + $0x68] sm:$0xf]
      %v550 = vld [vmem:[%s1 + $0x6c] sm:$0xf]
      %v551 = vld [vmem:[%s1 + $0x70] sm:$0xf]
      %v552 = vld [vmem:[%s1 + $0x74] sm:$0xf]
      %v553 = vld [vmem:[%s1 + $0x78] sm:$0xf]
      %v554 = vld [vmem:[%s1 + $0x7c] sm:$0xf]
      %v555 = vld [vmem:[%s1 + $0x80] sm:$0xf]
      %v556 = vld [vmem:[%s1 + $0x84] sm:$0xf]
      %v557 = vld [vmem:[%s1 + $0x88] sm:$0xf]
      %v558 = vld [vmem:[%s1 + $0x8c] sm:$0xf]
      %v559 = vld [vmem:[%s1 + $0x90] sm:$0xf]
      %v560 = vld [vmem:[%s1 + $0x94] sm:$0xf]
      %v561 = vld [vmem:[%s1 + $0x98] sm:$0xf]
      %v562 = vld [vmem:[%s1 + $0x9c] sm:$0xf]
      %v563 = vld [vmem:[%s1 + $0xa0] sm:$0xf]
      %v564 = vld [vmem:[%s1 + $0xa4] sm:$0xf]
      %v565 = vld [vmem:[%s1 + $0xa8] sm:$0xf]
      %v566 = vld [vmem:[%s1 + $0xac] sm:$0xf]
      %v567 = vld [vmem:[%s1 + $0xb0] sm:$0xf]
      %v568 = vld [vmem:[%s1 + $0xb4] sm:$0xf]
      %v569 = vld [vmem:[%s1 + $0xb8] sm:$0xf]
      %v570 = vld [vmem:[%s1 + $0xbc] sm:$0xf]
      %v571 = vld [vmem:[%s1 + $0xc0] sm:$0xf]
      %v572 = vld [vmem:[%s1 + $0xc4] sm:$0xf]
      %v573 = vld [vmem:[%s1 + $0xc8] sm:$0xf]
      %v574 = vld [vmem:[%s1 + $0xcc] sm:$0xf]
      %v575 = vld [vmem:[%s1 + $0xd0] sm:$0xf]
      %v576 = vld [vmem:[%s1 + $0xd4] sm:$0xf]
      %v577 = vld [vmem:[%s1 + $0xd8] sm:$0xf]
      %v578 = vld [vmem:[%s1 + $0xdc] sm:$0xf]
      %v579 = vld [vmem:[%s1 + $0xe0] sm:$0xf]
      %v580 = vld [vmem:[%s1 + $0xe4] sm:$0xf]
      %v581 = vld [vmem:[%s1 + $0xe8] sm:$0xf]
      %v582 = vld [vmem:[%s1 + $0xec] sm:$0xf]
      %v583 = vld [vmem:[%s1 + $0xf0] sm:$0xf]
      %v584 = vld [vmem:[%s1 + $0xf4] sm:$0xf]
      %v585 = vld [vmem:[%s1 + $0xf8] sm:$0xf]
      %v586 = vld [vmem:[%s1 + $0xfc] sm:$0xf]
      %v587 = vld [vmem:[%s1 + $0x100] sm:$0xf]
      %v588 = vld [vmem:[%s1 + $0x104] sm:$0xf]
      %v589 = vld [vmem:[%s1 + $0x108] sm:$0xf]
      %v590 = vld [vmem:[%s1 + $0x10c] sm:$0xf]
      %v591 = vld [vmem:[%s1 + $0x110] sm:$0xf]
      %v592 = vld [vmem:[%s1 + $0x114] sm:$0xf]
      %v593 = vld [vmem:[%s1 + $0x118] sm:$0xf]
      %v594 = vld [vmem:[%s1 + $0x11c] sm:$0xf]
      %v595 = vld [vmem:[%s1 + $0x120] sm:$0xf]
      %v596 = vld [vmem:[%s1 + $0x124] sm:$0xf]
      %v597 = vld [vmem:[%s1 + $0x128] sm:$0xf]
      %v598 = vld [vmem:[%s1 + $0x12c] sm:$0xf]
      %v599 = vld [vmem:[%s1 + $0x130] sm:$0xf]
      %v600 = vld [vmem:[%s1 + $0x134] sm:$0xf]
      %v601 = vld [vmem:[%s1 + $0x138] sm:$0xf]
      %v602 = vld [vmem:[%s1 + $0x13c] sm:$0xf]
      %v603 = vld [vmem:[%s1 + $0x140] sm:$0xf]
      %v604 = vld [vmem:[%s1 + $0x144] sm:$0xf]
      %v605 = vld [vmem:[%s1 + $0x148] sm:$0xf]
      %v606 = vld [vmem:[%s1 + $0x14c] sm:$0xf]
      %v607 = vld [vmem:[%s1 + $0x150] sm:$0xf]
      %v608 = vld [vmem:[%s1 + $0x154] sm:$0xf]
      %v609 = vld [vmem:[%s1 + $0x158] sm:$0xf]
      %v610 = vld [vmem:[%s1 + $0x15c] sm:$0xf]
      %v611 = vld [vmem:[%s1 + $0x160] sm:$0xf]
      %v612 = vld [vmem:[%s1 + $0x164] sm:$0xf]
      %v613 = vld [vmem:[%s1 + $0x168] sm:$0xf]
      %v614 = vld [vmem:[%s1 + $0x16c] sm:$0xf]
      %v615 = vld [vmem:[%s1 + $0x170] sm:$0xf]
      %v616 = vld [vmem:[%s1 + $0x174] sm:$0xf]
      %v617 = vld [vmem:[%s1 + $0x178] sm:$0xf]
      %v618 = vld [vmem:[%s1 + $0x17c] sm:$0xf]
      %v619 = vld [vmem:[%s1 + $0x180] sm:$0xf]
      %v620 = vld [vmem:[%s1 + $0x184] sm:$0xf]
      %v621 = vld [vmem:[%s1 + $0x188] sm:$0xf]
      %v622 = vld [vmem:[%s1 + $0x18c] sm:$0xf]
      %v623 = vld [vmem:[%s1 + $0x190] sm:$0xf]
      %v624 = vld [vmem:[%s1 + $0x194] sm:$0xf]
      %v625 = vld [vmem:[%s1 + $0x198] sm:$0xf]
      %v626 = vld [vmem:[%s1 + $0x19c] sm:$0xf]
      %v627 = vld [vmem:[%s1 + $0x1a0] sm:$0xf]
      %v628 = vld [vmem:[%s1 + $0x1a4] sm:$0xf]
      %v629 = vld [vmem:[%s1 + $0x1a8] sm:$0xf]
      %v630 = vld [vmem:[%s1 + $0x1ac] sm:$0xf]
      %v631 = vld [vmem:[%s1 + $0x1b0] sm:$0xf]
      %v632 = vld [vmem:[%s1 + $0x1b4] sm:$0xf]
      %v633 = vld [vmem:[%s1 + $0x1b8] sm:$0xf]
      %v634 = vld [vmem:[%s1 + $0x1bc] sm:$0xf]
      %v635 = vld [vmem:[%s1 + $0x1c0] sm:$0xf]
      %v636 = vld [vmem:[%s1 + $0x1c4] sm:$0xf]
      %v637 = vld [vmem:[%s1 + $0x1c8] sm:$0xf]
      %v638 = vld [vmem:[%s1 + $0x1cc] sm:$0xf]
      %v639 = vld [vmem:[%s1 + $0x1d0] sm:$0xf]
      %v640 = vld [vmem:[%s1 + $0x1d4] sm:$0xf]
      %v641 = vld [vmem:[%s1 + $0x1d8] sm:$0xf]
      %v642 = vld [vmem:[%s1 + $0x1dc] sm:$0xf]
      %v643 = vld [vmem:[%s1 + $0x1e0] sm:$0xf]
      %v644 = vld [vmem:[%s1 + $0x1e4] sm:$0xf]
      %v645 = vld [vmem:[%s1 + $0x1e8] sm:$0xf]
      %v646 = vld [vmem:[%s1 + $0x1ec] sm:$0xf]
      %v647 = vld [vmem:[%s1 + $0x1f0] sm:$0xf]
      %v648 = vld [vmem:[%s1 + $0x1f4] sm:$0xf]
      %v649 = vld [vmem:[%s1 + $0x1f8] sm:$0xf]
      %v650 = vld [vmem:[%s1 + $0x1fc] sm:$0xf]
      %v651 = vld [vmem:[%s1 + $0x200] sm:$0xf]
      %v652 = vld [vmem:[%s1 + $0x204] sm:$0xf]
      %v653 = vld [vmem:[%s1 + $0x208] sm:$0xf]
      %v654 = vld [vmem:[%s1 + $0x20c] sm:$0xf]
      %v655 = vld [vmem:[%s1 + $0x210] sm:$0xf]
      %v656 = vld [vmem:[%s1 + $0x214] sm:$0xf]
      %v657 = vld [vmem:[%s1 + $0x218] sm:$0xf]
      %v658 = vld [vmem:[%s1 + $0x21c] sm:$0xf]
      %v659 = vld [vmem:[%s1 + $0x220] sm:$0xf]
      %v660 = vld [vmem:[%s1 + $0x224] sm:$0xf]
      %v661 = vld [vmem:[%s1 + $0x228] sm:$0xf]
      %v662 = vld [vmem:[%s1 + $0x22c] sm:$0xf]
      %v663 = vld [vmem:[%s1 + $0x230] sm:$0xf]
      %v664 = vld [vmem:[%s1 + $0x234] sm:$0xf]
      %v665 = vld [vmem:[%s1 + $0x238] sm:$0xf]
      %v666 = vld [vmem:[%s1 + $0x23c] sm:$0xf]
      %v667 = vpack.c.b16 %v286, %v284
      %v668 = vpack.c.b16 %v493, %v489
      %v669 = vpack.c.b16 %v494, %v490
      %v670 = vpack.c.b16 %v382, %v380
      %v671 = vpack.c.b16 %v495, %v491
      %v672 = vpack.c.b16 %v496, %v492
      %v673 = vpack.c.b16 %v288, %v286
      %v674 = vpack.c.b16 %v497, %v493
      %v675 = vpack.c.b16 %v498, %v494
      %v676 = vpack.c.b16 %v290, %v288
      %v677 = vpack.c.b16 %v501, %v497
      %v678 = vpack.c.b16 %v502, %v498
      %v679 = vpack.c.b16 %v386, %v384
      %v680 = vpack.c.b16 %v503, %v499
      %v681 = vpack.c.b16 %v504, %v500
      %v682 = vpack.c.b16 %v292, %v290
      %v683 = vpack.c.b16 %v505, %v501
      %v684 = vpack.c.b16 %v506, %v502
      %v685 = vpack.c.b16 %v294, %v292
      %v686 = vpack.c.b16 %v509, %v505
      %v687 = vpack.c.b16 %v510, %v506
      %v688 = vpack.c.b16 %v390, %v388
      %v689 = vpack.c.b16 %v511, %v507
      %v690 = vpack.c.b16 %v512, %v508
      %v691 = vpack.c.b16 %v296, %v294
      %v692 = vpack.c.b16 %v513, %v509
      %v693 = vpack.c.b16 %v514, %v510
      %v694 = vpack.c.b16 %v298, %v296
      %v695 = vpack.c.b16 %v517, %v513
      %v696 = vpack.c.b16 %v518, %v514
      %v697 = vpack.c.b16 %v394, %v392
      %v698 = vpack.c.b16 %v519, %v515
      %v699 = vpack.c.b16 %v520, %v516
      %v700 = vpack.c.b16 %v462, %v298
      %v701 = vpack.c.b16 %v521, %v517
      %v702 = vpack.c.b16 %v522, %v518
      %v883 = vunpack.c.l.b16 %v523
      %v884 = vunpack.c.l.b16 %v524
      %v885 = vunpack.c.l.b16 %v525
      %v886 = vunpack.c.l.b16 %v526
      %v887 = vunpack.c.l.b16 %v527
      %v888 = vunpack.c.l.b16 %v528
      %v889 = vunpack.c.l.b16 %v529
      %v890 = vunpack.c.l.b16 %v530
      %v891 = vunpack.c.l.b16 %v531
      %v892 = vunpack.c.l.b16 %v532
      %v893 = vunpack.c.l.b16 %v533
      %v894 = vunpack.c.l.b16 %v534
      %v895 = vunpack.c.l.b16 %v535
      %v896 = vunpack.c.l.b16 %v536
      %v897 = vunpack.c.l.b16 %v537
      %v898 = vunpack.c.l.b16 %v538
      %v899 = vunpack.c.l.b16 %v539
      %v900 = vunpack.c.l.b16 %v540
      %v901 = vunpack.c.l.b16 %v541
      %v902 = vunpack.c.l.b16 %v542
      %v903 = vunpack.c.l.b16 %v543
      %v904 = vunpack.c.l.b16 %v544
      %v905 = vunpack.c.l.b16 %v545
      %v906 = vunpack.c.l.b16 %v546
      %v907 = vunpack.c.l.b16 %v547
      %v908 = vunpack.c.l.b16 %v548
      %v909 = vunpack.c.l.b16 %v549
      %v910 = vunpack.c.l.b16 %v550
      %v911 = vunpack.c.l.b16 %v551
      %v912 = vunpack.c.l.b16 %v552
      %v913 = vunpack.c.l.b16 %v553
      %v914 = vunpack.c.l.b16 %v554
      %v915 = vunpack.c.l.b16 %v555
      %v916 = vunpack.c.l.b16 %v556
      %v917 = vunpack.c.l.b16 %v557
      %v918 = vunpack.c.l.b16 %v558
      %v919 = vunpack.c.l.b16 %v559
      %v920 = vunpack.c.l.b16 %v560
      %v921 = vunpack.c.l.b16 %v561
      %v922 = vunpack.c.l.b16 %v562
      %v923 = vunpack.c.l.b16 %v563
      %v924 = vunpack.c.l.b16 %v564
      %v925 = vunpack.c.l.b16 %v565
      %v926 = vunpack.c.l.b16 %v566
      %v927 = vunpack.c.l.b16 %v567
      %v928 = vunpack.c.l.b16 %v568
      %v929 = vunpack.c.l.b16 %v569
      %v930 = vunpack.c.l.b16 %v570
      %v931 = vunpack.c.l.b16 %v571
      %v932 = vunpack.c.l.b16 %v572
      %v933 = vunpack.c.l.b16 %v573
      %v934 = vunpack.c.l.b16 %v574
      %v935 = vunpack.c.l.b16 %v575
      %v936 = vunpack.c.l.b16 %v576
      %v937 = vunpack.c.l.b16 %v577
      %v938 = vunpack.c.l.b16 %v578
      %v939 = vunpack.c.l.b16 %v579
      %v940 = vunpack.c.l.b16 %v580
      %v941 = vunpack.c.l.b16 %v581
      %v942 = vunpack.c.l.b16 %v582
      %v943 = vunpack.c.l.b16 %v583
      %v944 = vunpack.c.l.b16 %v584
      %v945 = vunpack.c.l.b16 %v585
      %v946 = vunpack.c.l.b16 %v586
      %v947 = vunpack.c.l.b16 %v587
      %v948 = vunpack.c.l.b16 %v588
      %v949 = vunpack.c.l.b16 %v589
      %v950 = vunpack.c.l.b16 %v590
      %v951 = vunpack.c.l.b16 %v591
      %v952 = vunpack.c.l.b16 %v592
      %v953 = vunpack.c.l.b16 %v593
      %v954 = vunpack.c.l.b16 %v594
      %v955 = vunpack.c.l.b16 %v595
      %v956 = vunpack.c.l.b16 %v596
      %v957 = vunpack.c.l.b16 %v597
      %v958 = vunpack.c.l.b16 %v598
      %v959 = vunpack.c.l.b16 %v599
      %v960 = vunpack.c.l.b16 %v600
      %v961 = vunpack.c.l.b16 %v601
      %v962 = vunpack.c.l.b16 %v602
      %v963 = vunpack.c.l.b16 %v603
      %v964 = vunpack.c.l.b16 %v604
      %v965 = vunpack.c.l.b16 %v605
      %v966 = vunpack.c.l.b16 %v606
      %v967 = vunpack.c.l.b16 %v607
      %v968 = vunpack.c.l.b16 %v608
      %v969 = vunpack.c.l.b16 %v609
      %v970 = vunpack.c.l.b16 %v610
      %v971 = vunpack.c.l.b16 %v611
      %v972 = vunpack.c.l.b16 %v612
      %v973 = vunpack.c.l.b16 %v613
      %v974 = vunpack.c.l.b16 %v614
      %v975 = vunpack.c.l.b16 %v615
      %v976 = vunpack.c.l.b16 %v616
      %v977 = vunpack.c.l.b16 %v617
      %v978 = vunpack.c.l.b16 %v618
      %v979 = vunpack.c.l.b16 %v619
      %v980 = vunpack.c.l.b16 %v620
      %v981 = vunpack.c.l.b16 %v621
      %v982 = vunpack.c.l.b16 %v622
      %v983 = vunpack.c.l.b16 %v623
      %v984 = vunpack.c.l.b16 %v624
      %v985 = vunpack.c.l.b16 %v625
      %v986 = vunpack.c.l.b16 %v626
      %v987 = vunpack.c.l.b16 %v627
      %v988 = vunpack.c.l.b16 %v628
      %v989 = vunpack.c.l.b16 %v629
      %v990 = vunpack.c.l.b16 %v630
      %v991 = vunpack.c.l.b16 %v631
      %v992 = vunpack.c.l.b16 %v632
      %v993 = vunpack.c.l.b16 %v633
      %v994 = vunpack.c.l.b16 %v634
      %v995 = vunpack.c.l.b16 %v635
      %v996 = vunpack.c.l.b16 %v636
      %v997 = vunpack.c.l.b16 %v637
      %v998 = vunpack.c.l.b16 %v638
      %v999 = vunpack.c.l.b16 %v639
      %v1000 = vunpack.c.l.b16 %v640
      %v1001 = vunpack.c.l.b16 %v641
      %v1002 = vunpack.c.l.b16 %v642
      %v1003 = vunpack.c.l.b16 %v643
      %v1004 = vunpack.c.l.b16 %v644
      %v1005 = vunpack.c.l.b16 %v645
      %v1006 = vunpack.c.l.b16 %v646
      %v1007 = vunpack.c.l.b16 %v647
      %v1008 = vunpack.c.l.b16 %v648
      %v1009 = vunpack.c.l.b16 %v649
      %v1010 = vunpack.c.l.b16 %v650
      %v1011 = vunpack.c.l.b16 %v651
      %v1012 = vunpack.c.l.b16 %v652
      %v1013 = vunpack.c.l.b16 %v653
      %v1014 = vunpack.c.l.b16 %v654
      %v1015 = vunpack.c.l.b16 %v655
      %v1016 = vunpack.c.l.b16 %v656
      %v1017 = vunpack.c.l.b16 %v657
      %v1018 = vunpack.c.l.b16 %v658
      %v1019 = vunpack.c.l.b16 %v659
      %v1020 = vunpack.c.l.b16 %v660
      %v1021 = vunpack.c.l.b16 %v661
      %v1022 = vunpack.c.l.b16 %v662
      %v1023 = vunpack.c.l.b16 %v663
      %v1024 = vunpack.c.l.b16 %v664
      %v1025 = vunpack.c.l.b16 %v665
      %v1026 = vunpack.c.l.b16 %v666
      %v1027 = vpack.c.b16 %v884, %v883
      %v1028 = vpack.c.b16 %v886, %v885
      %v1029 = vpack.c.b16 %v888, %v887
      %v1030 = vpack.c.b16 %v890, %v889
      %v1031 = vpack.c.b16 %v892, %v891
      %v1032 = vpack.c.b16 %v894, %v893
      %v1033 = vpack.c.b16 %v896, %v895
      %v1034 = vpack.c.b16 %v898, %v897
      %v1035 = vpack.c.b16 %v900, %v899
      %v1036 = vpack.c.b16 %v902, %v901
      %v1037 = vpack.c.b16 %v904, %v903
      %v1038 = vpack.c.b16 %v906, %v905
      %v1039 = vpack.c.b16 %v908, %v907
      %v1040 = vpack.c.b16 %v910, %v909
      %v1041 = vpack.c.b16 %v912, %v911
      %v1042 = vpack.c.b16 %v914, %v913
      %v1043 = vpack.c.b16 %v916, %v915
      %v1044 = vpack.c.b16 %v918, %v917
      %v1045 = vpack.c.b16 %v920, %v919
      %v1046 = vpack.c.b16 %v922, %v921
      %v1047 = vpack.c.b16 %v924, %v923
      %v1048 = vpack.c.b16 %v926, %v925
      %v1049 = vpack.c.b16 %v928, %v927
      %v1050 = vpack.c.b16 %v930, %v929
      %v1051 = vpack.c.b16 %v932, %v931
      %v1052 = vpack.c.b16 %v934, %v933
      %v1053 = vpack.c.b16 %v936, %v935
      %v1054 = vpack.c.b16 %v938, %v937
      %v1055 = vpack.c.b16 %v940, %v939
      %v1056 = vpack.c.b16 %v942, %v941
      %v1057 = vpack.c.b16 %v944, %v943
      %v1058 = vpack.c.b16 %v946, %v945
      %v1059 = vpack.c.b16 %v948, %v947
      %v1060 = vpack.c.b16 %v950, %v949
      %v1061 = vpack.c.b16 %v952, %v951
      %v1062 = vpack.c.b16 %v954, %v953
      %v1063 = vpack.c.b16 %v956, %v955
      %v1064 = vpack.c.b16 %v958, %v957
      %v1065 = vpack.c.b16 %v960, %v959
      %v1066 = vpack.c.b16 %v962, %v961
      %v1067 = vpack.c.b16 %v964, %v963
      %v1068 = vpack.c.b16 %v966, %v965
      %v1069 = vpack.c.b16 %v968, %v967
      %v1070 = vpack.c.b16 %v970, %v969
      %v1071 = vpack.c.b16 %v972, %v971
      %v1072 = vpack.c.b16 %v974, %v973
      %v1073 = vpack.c.b16 %v976, %v975
      %v1074 = vpack.c.b16 %v978, %v977
      %v1075 = vpack.c.b16 %v980, %v979
      %v1076 = vpack.c.b16 %v982, %v981
      %v1077 = vpack.c.b16 %v984, %v983
      %v1078 = vpack.c.b16 %v986, %v985
      %v1079 = vpack.c.b16 %v988, %v987
      %v1080 = vpack.c.b16 %v990, %v989
      %v1081 = vpack.c.b16 %v992, %v991
      %v1082 = vpack.c.b16 %v994, %v993
      %v1083 = vpack.c.b16 %v996, %v995
      %v1084 = vpack.c.b16 %v998, %v997
      %v1085 = vpack.c.b16 %v1000, %v999
      %v1086 = vpack.c.b16 %v1002, %v1001
      %v1087 = vpack.c.b16 %v1004, %v1003
      %v1088 = vpack.c.b16 %v1006, %v1005
      %v1089 = vpack.c.b16 %v1008, %v1007
      %v1090 = vpack.c.b16 %v1010, %v1009
      %v1091 = vpack.c.b16 %v1012, %v1011
      %v1092 = vpack.c.b16 %v1014, %v1013
      %v1093 = vpack.c.b16 %v1016, %v1015
      %v1094 = vpack.c.b16 %v1018, %v1017
      %v1095 = vpack.c.b16 %v1020, %v1019
      %v1096 = vpack.c.b16 %v1022, %v1021
      %v1097 = vpack.c.b16 %v1024, %v1023
      %v1098 = vpack.c.b16 %v1026, %v1025
      %1171 = vmatprep.subr.bf16.mxu0 0
      %1172 = vmatpush1.bf16.msra.mxu0 %v1027
      %1173 = vmatprep.subr.bf16.mxu0 0
      %1174 = vmatpush1.bf16.msra.mxu0 %v1028
      %1175 = vmatprep.subr.bf16.mxu0 0
      %1176 = vmatpush1.bf16.msra.mxu0 %v1029
      %1177 = vmatprep.subr.bf16.mxu0 0
      %1178 = vmatpush1.bf16.msra.mxu0 %v1030
      %1179 = vmatprep.subr.bf16.mxu0 0
      %1180 = vmatpush1.bf16.msra.mxu0 %v1031
      %1181 = vmatprep.subr.bf16.mxu0 0
      %1182 = vmatpush1.bf16.msra.mxu0 %v1032
      %1183 = vmatprep.subr.bf16.mxu0 0
      %1184 = vmatpush1.bf16.msra.mxu0 %v1033
      %1185 = vmatprep.subr.bf16.mxu0 0
      %1186 = vmatpush1.bf16.msra.mxu0 %v1034
      %1187 = vmatprep.subr.bf16.mxu0 0
      %1188 = vmatpush1.bf16.msra.mxu0 %v1035
      %1189 = vmatprep.subr.bf16.mxu0 0
      %1190 = vmatpush1.bf16.msra.mxu0 %v1036
      %1191 = vmatprep.subr.bf16.mxu0 0
      %1192 = vmatpush1.bf16.msra.mxu0 %v1037
      %1193 = vmatprep.subr.bf16.mxu0 0
      %1194 = vmatpush1.bf16.msra.mxu0 %v1038
      %1195 = vmatprep.subr.bf16.mxu0 0
      %1196 = vmatpush1.bf16.msra.mxu0 %v1039
      %1197 = vmatprep.subr.bf16.mxu0 0
      %1198 = vmatpush1.bf16.msra.mxu0 %v1040
      %1199 = vmatprep.subr.bf16.mxu0 0
      %1200 = vmatpush1.bf16.msra.mxu0 %v1041
      %1201 = vmatprep.subr.bf16.mxu0 0
      %1202 = vmatpush1.bf16.msra.mxu0 %v1042
      %1203 = vmatprep.mubr.bf16.mxu0 %v668
      %1204 = vmatmul.mubr.bf16.gmra.mrb[0].mxu0 %v667
      %v1205 = vpop.f32.mrb[0].mxu0
      %v1206 = vadd.f32 0.0, %v1205
      %v1207 = vpop.f32.mrb[0].mxu0
      %v1208 = vpop.f32.mrb[0].mxu0
      %v1209 = vadd.f32 0.0, %v1208
      %v1210 = vpop.f32.mrb[0].mxu0
      %1211 = vmatprep.mubr.bf16.mxu0 %v677
      %1212 = vmatmul.mubr.bf16.gmra.mrb[0].mxu0 %v676
      %v1213 = vpop.f32.mrb[0].mxu0
      %v1214 = vadd.f32 0.0, %v1213
      %v1215 = vpop.f32.mrb[0].mxu0
      %v1216 = vpop.f32.mrb[0].mxu0
      %v1217 = vadd.f32 0.0, %v1216
      %v1218 = vpop.f32.mrb[0].mxu0
      %1219 = vmatprep.mubr.bf16.mxu0 %v686
      %1220 = vmatmul.mubr.bf16.gmra.mrb[0].mxu0 %v685
      %v1221 = vpop.f32.mrb[0].mxu0
      %v1222 = vadd.f32 0.0, %v1221
      %v1223 = vpop.f32.mrb[0].mxu0
      %v1224 = vpop.f32.mrb[0].mxu0
      %v1225 = vadd.f32 0.0, %v1224
      %v1226 = vpop.f32.mrb[0].mxu0
      %1227 = vmatprep.mubr.bf16.mxu0 %v695
      %1228 = vmatmul.mubr.bf16.gmra.mrb[0].mxu0 %v694
      %v1229 = vpop.f32.mrb[0].mxu0
      %v1230 = vadd.f32 0.0, %v1229
      %v1231 = vpop.f32.mrb[0].mxu0
      %v1232 = vpop.f32.mrb[0].mxu0
      %v1233 = vadd.f32 0.0, %v1232
      %v1234 = vpop.f32.mrb[0].mxu0
      %1235 = vdwg.mxu0
      %1236 = vmatprep.subr.bf16.mxu0 0
      %1237 = vmatpush1.bf16.msra.mxu0 %v1043
      %1238 = vmatprep.subr.bf16.mxu0 0
      %1239 = vmatpush1.bf16.msra.mxu0 %v1044
      %1240 = vmatprep.subr.bf16.mxu0 0
      %1241 = vmatpush1.bf16.msra.mxu0 %v1045
      %1242 = vmatprep.subr.bf16.mxu0 0
      %1243 = vmatpush1.bf16.msra.mxu0 %v1046
      %1244 = vmatprep.subr.bf16.mxu0 0
      %1245 = vmatpush1.bf16.msra.mxu0 %v1047
      %1246 = vmatprep.subr.bf16.mxu0 0
      %1247 = vmatpush1.bf16.msra.mxu0 %v1048
      %1248 = vmatprep.subr.bf16.mxu0 0
      %1249 = vmatpush1.bf16.msra.mxu0 %v1049
      %1250 = vmatprep.subr.bf16.mxu0 0
      %1251 = vmatpush1.bf16.msra.mxu0 %v1050
      %1252 = vmatprep.subr.bf16.mxu0 0
      %1253 = vmatpush1.bf16.msra.mxu0 %v1051
      %1254 = vmatprep.subr.bf16.mxu0 0
      %1255 = vmatpush1.bf16.msra.mxu0 %v1052
      %1256 = vmatprep.subr.bf16.mxu0 0
      %1257 = vmatpush1.bf16.msra.mxu0 %v1053
      %1258 = vmatprep.subr.bf16.mxu0 0
      %1259 = vmatpush1.bf16.msra.mxu0 %v1054
      %1260 = vmatprep.subr.bf16.mxu0 0
      %1261 = vmatpush1.bf16.msra.mxu0 %v1055
      %1262 = vmatprep.subr.bf16.mxu0 0
      %1263 = vmatpush1.bf16.msra.mxu0 %v1056
      %1264 = vmatprep.subr.bf16.mxu0 0
      %1265 = vmatpush1.bf16.msra.mxu0 %v1057
      %1266 = vmatprep.subr.bf16.mxu0 0
      %1267 = vmatpush1.bf16.msra.mxu0 %v1058
      %1268 = vmatprep.mubr.bf16.mxu0 %v670
      %1269 = vmatmul.mubr.bf16.gmra.mrb[0].mxu0 %v669
      %v1270 = vpop.f32.mrb[0].mxu0
      %v1271 = vadd.f32 %v1206, %v1270
      %v1272 = vpop.f32.mrb[0].mxu0
      %v1273 = vpop.f32.mrb[0].mxu0
      %v1274 = vadd.f32 %v1209, %v1273
      %v1275 = vpop.f32.mrb[0].mxu0
      %1276 = vmatprep.mubr.bf16.mxu0 %v679
      %1277 = vmatmul.mubr.bf16.gmra.mrb[0].mxu0 %v678
      %v1278 = vpop.f32.mrb[0].mxu0
      %v1279 = vadd.f32 %v1214, %v1278
      %v1280 = vpop.f32.mrb[0].mxu0
      %v1281 = vpop.f32.mrb[0].mxu0
      %v1282 = vadd.f32 %v1217, %v1281
      %v1283 = vpop.f32.mrb[0].mxu0
      %1284 = vmatprep.mubr.bf16.mxu0 %v688
      %1285 = vmatmul.mubr.bf16.gmra.mrb[0].mxu0 %v687
      %v1286 = vpop.f32.mrb[0].mxu0
      %v1287 = vadd.f32 %v1222, %v1286
      %v1288 = vpop.f32.mrb[0].mxu0
      %v1289 = vpop.f32.mrb[0].mxu0
      %v1290 = vadd.f32 %v1225, %v1289
      %v1291 = vpop.f32.mrb[0].mxu0
      %1292 = vmatprep.mubr.bf16.mxu0 %v697
      %1293 = vmatmul.mubr.bf16.gmra.mrb[0].mxu0 %v696
      %v1294 = vpop.f32.mrb[0].mxu0
      %v1295 = vadd.f32 %v1230, %v1294
      %v1296 = vpop.f32.mrb[0].mxu0
      %v1297 = vpop.f32.mrb[0].mxu0
      %v1298 = vadd.f32 %v1233, %v1297
      %v1299 = vpop.f32.mrb[0].mxu0
      %1300 = vdwg.mxu0
      %1301 = vmatprep.subr.bf16.mxu0 0
      %1302 = vmatpush1.bf16.msra.mxu0 %v1059
      %1303 = vmatprep.subr.bf16.mxu0 0
      %1304 = vmatpush1.bf16.msra.mxu0 %v1060
      %1305 = vmatprep.subr.bf16.mxu0 0
      %1306 = vmatpush1.bf16.msra.mxu0 %v1061
      %1307 = vmatprep.subr.bf16.mxu0 0
      %1308 = vmatpush1.bf16.msra.mxu0 %v1062
      %1309 = vmatprep.subr.bf16.mxu0 0
      %1310 = vmatpush1.bf16.msra.mxu0 %v1063
      %1311 = vmatprep.subr.bf16.mxu0 0
      %1312 = vmatpush1.bf16.msra.mxu0 %v1064
      %1313 = vmatprep.subr.bf16.mxu0 0
      %1314 = vmatpush1.bf16.msra.mxu0 %v1065
      %1315 = vmatprep.subr.bf16.mxu0 0
      %1316 = vmatpush1.bf16.msra.mxu0 %v1066
      %1317 = vmatprep.subr.bf16.mxu0 0
      %1318 = vmatpush1.bf16.msra.mxu0 %v1067
      %1319 = vmatprep.subr.bf16.mxu0 0
      %1320 = vmatpush1.bf16.msra.mxu0 %v1068
      %1321 = vmatprep.subr.bf16.mxu0 0
      %1322 = vmatpush1.bf16.msra.mxu0 %v1069
      %1323 = vmatprep.subr.bf16.mxu0 0
      %1324 = vmatpush1.bf16.msra.mxu0 %v1070
      %1325 = vmatprep.subr.bf16.mxu0 0
      %1326 = vmatpush1.bf16.msra.mxu0 %v1071
      %1327 = vmatprep.subr.bf16.mxu0 0
      %1328 = vmatpush1.bf16.msra.mxu0 %v1072
      %1329 = vmatprep.subr.bf16.mxu0 0
      %1330 = vmatpush1.bf16.msra.mxu0 %v1073
      %1331 = vmatprep.subr.bf16.mxu0 0
      %1332 = vmatpush1.bf16.msra.mxu0 %v1074
      %1333 = vmatprep.mubr.bf16.mxu0 %v672
      %1334 = vmatmul.mubr.bf16.gmra.mrb[0].mxu0 %v671
      %v1335 = vpop.f32.mrb[0].mxu0
      %v1336 = vadd.f32 %v1271, %v1335
      %v1337 = vpop.f32.mrb[0].mxu0
      %v1338 = vpop.f32.mrb[0].mxu0
      %v1339 = vadd.f32 %v1274, %v1338
      %v1340 = vpop.f32.mrb[0].mxu0
      %1341 = vmatprep.mubr.bf16.mxu0 %v681
      %1342 = vmatmul.mubr.bf16.gmra.mrb[0].mxu0 %v680
      %v1343 = vpop.f32.mrb[0].mxu0
      %v1344 = vadd.f32 %v1279, %v1343
      %v1345 = vpop.f32.mrb[0].mxu0
      %v1346 = vpop.f32.mrb[0].mxu0
      %v1347 = vadd.f32 %v1282, %v1346
      %v1348 = vpop.f32.mrb[0].mxu0
      %1349 = vmatprep.mubr.bf16.mxu0 %v690
      %1350 = vmatmul.mubr.bf16.gmra.mrb[0].mxu0 %v689
      %v1351 = vpop.f32.mrb[0].mxu0
      %v1352 = vadd.f32 %v1287, %v1351
      %v1353 = vpop.f32.mrb[0].mxu0
      %v1354 = vpop.f32.mrb[0].mxu0
      %v1355 = vadd.f32 %v1290, %v1354
      %v1356 = vpop.f32.mrb[0].mxu0
      %1357 = vmatprep.mubr.bf16.mxu0 %v699
      %1358 = vmatmul.mubr.bf16.gmra.mrb[0].mxu0 %v698
      %v1359 = vpop.f32.mrb[0].mxu0
      %v1360 = vadd.f32 %v1295, %v1359
      %v1361 = vpop.f32.mrb[0].mxu0
      %v1362 = vpop.f32.mrb[0].mxu0
      %v1363 = vadd.f32 %v1298, %v1362
      %v1364 = vpop.f32.mrb[0].mxu0
      %1365 = vdwg.mxu0
      %1366 = vmatprep.subr.bf16.mxu0 0
      %1367 = vmatpush1.bf16.msra.mxu0 %v1075
      %1368 = vmatprep.subr.bf16.mxu0 0
      %1369 = vmatpush1.bf16.msra.mxu0 %v1076
      %1370 = vmatprep.subr.bf16.mxu0 0
      %1371 = vmatpush1.bf16.msra.mxu0 %v1077
      %1372 = vmatprep.subr.bf16.mxu0 0
      %1373 = vmatpush1.bf16.msra.mxu0 %v1078
      %1374 = vmatprep.subr.bf16.mxu0 0
      %1375 = vmatpush1.bf16.msra.mxu0 %v1079
      %1376 = vmatprep.subr.bf16.mxu0 0
      %1377 = vmatpush1.bf16.msra.mxu0 %v1080
      %1378 = vmatprep.subr.bf16.mxu0 0
      %1379 = vmatpush1.bf16.msra.mxu0 %v1081
      %1380 = vmatprep.subr.bf16.mxu0 0
      %1381 = vmatpush1.bf16.msra.mxu0 %v1082
      %1382 = vmatprep.subr.bf16.mxu0 0
      %1383 = vmatpush1.bf16.msra.mxu0 %v1083
      %1384 = vmatprep.subr.bf16.mxu0 0
      %1385 = vmatpush1.bf16.msra.mxu0 %v1084
      %1386 = vmatprep.subr.bf16.mxu0 0
      %1387 = vmatpush1.bf16.msra.mxu0 %v1085
      %1388 = vmatprep.subr.bf16.mxu0 0
      %1389 = vmatpush1.bf16.msra.mxu0 %v1086
      %1390 = vmatprep.subr.bf16.mxu0 0
      %1391 = vmatpush1.bf16.msra.mxu0 %v1087
      %1392 = vmatprep.subr.bf16.mxu0 0
      %1393 = vmatpush1.bf16.msra.mxu0 %v1088
      %1394 = vmatprep.subr.bf16.mxu0 0
      %1395 = vmatpush1.bf16.msra.mxu0 %v1089
      %1396 = vmatprep.subr.bf16.mxu0 0
      %1397 = vmatpush1.bf16.msra.mxu0 %v1090
      %1398 = vmatprep.mubr.bf16.mxu0 %v674
      %1399 = vmatmul.mubr.bf16.gmra.mrb[0].mxu0 %v673
      %v1400 = vpop.f32.mrb[0].mxu0
      %v1401 = vadd.f32 %v1336, %v1400
      %v1402 = vpop.f32.mrb[0].mxu0
      %v1403 = vpop.f32.mrb[0].mxu0
      %v1404 = vadd.f32 %v1339, %v1403
      %v1405 = vpop.f32.mrb[0].mxu0
      %1406 = vmatprep.mubr.bf16.mxu0 %v683
      %1407 = vmatmul.mubr.bf16.gmra.mrb[0].mxu0 %v682
      %v1408 = vpop.f32.mrb[0].mxu0
      %v1409 = vadd.f32 %v1344, %v1408
      %v1410 = vpop.f32.mrb[0].mxu0
      %v1411 = vpop.f32.mrb[0].mxu0
      %v1412 = vadd.f32 %v1347, %v1411
      %v1413 = vpop.f32.mrb[0].mxu0
      %1414 = vmatprep.mubr.bf16.mxu0 %v692
      %1415 = vmatmul.mubr.bf16.gmra.mrb[0].mxu0 %v691
      %v1416 = vpop.f32.mrb[0].mxu0
      %v1417 = vadd.f32 %v1352, %v1416
      %v1418 = vpop.f32.mrb[0].mxu0
      %v1419 = vpop.f32.mrb[0].mxu0
      %v1420 = vadd.f32 %v1355, %v1419
      %v1421 = vpop.f32.mrb[0].mxu0
      %1422 = vmatprep.mubr.bf16.mxu0 %v701
      %1423 = vmatmul.mubr.bf16.gmra.mrb[0].mxu0 %v700
      %v1424 = vpop.f32.mrb[0].mxu0
      %v1425 = vadd.f32 %v1360, %v1424
      %v1426 = vpop.f32.mrb[0].mxu0
      %v1427 = vpop.f32.mrb[0].mxu0
      %v1428 = vadd.f32 %v1363, %v1427
      %v1429 = vpop.f32.mrb[0].mxu0
      %1430 = vdwg.mxu0
      %1431 = vmatprep.subr.bf16.mxu0 0
      %1432 = vmatpush1.bf16.msra.mxu0 %v1091
      %1433 = vmatprep.subr.bf16.mxu0 0
      %1434 = vmatpush1.bf16.msra.mxu0 %v1092
      %1435 = vmatprep.subr.bf16.mxu0 0
      %1436 = vmatpush1.bf16.msra.mxu0 %v1093
      %1437 = vmatprep.subr.bf16.mxu0 0
      %1438 = vmatpush1.bf16.msra.mxu0 %v1094
      %1439 = vmatprep.subr.bf16.mxu0 0
      %1440 = vmatpush1.bf16.msra.mxu0 %v1095
      %1441 = vmatprep.subr.bf16.mxu0 0
      %1442 = vmatpush1.bf16.msra.mxu0 %v1096
      %1443 = vmatprep.subr.bf16.mxu0 0
      %1444 = vmatpush1.bf16.msra.mxu0 %v1097
      %1445 = vmatprep.subr.bf16.mxu0 0
      %1446 = vmatpush1.bf16.msra.mxu0 %v1098
      %1447 = vmatprep.subr.bf16.mxu0 0
      %1448 = vmatpush1.bf16.msra.mxu0 0
      %1449 = vmatprep.subr.bf16.mxu0 0
      %1450 = vmatpush1.bf16.msra.mxu0 0
      %1451 = vmatprep.subr.bf16.mxu0 0
      %1452 = vmatpush1.bf16.msra.mxu0 0
      %1453 = vmatprep.subr.bf16.mxu0 0
      %1454 = vmatpush1.bf16.msra.mxu0 0
      %1455 = vmatprep.subr.bf16.mxu0 0
      %1456 = vmatpush1.bf16.msra.mxu0 0
      %1457 = vmatprep.subr.bf16.mxu0 0
      %1458 = vmatpush1.bf16.msra.mxu0 0
      %1459 = vmatprep.subr.bf16.mxu0 0
      %1460 = vmatpush1.bf16.msra.mxu0 0
      %1461 = vmatprep.subr.bf16.mxu0 0
      %1462 = vmatpush1.bf16.msra.mxu0 0
      %1463 = vmatprep.mubr.bf16.mxu0 0
      %1464 = vmatmul.mubr.bf16.gmra.mrb[0].mxu0 %v675
      %v1465 = vpop.f32.mrb[0].mxu0
      %v1466 = vadd.f32 %v1401, %v1465
      %v1467 = vpop.f32.mrb[0].mxu0
      %v1468 = vpop.f32.mrb[0].mxu0
      %v1469 = vadd.f32 %v1404, %v1468
      %v1470 = vpop.f32.mrb[0].mxu0
      %1471 = vmatprep.mubr.bf16.mxu0 0
      %1472 = vmatmul.mubr.bf16.gmra.mrb[0].mxu0 %v684
      %v1473 = vpop.f32.mrb[0].mxu0
      %v1474 = vadd.f32 %v1409, %v1473
      %v1475 = vpop.f32.mrb[0].mxu0
      %v1476 = vpop.f32.mrb[0].mxu0
      %v1477 = vadd.f32 %v1412, %v1476
      %v1478 = vpop.f32.mrb[0].mxu0
      %1479 = vmatprep.mubr.bf16.mxu0 0
      %1480 = vmatmul.mubr.bf16.gmra.mrb[0].mxu0 %v693
      %v1481 = vpop.f32.mrb[0].mxu0
      %v1482 = vadd.f32 %v1417, %v1481
      %v1483 = vpop.f32.mrb[0].mxu0
      %v1484 = vpop.f32.mrb[0].mxu0
      %v1485 = vadd.f32 %v1420, %v1484
      %v1486 = vpop.f32.mrb[0].mxu0
      %1487 = vmatprep.mubr.bf16.mxu0 0
      %1488 = vmatmul.mubr.bf16.gmra.mrb[0].mxu0 %v702
      %v1489 = vpop.f32.mrb[0].mxu0
      %v1490 = vadd.f32 %v1425, %v1489
      %v1491 = vpop.f32.mrb[0].mxu0
      %v1492 = vpop.f32.mrb[0].mxu0
      %v1493 = vadd.f32 %v1428, %v1492
      %v1494 = vpop.f32.mrb[0].mxu0
      %1495 = vdwg.mxu0
      %v1496 = vpack.c.bf16 %v1469, %v1466
      %v1497 = vpack.c.bf16 %v1477, %v1474
      %v1498 = vpack.c.bf16 %v1485, %v1482
      %v1499 = vpack.c.bf16 %v1493, %v1490
      %v1504 = vunpack.c.l.b16 %v1496
      %v1505 = vunpack.c.h.b16 %v1496
      %v1506 = vunpack.c.l.b16 %v1497
      %v1507 = vunpack.c.h.b16 %v1497
      %v1508 = vunpack.c.l.b16 %v1498
      %v1509 = vunpack.c.h.b16 %v1498
      %v1510 = vunpack.c.l.b16 %v1499
      %v1511 = vunpack.c.h.b16 %v1499
      %v1512 = vpack.c.b16 %v1504, %v1504
      %v1513 = vpack.c.b16 %v1505, %v1505
      %v1514 = vpack.c.b16 %v1506, %v1506
      %v1515 = vpack.c.b16 %v1507, %v1507
      %v1516 = vpack.c.b16 %v1508, %v1508
      %v1517 = vpack.c.b16 %v1509, %v1509
      %v1518 = vpack.c.b16 %v1510, %v1510
      %v1519 = vpack.c.b16 %v1511, %v1511
      %1528 = vst [vmem:[%s208] sm:$0xf] %v1512
      %1529 = vst [vmem:[%s208 + $0x4] sm:$0xf] %v1513
      %1530 = vst [vmem:[%s208 + $0x8] sm:$0xf] %v1514
      %1531 = vst [vmem:[%s208 + $0xc] sm:$0xf] %v1515
      %1532 = vst [vmem:[%s208 + $0x10] sm:$0xf] %v1516
      %1533 = vst [vmem:[%s208 + $0x14] sm:$0xf] %v1517
      %1534 = vst [vmem:[%s208 + $0x18] sm:$0xf] %v1518
      %1535 = vst [vmem:[%s208 + $0x1c] sm:$0xf] %v1519
      %v1536 = vadd.f32 %v1466, %v1469
      %v1537 = vadd.f32 %v1536, %v1474
      %v1538 = vadd.f32 %v1537, %v1477
      %v1539 = vadd.f32 %v1538, %v1482
      %v1540 = vadd.f32 %v1539, %v1485
      %v1541 = vadd.f32 %v1540, %v1490
      %v1542 = vadd.f32 %v1541, %v1493
      %v1543 = vrot.slane %v1542, 4
      %v1544 = vadd.f32 %v1542, %v1543
      %v1545 = vrot.slane %v1544, 2
      %v1546 = vadd.f32 %v1544, %v1545
      %v1547 = vrot.slane %v1546, 1
      %v1548 = vadd.f32 %v1546, %v1547
      %1549 = vst [vmem:[%s212] sm:$0x1] %v1548
      %v1550 = vmul.f32 %v1466, %v1466
      %v1551 = vmul.f32 %v1469, %v1469
      %v1552 = vmul.f32 %v1474, %v1474
      %v1553 = vmul.f32 %v1477, %v1477
      %v1554 = vmul.f32 %v1482, %v1482
      %v1555 = vmul.f32 %v1485, %v1485
      %v1556 = vmul.f32 %v1490, %v1490
      %v1557 = vmul.f32 %v1493, %v1493
      %v1558 = vadd.f32 %v1550, %v1551
      %v1559 = vadd.f32 %v1558, %v1552
      %v1560 = vadd.f32 %v1559, %v1553
      %v1561 = vadd.f32 %v1560, %v1554
      %v1562 = vadd.f32 %v1561, %v1555
      %v1563 = vadd.f32 %v1562, %v1556
      %v1564 = vadd.f32 %v1563, %v1557
      %v1565 = vrot.slane %v1564, 4
      %v1566 = vadd.f32 %v1564, %v1565
      %v1567 = vrot.slane %v1566, 2
      %v1568 = vadd.f32 %v1566, %v1567
      %v1569 = vrot.slane %v1568, 1
      %v1570 = vadd.f32 %v1568, %v1569
      %1571 = vst [vmem:[%s215] sm:$0x1] %v1570
      %s1572 = smul.u32 8, %s16
      %p1573 = scmp.lt.s32.totalorder %s1572, 15
      %s1574 = scalar_select %p1573, %s1572, 15
      %s1575 = smul.addr %s1574, 4
      %s1576 = scalar_lea.vmem %s2, %s1575
      %p1577 = scmp.lt.s32.totalorder %s16, 1
      %s1578 = scalar_select %p1577, %s16, 1
      %s1579 = scalar_lea.vmem %s3, %s1578
      %p1580 = scmp.lt.s32.totalorder %s16, 1
      %s1581 = scalar_select %p1580, %s16, 1
      %s1582 = scalar_lea.vmem %s4, %s1581
      // Predicated region
      $region29: #{bottleneck_forward.5} parent=27 // pred_check
        %p1583 = pneg %p81
      $region30: #{bottleneck_forward.5} parent=27 // pred_check_branch
        %1585 = sbr.rel (%p1583) target = $region32
      $region31: #{bottleneck_forward.5} parent=27 // pred_region
        %s1586 = smul.u32 8, %s16
      $region32: #{bottleneck_forward.5} parent=27 // pred_fallthru
        _
      // Predicated region
      $region33: #{bottleneck_forward.5} parent=27 // pred_check
        %p1587 = pneg %p107
      $region34: #{bottleneck_forward.5} parent=27 // pred_check_branch
        %1589 = sbr.rel (%p1587) target = $region36
      $region35: #{bottleneck_forward.5} parent=27 // pred_region
        _
      $region36: #{bottleneck_forward.5} parent=27 // pred_fallthru
        _
      // Predicated region
      $region37: #{bottleneck_forward.5} parent=27 // pred_check
        %p1590 = pneg %p133
      $region38: #{bottleneck_forward.5} parent=27 // pred_check_branch
        %1592 = sbr.rel (%p1590) target = $region40
      $region39: #{bottleneck_forward.5} parent=27 // pred_region
        _
      $region40: #{bottleneck_forward.5} parent=27 // pred_fallthru
        _
    $region28: #{bottleneck_forward.5} parent=5 // pred_fallthru
      _
    %p1593 = scmp.le.s32.totalorder 2, %s11
    // Predicated region
    $region41: #{bottleneck_forward.5} parent=5 // pred_check
      %p1594 = pneg %p1593
    $region42: #{bottleneck_forward.5} parent=5 // pred_check_branch
      %1596 = sbr.rel (%p1594) target = $region44
    $region43: #{bottleneck_forward.5} parent=5 // pred_region
      %s1597 = ssub.s32 %s11, 2
      // Predicated region
      $region45: #{bottleneck_forward.5} parent=43 // pred_check
        %p1598 = pneg %p87
      $region46: #{bottleneck_forward.5} parent=43 // pred_check_branch
        %1600 = sbr.rel (%p1598) target = $region48
      $region47: #{bottleneck_forward.5} parent=43 // pred_region
        %s1601 = smul.u32 8, %s17
        %p1602 = scmp.lt.s32.totalorder %s1601, 15
        %s1603 = scalar_select %p1602, %s1601, 15
        %s1604 = smul.addr %s1603, 4
        %s1605 = scalar_lea.vmem %s2, %s1604
      $region48: #{bottleneck_forward.5} parent=43 // pred_fallthru
        _
      // Predicated region
      $region49: #{bottleneck_forward.5} parent=43 // pred_check
        %p1606 = pneg %p113
      $region50: #{bottleneck_forward.5} parent=43 // pred_check_branch
        %1608 = sbr.rel (%p1606) target = $region52
      $region51: #{bottleneck_forward.5} parent=43 // pred_region
        %p1609 = scmp.lt.s32.totalorder %s17, 1
        %s1610 = scalar_select %p1609, %s17, 1
        %s1611 = scalar_lea.vmem %s3, %s1610
      $region52: #{bottleneck_forward.5} parent=43 // pred_fallthru
        _
      // Predicated region
      $region53: #{bottleneck_forward.5} parent=43 // pred_check
        %p1612 = pneg %p139
      $region54: #{bottleneck_forward.5} parent=43 // pred_check_branch
        %1614 = sbr.rel (%p1612) target = $region56
      $region55: #{bottleneck_forward.5} parent=43 // pred_region
        %p1615 = scmp.lt.s32.totalorder %s17, 1
        %s1616 = scalar_select %p1615, %s17, 1
        %s1617 = scalar_lea.vmem %s4, %s1616
      $region56: #{bottleneck_forward.5} parent=43 // pred_fallthru
        _
    $region44: #{bottleneck_forward.5} parent=5 // pred_fallthru
      _
  $region6: #{bottleneck_forward.5} parent=0 // loop_footer
    %s15 = sadd.s32 1, %s11
  $region7: #{bottleneck_forward.5} parent=0 // loop_footer_branch
    %10 = sbr.rel target = $region3
  $region8: #{bottleneck_forward.5} parent=0 // loop_exit
    _

// kernel: bottleneck_forward.6
$region0: #{bottleneck_forward.6}
  #allocation0 [shape = 'u32[]', space=smem, size = 0x4, offset = 0x4, fixed_abs, tag = 'smem constant byte address 0x4 - core index']
  #allocation1 [shape = 'u32[144,128]{1,0:T(1,128)}', space=vmem, size = 0x12000, scoped, tag = 'internal scratch']
  %s0 = inlined_call_operand.vmem [shape: bf16[128,128], index: 0, kind: input, shape index: {}]
  %s1 = inlined_call_operand.vmem [shape: bf16[128,128], index: 1, kind: input, shape index: {}]
  %s2 = inlined_call_operand.vmem [shape: f32[1,128], index: 2, kind: input, shape index: {}]
  %s3 = inlined_call_operand.vmem [shape: f32[1,128], index: 3, kind: input, shape index: {}]
  %s4 = inlined_call_operand.vmem [shape: bf16[128,128], index: 4, kind: input, shape index: {}]
  %s5 = inlined_call_operand.vmem [shape: bf16[128,128], index: 5, kind: input, shape index: {}]
  %s6 = inlined_call_operand.vmem [shape: bf16[128,128], index: 6, kind: output, shape index: {0}]
  %s7 = inlined_call_operand.vmem [shape: bf16[128,128], index: 7, kind: output, shape index: {1}]
  %s8 = inlined_call_operand.vmem [shape: f32[1,1,128], index: 8, kind: output, shape index: {2}]
  %s9 = inlined_call_operand.vmem [shape: f32[1,1,128], index: 9, kind: output, shape index: {3}]
  %s10 = inlined_call_operand.vmem [shape: f32[1,1,128], index: 10, kind: output, shape index: {4}]
  %s11 = inlined_call_operand.vmem [shape: f32[1,1,128], index: 11, kind: output, shape index: {5}]
  %12 = xla_tuple %s6, %s7, %s8, %s9, %s10, %s11
  %s13 = sld [smem:[#allocation0]]
  $region74: #{bottleneck_forward.6} parent=0
    _
  %s15 = ssub.s32 1, %s13
  %s16 = scalar_select 0, %s15, %s13
  // Predicated region
  $region2: #{bottleneck_forward.6} parent=0 // pred_check
    _
  $region3: #{bottleneck_forward.6} parent=0 // pred_check_branch
    %18 = sbr.rel (0) target = $region5
  $region4: #{bottleneck_forward.6} parent=0 // pred_region
    _
  $region5: #{bottleneck_forward.6} parent=0 // pred_fallthru
    _
  // Predicated region
  $region6: #{bottleneck_forward.6} parent=0 // pred_check
    _
  $region7: #{bottleneck_forward.6} parent=0 // pred_check_branch
    %20 = sbr.rel (0) target = $region9
  $region8: #{bottleneck_forward.6} parent=0 // pred_region
    _
  $region9: #{bottleneck_forward.6} parent=0 // pred_fallthru
    _
  // Predicated region
  $region10: #{bottleneck_forward.6} parent=0 // pred_check
    _
  $region11: #{bottleneck_forward.6} parent=0 // pred_check_branch
    %22 = sbr.rel (0) target = $region13
  $region12: #{bottleneck_forward.6} parent=0 // pred_region
    _
  $region13: #{bottleneck_forward.6} parent=0 // pred_fallthru
    _
  // Predicated region
  $region14: #{bottleneck_forward.6} parent=0 // pred_check
    _
  $region15: #{bottleneck_forward.6} parent=0 // pred_check_branch
    %24 = sbr.rel (0) target = $region17
  $region16: #{bottleneck_forward.6} parent=0 // pred_region
    _
  $region17: #{bottleneck_forward.6} parent=0 // pred_fallthru
    _
  // Predicated region
  $region18: #{bottleneck_forward.6} parent=0 // pred_check
    _
  $region19: #{bottleneck_forward.6} parent=0 // pred_check_branch
    %26 = sbr.rel (0) target = $region21
  $region20: #{bottleneck_forward.6} parent=0 // pred_region
    _
  $region21: #{bottleneck_forward.6} parent=0 // pred_fallthru
    _
  // Predicated region
  $region22: #{bottleneck_forward.6} parent=0 // pred_check
    _
  $region23: #{bottleneck_forward.6} parent=0 // pred_check_branch
    %28 = sbr.rel (0) target = $region25
  $region24: #{bottleneck_forward.6} parent=0 // pred_region
    _
  $region25: #{bottleneck_forward.6} parent=0 // pred_fallthru
    _
  %v30 = vld [vmem:[%s0] sm:$0xf]
  %v31 = vld [vmem:[%s0 + $0x4] sm:$0xf]
  %v32 = vld [vmem:[%s0 + $0x8] sm:$0xf]
  %v33 = vld [vmem:[%s0 + $0xc] sm:$0xf]
  %v34 = vld [vmem:[%s0 + $0x10] sm:$0xf]
  %v35 = vld [vmem:[%s0 + $0x14] sm:$0xf]
  %v36 = vld [vmem:[%s0 + $0x18] sm:$0xf]
  %v37 = vld [vmem:[%s0 + $0x1c] sm:$0xf]
  %v38 = vld [vmem:[%s0 + $0x20] sm:$0xf]
  %v39 = vld [vmem:[%s0 + $0x24] sm:$0xf]
  %v40 = vld [vmem:[%s0 + $0x28] sm:$0xf]
  %v41 = vld [vmem:[%s0 + $0x2c] sm:$0xf]
  %v42 = vld [vmem:[%s0 + $0x30] sm:$0xf]
  %v43 = vld [vmem:[%s0 + $0x34] sm:$0xf]
  %v44 = vld [vmem:[%s0 + $0x38] sm:$0xf]
  %v45 = vld [vmem:[%s0 + $0x3c] sm:$0xf]
  %v46 = vunpack.c.l.bf16 %v30
  %v47 = vunpack.c.l.bf16 %v31
  %v48 = vunpack.c.l.bf16 %v32
  %v49 = vunpack.c.l.bf16 %v33
  %v50 = vunpack.c.l.bf16 %v34
  %v51 = vunpack.c.l.bf16 %v35
  %v52 = vunpack.c.l.bf16 %v36
  %v53 = vunpack.c.l.bf16 %v37
  %v54 = vunpack.c.l.bf16 %v38
  %v55 = vunpack.c.l.bf16 %v39
  %v56 = vunpack.c.l.bf16 %v40
  %v57 = vunpack.c.l.bf16 %v41
  %v58 = vunpack.c.l.bf16 %v42
  %v59 = vunpack.c.l.bf16 %v43
  %v60 = vunpack.c.l.bf16 %v44
  %v61 = vunpack.c.l.bf16 %v45
  %v62 = vld [vmem:[%s2] sm:$0x1]
  %v64 = vlaneseq
  %v65 = vshrl.u32 %v64, 7
  %v66 = vsub.s32 0, %v65
  %v67 = vrot.slane %v62, %v66
  %v69 = vmul.f32 %v46, %v67
  %v70 = vmul.f32 %v47, %v67
  %v71 = vmul.f32 %v48, %v67
  %v72 = vmul.f32 %v49, %v67
  %v73 = vmul.f32 %v50, %v67
  %v74 = vmul.f32 %v51, %v67
  %v75 = vmul.f32 %v52, %v67
  %v76 = vmul.f32 %v53, %v67
  %v77 = vmul.f32 %v54, %v67
  %v78 = vmul.f32 %v55, %v67
  %v79 = vmul.f32 %v56, %v67
  %v80 = vmul.f32 %v57, %v67
  %v81 = vmul.f32 %v58, %v67
  %v82 = vmul.f32 %v59, %v67
  %v83 = vmul.f32 %v60, %v67
  %v84 = vmul.f32 %v61, %v67
  %v85 = vld [vmem:[%s3] sm:$0x1]
  %v87 = vlaneseq
  %v88 = vshrl.u32 %v87, 7
  %v89 = vsub.s32 0, %v88
  %v90 = vrot.slane %v85, %v89
  %v92 = vadd.f32 %v69, %v90
  %v93 = vadd.f32 %v70, %v90
  %v94 = vadd.f32 %v71, %v90
  %v95 = vadd.f32 %v72, %v90
  %v96 = vadd.f32 %v73, %v90
  %v97 = vadd.f32 %v74, %v90
  %v98 = vadd.f32 %v75, %v90
  %v99 = vadd.f32 %v76, %v90
  %v100 = vadd.f32 %v77, %v90
  %v101 = vadd.f32 %v78, %v90
  %v102 = vadd.f32 %v79, %v90
  %v103 = vadd.f32 %v80, %v90
  %v104 = vadd.f32 %v81, %v90
  %v105 = vadd.f32 %v82, %v90
  %v106 = vadd.f32 %v83, %v90
  %v107 = vadd.f32 %v84, %v90
  %v108 = vmax.f32 %v92, 0.0
  %v109 = vmax.f32 %v93, 0.0
  %v110 = vmax.f32 %v94, 0.0
  %v111 = vmax.f32 %v95, 0.0
  %v112 = vmax.f32 %v96, 0.0
  %v113 = vmax.f32 %v97, 0.0
  %v114 = vmax.f32 %v98, 0.0
  %v115 = vmax.f32 %v99, 0.0
  %v116 = vmax.f32 %v100, 0.0
  %v117 = vmax.f32 %v101, 0.0
  %v118 = vmax.f32 %v102, 0.0
  %v119 = vmax.f32 %v103, 0.0
  %v120 = vmax.f32 %v104, 0.0
  %v121 = vmax.f32 %v105, 0.0
  %v122 = vmax.f32 %v106, 0.0
  %v123 = vmax.f32 %v107, 0.0
  %v124 = vpack.c.bf16 %v109, %v108
  %v125 = vpack.c.bf16 %v111, %v110
  %v126 = vpack.c.bf16 %v113, %v112
  %v127 = vpack.c.bf16 %v115, %v114
  %v128 = vpack.c.bf16 %v117, %v116
  %v129 = vpack.c.bf16 %v119, %v118
  %v130 = vpack.c.bf16 %v121, %v120
  %v131 = vpack.c.bf16 %v123, %v122
  %v132 = vld [vmem:[%s4] sm:$0xf]
  %v133 = vld [vmem:[%s4 + $0x4] sm:$0xf]
  %v134 = vld [vmem:[%s4 + $0x8] sm:$0xf]
  %v135 = vld [vmem:[%s4 + $0xc] sm:$0xf]
  %v136 = vld [vmem:[%s4 + $0x10] sm:$0xf]
  %v137 = vld [vmem:[%s4 + $0x14] sm:$0xf]
  %v138 = vld [vmem:[%s4 + $0x18] sm:$0xf]
  %v139 = vld [vmem:[%s4 + $0x1c] sm:$0xf]
  %v140 = vld [vmem:[%s4 + $0x20] sm:$0xf]
  %v141 = vld [vmem:[%s4 + $0x24] sm:$0xf]
  %v142 = vld [vmem:[%s4 + $0x28] sm:$0xf]
  %v143 = vld [vmem:[%s4 + $0x2c] sm:$0xf]
  %v144 = vld [vmem:[%s4 + $0x30] sm:$0xf]
  %v145 = vld [vmem:[%s4 + $0x34] sm:$0xf]
  %v146 = vld [vmem:[%s4 + $0x38] sm:$0xf]
  %v147 = vld [vmem:[%s4 + $0x3c] sm:$0xf]
  %v164 = vunpack.c.l.b16 %v132
  %v165 = vunpack.c.l.b16 %v133
  %v166 = vunpack.c.l.b16 %v134
  %v167 = vunpack.c.l.b16 %v135
  %v168 = vunpack.c.l.b16 %v136
  %v169 = vunpack.c.l.b16 %v137
  %v170 = vunpack.c.l.b16 %v138
  %v171 = vunpack.c.l.b16 %v139
  %v172 = vunpack.c.l.b16 %v140
  %v173 = vunpack.c.l.b16 %v141
  %v174 = vunpack.c.l.b16 %v142
  %v175 = vunpack.c.l.b16 %v143
  %v176 = vunpack.c.l.b16 %v144
  %v177 = vunpack.c.l.b16 %v145
  %v178 = vunpack.c.l.b16 %v146
  %v179 = vunpack.c.l.b16 %v147
  %v180 = vpack.c.b16 %v165, %v164
  %v181 = vpack.c.b16 %v167, %v166
  %v182 = vpack.c.b16 %v169, %v168
  %v183 = vpack.c.b16 %v171, %v170
  %v184 = vpack.c.b16 %v173, %v172
  %v185 = vpack.c.b16 %v175, %v174
  %v186 = vpack.c.b16 %v177, %v176
  %v187 = vpack.c.b16 %v179, %v178
  %196 = vmatprep.subr.bf16.mxu0 0
  %197 = vmatpush1.bf16.msra.mxu0 %v180
  %198 = vmatprep.subr.bf16.mxu0 0
  %199 = vmatpush1.bf16.msra.mxu0 %v181
  %200 = vmatprep.subr.bf16.mxu0 0
  %201 = vmatpush1.bf16.msra.mxu0 %v182
  %202 = vmatprep.subr.bf16.mxu0 0
  %203 = vmatpush1.bf16.msra.mxu0 %v183
  %204 = vmatprep.subr.bf16.mxu0 0
  %205 = vmatpush1.bf16.msra.mxu0 %v184
  %206 = vmatprep.subr.bf16.mxu0 0
  %207 = vmatpush1.bf16.msra.mxu0 %v185
  %208 = vmatprep.subr.bf16.mxu0 0
  %209 = vmatpush1.bf16.msra.mxu0 %v186
  %210 = vmatprep.subr.bf16.mxu0 0
  %211 = vmatpush1.bf16.msra.mxu0 %v187
  %212 = vmatprep.subr.bf16.mxu0 0
  %213 = vmatpush1.bf16.msra.mxu0 0
  %214 = vmatprep.subr.bf16.mxu0 0
  %215 = vmatpush1.bf16.msra.mxu0 0
  %216 = vmatprep.subr.bf16.mxu0 0
  %217 = vmatpush1.bf16.msra.mxu0 0
  %218 = vmatprep.subr.bf16.mxu0 0
  %219 = vmatpush1.bf16.msra.mxu0 0
  %220 = vmatprep.subr.bf16.mxu0 0
  %221 = vmatpush1.bf16.msra.mxu0 0
  %222 = vmatprep.subr.bf16.mxu0 0
  %223 = vmatpush1.bf16.msra.mxu0 0
  %224 = vmatprep.subr.bf16.mxu0 0
  %225 = vmatpush1.bf16.msra.mxu0 0
  %226 = vmatprep.subr.bf16.mxu0 0
  %227 = vmatpush1.bf16.msra.mxu0 0
  %228 = vmatprep.mubr.bf16.mxu0 0
  %229 = vmatmul.mubr.bf16.gmra.mrb[0].mxu0 %v124
  %v230 = vpop.f32.mrb[0].mxu0
  %v231 = vadd.f32 0.0, %v230
  %v232 = vpop.f32.mrb[0].mxu0
  %v233 = vpop.f32.mrb[0].mxu0
  %v234 = vadd.f32 0.0, %v233
  %v235 = vpop.f32.mrb[0].mxu0
  %236 = vmatprep.mubr.bf16.mxu0 0
  %237 = vmatmul.mubr.bf16.gmra.mrb[0].mxu0 %v125
  %v238 = vpop.f32.mrb[0].mxu0
  %v239 = vadd.f32 0.0, %v238
  %v240 = vpop.f32.mrb[0].mxu0
  %v241 = vpop.f32.mrb[0].mxu0
  %v242 = vadd.f32 0.0, %v241
  %v243 = vpop.f32.mrb[0].mxu0
  %244 = vmatprep.mubr.bf16.mxu0 0
  %245 = vmatmul.mubr.bf16.gmra.mrb[0].mxu0 %v126
  %v246 = vpop.f32.mrb[0].mxu0
  %v247 = vadd.f32 0.0, %v246
  %v248 = vpop.f32.mrb[0].mxu0
  %v249 = vpop.f32.mrb[0].mxu0
  %v250 = vadd.f32 0.0, %v249
  %v251 = vpop.f32.mrb[0].mxu0
  %252 = vmatprep.mubr.bf16.mxu0 0
  %253 = vmatmul.mubr.bf16.gmra.mrb[0].mxu0 %v127
  %v254 = vpop.f32.mrb[0].mxu0
  %v255 = vadd.f32 0.0, %v254
  %v256 = vpop.f32.mrb[0].mxu0
  %v257 = vpop.f32.mrb[0].mxu0
  %v258 = vadd.f32 0.0, %v257
  %v259 = vpop.f32.mrb[0].mxu0
  %260 = vmatprep.mubr.bf16.mxu0 0
  %261 = vmatmul.mubr.bf16.gmra.mrb[0].mxu0 %v128
  %v262 = vpop.f32.mrb[0].mxu0
  %v263 = vadd.f32 0.0, %v262
  %v264 = vpop.f32.mrb[0].mxu0
  %v265 = vpop.f32.mrb[0].mxu0
  %v266 = vadd.f32 0.0, %v265
  %v267 = vpop.f32.mrb[0].mxu0
  %268 = vmatprep.mubr.bf16.mxu0 0
  %269 = vmatmul.mubr.bf16.gmra.mrb[0].mxu0 %v129
  %v270 = vpop.f32.mrb[0].mxu0
  %v271 = vadd.f32 0.0, %v270
  %v272 = vpop.f32.mrb[0].mxu0
  %v273 = vpop.f32.mrb[0].mxu0
  %v274 = vadd.f32 0.0, %v273
  %v275 = vpop.f32.mrb[0].mxu0
  %276 = vmatprep.mubr.bf16.mxu0 0
  %277 = vmatmul.mubr.bf16.gmra.mrb[0].mxu0 %v130
  %v278 = vpop.f32.mrb[0].mxu0
  %v279 = vadd.f32 0.0, %v278
  %v280 = vpop.f32.mrb[0].mxu0
  %v281 = vpop.f32.mrb[0].mxu0
  %v282 = vadd.f32 0.0, %v281
  %v283 = vpop.f32.mrb[0].mxu0
  %284 = vmatprep.mubr.bf16.mxu0 0
  %285 = vmatmul.mubr.bf16.gmra.mrb[0].mxu0 %v131
  %v286 = vpop.f32.mrb[0].mxu0
  %v287 = vadd.f32 0.0, %v286
  %v288 = vpop.f32.mrb[0].mxu0
  %v289 = vpop.f32.mrb[0].mxu0
  %v290 = vadd.f32 0.0, %v289
  %v291 = vpop.f32.mrb[0].mxu0
  %292 = vdwg.mxu0
  %v293 = vld [vmem:[%s1] sm:$0xf]
  %v294 = vld [vmem:[%s1 + $0x4] sm:$0xf]
  %v295 = vld [vmem:[%s1 + $0x8] sm:$0xf]
  %v296 = vld [vmem:[%s1 + $0xc] sm:$0xf]
  %v297 = vld [vmem:[%s1 + $0x10] sm:$0xf]
  %v298 = vld [vmem:[%s1 + $0x14] sm:$0xf]
  %v299 = vld [vmem:[%s1 + $0x18] sm:$0xf]
  %v300 = vld [vmem:[%s1 + $0x1c] sm:$0xf]
  %v301 = vld [vmem:[%s1 + $0x20] sm:$0xf]
  %v302 = vld [vmem:[%s1 + $0x24] sm:$0xf]
  %v303 = vld [vmem:[%s1 + $0x28] sm:$0xf]
  %v304 = vld [vmem:[%s1 + $0x2c] sm:$0xf]
  %v305 = vld [vmem:[%s1 + $0x30] sm:$0xf]
  %v306 = vld [vmem:[%s1 + $0x34] sm:$0xf]
  %v307 = vld [vmem:[%s1 + $0x38] sm:$0xf]
  %v308 = vld [vmem:[%s1 + $0x3c] sm:$0xf]
  %v309 = vld [vmem:[%s5] sm:$0xf]
  %v310 = vld [vmem:[%s5 + $0x4] sm:$0xf]
  %v311 = vld [vmem:[%s5 + $0x8] sm:$0xf]
  %v312 = vld [vmem:[%s5 + $0xc] sm:$0xf]
  %v313 = vld [vmem:[%s5 + $0x10] sm:$0xf]
  %v314 = vld [vmem:[%s5 + $0x14] sm:$0xf]
  %v315 = vld [vmem:[%s5 + $0x18] sm:$0xf]
  %v316 = vld [vmem:[%s5 + $0x1c] sm:$0xf]
  %v317 = vld [vmem:[%s5 + $0x20] sm:$0xf]
  %v318 = vld [vmem:[%s5 + $0x24] sm:$0xf]
  %v319 = vld [vmem:[%s5 + $0x28] sm:$0xf]
  %v320 = vld [vmem:[%s5 + $0x2c] sm:$0xf]
  %v321 = vld [vmem:[%s5 + $0x30] sm:$0xf]
  %v322 = vld [vmem:[%s5 + $0x34] sm:$0xf]
  %v323 = vld [vmem:[%s5 + $0x38] sm:$0xf]
  %v324 = vld [vmem:[%s5 + $0x3c] sm:$0xf]
  %v341 = vunpack.c.l.b16 %v293
  %v342 = vunpack.c.l.b16 %v294
  %v343 = vunpack.c.l.b16 %v295
  %v344 = vunpack.c.l.b16 %v296
  %v345 = vunpack.c.l.b16 %v297
  %v346 = vunpack.c.l.b16 %v298
  %v347 = vunpack.c.l.b16 %v299
  %v348 = vunpack.c.l.b16 %v300
  %v349 = vunpack.c.l.b16 %v301
  %v350 = vunpack.c.l.b16 %v302
  %v351 = vunpack.c.l.b16 %v303
  %v352 = vunpack.c.l.b16 %v304
  %v353 = vunpack.c.l.b16 %v305
  %v354 = vunpack.c.l.b16 %v306
  %v355 = vunpack.c.l.b16 %v307
  %v356 = vunpack.c.l.b16 %v308
  %v357 = vpack.c.b16 %v342, %v341
  %v358 = vpack.c.b16 %v344, %v343
  %v359 = vpack.c.b16 %v346, %v345
  %v360 = vpack.c.b16 %v348, %v347
  %v361 = vpack.c.b16 %v350, %v349
  %v362 = vpack.c.b16 %v352, %v351
  %v363 = vpack.c.b16 %v354, %v353
  %v364 = vpack.c.b16 %v356, %v355
  %v389 = vunpack.c.l.b16 %v309
  %v390 = vunpack.c.l.b16 %v310
  %v391 = vunpack.c.l.b16 %v311
  %v392 = vunpack.c.l.b16 %v312
  %v393 = vunpack.c.l.b16 %v313
  %v394 = vunpack.c.l.b16 %v314
  %v395 = vunpack.c.l.b16 %v315
  %v396 = vunpack.c.l.b16 %v316
  %v397 = vunpack.c.l.b16 %v317
  %v398 = vunpack.c.l.b16 %v318
  %v399 = vunpack.c.l.b16 %v319
  %v400 = vunpack.c.l.b16 %v320
  %v401 = vunpack.c.l.b16 %v321
  %v402 = vunpack.c.l.b16 %v322
  %v403 = vunpack.c.l.b16 %v323
  %v404 = vunpack.c.l.b16 %v324
  %v405 = vpack.c.b16 %v390, %v389
  %v406 = vpack.c.b16 %v392, %v391
  %v407 = vpack.c.b16 %v394, %v393
  %v408 = vpack.c.b16 %v396, %v395
  %v409 = vpack.c.b16 %v398, %v397
  %v410 = vpack.c.b16 %v400, %v399
  %v411 = vpack.c.b16 %v402, %v401
  %v412 = vpack.c.b16 %v404, %v403
  %421 = vmatprep.subr.bf16.mxu0 0
  %422 = vmatpush1.bf16.msra.mxu0 %v405
  %423 = vmatprep.subr.bf16.mxu0 0
  %424 = vmatpush1.bf16.msra.mxu0 %v406
  %425 = vmatprep.subr.bf16.mxu0 0
  %426 = vmatpush1.bf16.msra.mxu0 %v407
  %427 = vmatprep.subr.bf16.mxu0 0
  %428 = vmatpush1.bf16.msra.mxu0 %v408
  %429 = vmatprep.subr.bf16.mxu0 0
  %430 = vmatpush1.bf16.msra.mxu0 %v409
  %431 = vmatprep.subr.bf16.mxu0 0
  %432 = vmatpush1.bf16.msra.mxu0 %v410
  %433 = vmatprep.subr.bf16.mxu0 0
  %434 = vmatpush1.bf16.msra.mxu0 %v411
  %435 = vmatprep.subr.bf16.mxu0 0
  %436 = vmatpush1.bf16.msra.mxu0 %v412
  %437 = vmatprep.subr.bf16.mxu0 0
  %438 = vmatpush1.bf16.msra.mxu0 0
  %439 = vmatprep.subr.bf16.mxu0 0
  %440 = vmatpush1.bf16.msra.mxu0 0
  %441 = vmatprep.subr.bf16.mxu0 0
  %442 = vmatpush1.bf16.msra.mxu0 0
  %443 = vmatprep.subr.bf16.mxu0 0
  %444 = vmatpush1.bf16.msra.mxu0 0
  %445 = vmatprep.subr.bf16.mxu0 0
  %446 = vmatpush1.bf16.msra.mxu0 0
  %447 = vmatprep.subr.bf16.mxu0 0
  %448 = vmatpush1.bf16.msra.mxu0 0
  %449 = vmatprep.subr.bf16.mxu0 0
  %450 = vmatpush1.bf16.msra.mxu0 0
  %451 = vmatprep.subr.bf16.mxu0 0
  %452 = vmatpush1.bf16.msra.mxu0 0
  %453 = vmatprep.mubr.bf16.mxu0 0
  %454 = vmatmul.mubr.bf16.gmra.mrb[0].mxu0 %v357
  %v455 = vpop.f32.mrb[0].mxu0
  %v456 = vadd.f32 0.0, %v455
  %v457 = vpop.f32.mrb[0].mxu0
  %v458 = vpop.f32.mrb[0].mxu0
  %v459 = vadd.f32 0.0, %v458
  %v460 = vpop.f32.mrb[0].mxu0
  %461 = vmatprep.mubr.bf16.mxu0 0
  %462 = vmatmul.mubr.bf16.gmra.mrb[0].mxu0 %v358
  %v463 = vpop.f32.mrb[0].mxu0
  %v464 = vadd.f32 0.0, %v463
  %v465 = vpop.f32.mrb[0].mxu0
  %v466 = vpop.f32.mrb[0].mxu0
  %v467 = vadd.f32 0.0, %v466
  %v468 = vpop.f32.mrb[0].mxu0
  %469 = vmatprep.mubr.bf16.mxu0 0
  %470 = vmatmul.mubr.bf16.gmra.mrb[0].mxu0 %v359
  %v471 = vpop.f32.mrb[0].mxu0
  %v472 = vadd.f32 0.0, %v471
  %v473 = vpop.f32.mrb[0].mxu0
  %v474 = vpop.f32.mrb[0].mxu0
  %v475 = vadd.f32 0.0, %v474
  %v476 = vpop.f32.mrb[0].mxu0
  %477 = vmatprep.mubr.bf16.mxu0 0
  %478 = vmatmul.mubr.bf16.gmra.mrb[0].mxu0 %v360
  %v479 = vpop.f32.mrb[0].mxu0
  %v480 = vadd.f32 0.0, %v479
  %v481 = vpop.f32.mrb[0].mxu0
  %v482 = vpop.f32.mrb[0].mxu0
  %v483 = vadd.f32 0.0, %v482
  %v484 = vpop.f32.mrb[0].mxu0
  %485 = vmatprep.mubr.bf16.mxu0 0
  %486 = vmatmul.mubr.bf16.gmra.mrb[0].mxu0 %v361
  %v487 = vpop.f32.mrb[0].mxu0
  %v488 = vadd.f32 0.0, %v487
  %v489 = vpop.f32.mrb[0].mxu0
  %v490 = vpop.f32.mrb[0].mxu0
  %v491 = vadd.f32 0.0, %v490
  %v492 = vpop.f32.mrb[0].mxu0
  %493 = vmatprep.mubr.bf16.mxu0 0
  %494 = vmatmul.mubr.bf16.gmra.mrb[0].mxu0 %v362
  %v495 = vpop.f32.mrb[0].mxu0
  %v496 = vadd.f32 0.0, %v495
  %v497 = vpop.f32.mrb[0].mxu0
  %v498 = vpop.f32.mrb[0].mxu0
  %v499 = vadd.f32 0.0, %v498
  %v500 = vpop.f32.mrb[0].mxu0
  %501 = vmatprep.mubr.bf16.mxu0 0
  %502 = vmatmul.mubr.bf16.gmra.mrb[0].mxu0 %v363
  %v503 = vpop.f32.mrb[0].mxu0
  %v504 = vadd.f32 0.0, %v503
  %v505 = vpop.f32.mrb[0].mxu0
  %v506 = vpop.f32.mrb[0].mxu0
  %v507 = vadd.f32 0.0, %v506
  %v508 = vpop.f32.mrb[0].mxu0
  %509 = vmatprep.mubr.bf16.mxu0 0
  %510 = vmatmul.mubr.bf16.gmra.mrb[0].mxu0 %v364
  %v511 = vpop.f32.mrb[0].mxu0
  %v512 = vadd.f32 0.0, %v511
  %v513 = vpop.f32.mrb[0].mxu0
  %v514 = vpop.f32.mrb[0].mxu0
  %v515 = vadd.f32 0.0, %v514
  %v516 = vpop.f32.mrb[0].mxu0
  %517 = vdwg.mxu0
  %v518 = vpack.c.bf16 %v234, %v231
  %v519 = vpack.c.bf16 %v242, %v239
  %v520 = vpack.c.bf16 %v250, %v247
  %v521 = vpack.c.bf16 %v258, %v255
  %v522 = vpack.c.bf16 %v266, %v263
  %v523 = vpack.c.bf16 %v274, %v271
  %v524 = vpack.c.bf16 %v282, %v279
  %v525 = vpack.c.bf16 %v290, %v287
  %v534 = vunpack.c.l.b16 %v518
  %v535 = vunpack.c.h.b16 %v518
  %v536 = vunpack.c.l.b16 %v519
  %v537 = vunpack.c.h.b16 %v519
  %v538 = vunpack.c.l.b16 %v520
  %v539 = vunpack.c.h.b16 %v520
  %v540 = vunpack.c.l.b16 %v521
  %v541 = vunpack.c.h.b16 %v521
  %v542 = vunpack.c.l.b16 %v522
  %v543 = vunpack.c.h.b16 %v522
  %v544 = vunpack.c.l.b16 %v523
  %v545 = vunpack.c.h.b16 %v523
  %v546 = vunpack.c.l.b16 %v524
  %v547 = vunpack.c.h.b16 %v524
  %v548 = vunpack.c.l.b16 %v525
  %v549 = vunpack.c.h.b16 %v525
  %v550 = vpack.c.b16 %v534, %v534
  %v551 = vpack.c.b16 %v535, %v535
  %v552 = vpack.c.b16 %v536, %v536
  %v553 = vpack.c.b16 %v537, %v537
  %v554 = vpack.c.b16 %v538, %v538
  %v555 = vpack.c.b16 %v539, %v539
  %v556 = vpack.c.b16 %v540, %v540
  %v557 = vpack.c.b16 %v541, %v541
  %v558 = vpack.c.b16 %v542, %v542
  %v559 = vpack.c.b16 %v543, %v543
  %v560 = vpack.c.b16 %v544, %v544
  %v561 = vpack.c.b16 %v545, %v545
  %v562 = vpack.c.b16 %v546, %v546
  %v563 = vpack.c.b16 %v547, %v547
  %v564 = vpack.c.b16 %v548, %v548
  %v565 = vpack.c.b16 %v549, %v549
  %582 = vst [vmem:[%s6] sm:$0xf] %v550
  %583 = vst [vmem:[%s6 + $0x4] sm:$0xf] %v551
  %584 = vst [vmem:[%s6 + $0x8] sm:$0xf] %v552
  %585 = vst [vmem:[%s6 + $0xc] sm:$0xf] %v553
  %586 = vst [vmem:[%s6 + $0x10] sm:$0xf] %v554
  %587 = vst [vmem:[%s6 + $0x14] sm:$0xf] %v555
  %588 = vst [vmem:[%s6 + $0x18] sm:$0xf] %v556
  %589 = vst [vmem:[%s6 + $0x1c] sm:$0xf] %v557
  %590 = vst [vmem:[%s6 + $0x20] sm:$0xf] %v558
  %591 = vst [vmem:[%s6 + $0x24] sm:$0xf] %v559
  %592 = vst [vmem:[%s6 + $0x28] sm:$0xf] %v560
  %593 = vst [vmem:[%s6 + $0x2c] sm:$0xf] %v561
  %594 = vst [vmem:[%s6 + $0x30] sm:$0xf] %v562
  %595 = vst [vmem:[%s6 + $0x34] sm:$0xf] %v563
  %596 = vst [vmem:[%s6 + $0x38] sm:$0xf] %v564
  %597 = vst [vmem:[%s6 + $0x3c] sm:$0xf] %v565
  %v598 = vpack.c.bf16 %v459, %v456
  %v599 = vpack.c.bf16 %v467, %v464
  %v600 = vpack.c.bf16 %v475, %v472
  %v601 = vpack.c.bf16 %v483, %v480
  %v602 = vpack.c.bf16 %v491, %v488
  %v603 = vpack.c.bf16 %v499, %v496
  %v604 = vpack.c.bf16 %v507, %v504
  %v605 = vpack.c.bf16 %v515, %v512
  %v614 = vunpack.c.l.b16 %v598
  %v615 = vunpack.c.h.b16 %v598
  %v616 = vunpack.c.l.b16 %v599
  %v617 = vunpack.c.h.b16 %v599
  %v618 = vunpack.c.l.b16 %v600
  %v619 = vunpack.c.h.b16 %v600
  %v620 = vunpack.c.l.b16 %v601
  %v621 = vunpack.c.h.b16 %v601
  %v622 = vunpack.c.l.b16 %v602
  %v623 = vunpack.c.h.b16 %v602
  %v624 = vunpack.c.l.b16 %v603
  %v625 = vunpack.c.h.b16 %v603
  %v626 = vunpack.c.l.b16 %v604
  %v627 = vunpack.c.h.b16 %v604
  %v628 = vunpack.c.l.b16 %v605
  %v629 = vunpack.c.h.b16 %v605
  %v630 = vpack.c.b16 %v614, %v614
  %v631 = vpack.c.b16 %v615, %v615
  %v632 = vpack.c.b16 %v616, %v616
  %v633 = vpack.c.b16 %v617, %v617
  %v634 = vpack.c.b16 %v618, %v618
  %v635 = vpack.c.b16 %v619, %v619
  %v636 = vpack.c.b16 %v620, %v620
  %v637 = vpack.c.b16 %v621, %v621
  %v638 = vpack.c.b16 %v622, %v622
  %v639 = vpack.c.b16 %v623, %v623
  %v640 = vpack.c.b16 %v624, %v624
  %v641 = vpack.c.b16 %v625, %v625
  %v642 = vpack.c.b16 %v626, %v626
  %v643 = vpack.c.b16 %v627, %v627
  %v644 = vpack.c.b16 %v628, %v628
  %v645 = vpack.c.b16 %v629, %v629
  %662 = vst [vmem:[%s7] sm:$0xf] %v630
  %663 = vst [vmem:[%s7 + $0x4] sm:$0xf] %v631
  %664 = vst [vmem:[%s7 + $0x8] sm:$0xf] %v632
  %665 = vst [vmem:[%s7 + $0xc] sm:$0xf] %v633
  %666 = vst [vmem:[%s7 + $0x10] sm:$0xf] %v634
  %667 = vst [vmem:[%s7 + $0x14] sm:$0xf] %v635
  %668 = vst [vmem:[%s7 + $0x18] sm:$0xf] %v636
  %669 = vst [vmem:[%s7 + $0x1c] sm:$0xf] %v637
  %670 = vst [vmem:[%s7 + $0x20] sm:$0xf] %v638
  %671 = vst [vmem:[%s7 + $0x24] sm:$0xf] %v639
  %672 = vst [vmem:[%s7 + $0x28] sm:$0xf] %v640
  %673 = vst [vmem:[%s7 + $0x2c] sm:$0xf] %v641
  %674 = vst [vmem:[%s7 + $0x30] sm:$0xf] %v642
  %675 = vst [vmem:[%s7 + $0x34] sm:$0xf] %v643
  %676 = vst [vmem:[%s7 + $0x38] sm:$0xf] %v644
  %677 = vst [vmem:[%s7 + $0x3c] sm:$0xf] %v645
  %v678 = vadd.f32 %v231, %v234
  %v679 = vadd.f32 %v678, %v239
  %v680 = vadd.f32 %v679, %v242
  %v681 = vadd.f32 %v680, %v247
  %v682 = vadd.f32 %v681, %v250
  %v683 = vadd.f32 %v682, %v255
  %v684 = vadd.f32 %v683, %v258
  %v685 = vadd.f32 %v684, %v263
  %v686 = vadd.f32 %v685, %v266
  %v687 = vadd.f32 %v686, %v271
  %v688 = vadd.f32 %v687, %v274
  %v689 = vadd.f32 %v688, %v279
  %v690 = vadd.f32 %v689, %v282
  %v691 = vadd.f32 %v690, %v287
  %v692 = vadd.f32 %v691, %v290
  %v693 = vrot.slane %v692, 4
  %v694 = vadd.f32 %v692, %v693
  %v695 = vrot.slane %v694, 2
  %v696 = vadd.f32 %v694, %v695
  %v697 = vrot.slane %v696, 1
  %v698 = vadd.f32 %v696, %v697
  %699 = vst [vmem:[%s8] sm:$0x1] %v698
  %v700 = vmul.f32 %v231, %v231
  %v701 = vmul.f32 %v234, %v234
  %v702 = vmul.f32 %v239, %v239
  %v703 = vmul.f32 %v242, %v242
  %v704 = vmul.f32 %v247, %v247
  %v705 = vmul.f32 %v250, %v250
  %v706 = vmul.f32 %v255, %v255
  %v707 = vmul.f32 %v258, %v258
  %v708 = vmul.f32 %v263, %v263
  %v709 = vmul.f32 %v266, %v266
  %v710 = vmul.f32 %v271, %v271
  %v711 = vmul.f32 %v274, %v274
  %v712 = vmul.f32 %v279, %v279
  %v713 = vmul.f32 %v282, %v282
  %v714 = vmul.f32 %v287, %v287
  %v715 = vmul.f32 %v290, %v290
  %v716 = vadd.f32 %v700, %v701
  %v717 = vadd.f32 %v716, %v702
  %v718 = vadd.f32 %v717, %v703
  %v719 = vadd.f32 %v718, %v704
  %v720 = vadd.f32 %v719, %v705
  %v721 = vadd.f32 %v720, %v706
  %v722 = vadd.f32 %v721, %v707
  %v723 = vadd.f32 %v722, %v708
  %v724 = vadd.f32 %v723, %v709
  %v725 = vadd.f32 %v724, %v710
  %v726 = vadd.f32 %v725, %v711
  %v727 = vadd.f32 %v726, %v712
  %v728 = vadd.f32 %v727, %v713
  %v729 = vadd.f32 %v728, %v714
  %v730 = vadd.f32 %v729, %v715
  %v731 = vrot.slane %v730, 4
  %v732 = vadd.f32 %v730, %v731
  %v733 = vrot.slane %v732, 2
  %v734 = vadd.f32 %v732, %v733
  %v735 = vrot.slane %v734, 1
  %v736 = vadd.f32 %v734, %v735
  %737 = vst [vmem:[%s9] sm:$0x1] %v736
  %v738 = vadd.f32 %v456, %v459
  %v739 = vadd.f32 %v738, %v464
  %v740 = vadd.f32 %v739, %v467
  %v741 = vadd.f32 %v740, %v472
  %v742 = vadd.f32 %v741, %v475
  %v743 = vadd.f32 %v742, %v480
  %v744 = vadd.f32 %v743, %v483
  %v745 = vadd.f32 %v744, %v488
  %v746 = vadd.f32 %v745, %v491
  %v747 = vadd.f32 %v746, %v496
  %v748 = vadd.f32 %v747, %v499
  %v749 = vadd.f32 %v748, %v504
  %v750 = vadd.f32 %v749, %v507
  %v751 = vadd.f32 %v750, %v512
  %v752 = vadd.f32 %v751, %v515
  %v753 = vrot.slane %v752, 4
  %v754 = vadd.f32 %v752, %v753
  %v755 = vrot.slane %v754, 2
  %v756 = vadd.f32 %v754, %v755
  %v757 = vrot.slane %v756, 1
  %v758 = vadd.f32 %v756, %v757
  %759 = vst [vmem:[%s10] sm:$0x1] %v758
  %v760 = vmul.f32 %v456, %v456
  %v761 = vmul.f32 %v459, %v459
  %v762 = vmul.f32 %v464, %v464
  %v763 = vmul.f32 %v467, %v467
  %v764 = vmul.f32 %v472, %v472
  %v765 = vmul.f32 %v475, %v475
  %v766 = vmul.f32 %v480, %v480
  %v767 = vmul.f32 %v483, %v483
  %v768 = vmul.f32 %v488, %v488
  %v769 = vmul.f32 %v491, %v491
  %v770 = vmul.f32 %v496, %v496
  %v771 = vmul.f32 %v499, %v499
  %v772 = vmul.f32 %v504, %v504
  %v773 = vmul.f32 %v507, %v507
  %v774 = vmul.f32 %v512, %v512
  %v775 = vmul.f32 %v515, %v515
  %v776 = vadd.f32 %v760, %v761
  %v777 = vadd.f32 %v776, %v762
  %v778 = vadd.f32 %v777, %v763
  %v779 = vadd.f32 %v778, %v764
  %v780 = vadd.f32 %v779, %v765
  %v781 = vadd.f32 %v780, %v766
  %v782 = vadd.f32 %v781, %v767
  %v783 = vadd.f32 %v782, %v768
  %v784 = vadd.f32 %v783, %v769
  %v785 = vadd.f32 %v784, %v770
  %v786 = vadd.f32 %v785, %v771
  %v787 = vadd.f32 %v786, %v772
  %v788 = vadd.f32 %v787, %v773
  %v789 = vadd.f32 %v788, %v774
  %v790 = vadd.f32 %v789, %v775
  %v791 = vrot.slane %v790, 4
  %v792 = vadd.f32 %v790, %v791
  %v793 = vrot.slane %v792, 2
  %v794 = vadd.f32 %v792, %v793
  %v795 = vrot.slane %v794, 1
  %v796 = vadd.f32 %v794, %v795
  %797 = vst [vmem:[%s11] sm:$0x1] %v796
  // Predicated region
  $region26: #{bottleneck_forward.6} parent=0 // pred_check
    _
  $region27: #{bottleneck_forward.6} parent=0 // pred_check_branch
    %799 = sbr.rel (0) target = $region29
  $region28: #{bottleneck_forward.6} parent=0 // pred_region
    _
  $region29: #{bottleneck_forward.6} parent=0 // pred_fallthru
    _
  // Predicated region
  $region30: #{bottleneck_forward.6} parent=0 // pred_check
    _
  $region31: #{bottleneck_forward.6} parent=0 // pred_check_branch
    %801 = sbr.rel (0) target = $region33
  $region32: #{bottleneck_forward.6} parent=0 // pred_region
    _
  $region33: #{bottleneck_forward.6} parent=0 // pred_fallthru
    _
  // Predicated region
  $region34: #{bottleneck_forward.6} parent=0 // pred_check
    _
  $region35: #{bottleneck_forward.6} parent=0 // pred_check_branch
    %803 = sbr.rel (0) target = $region37
  $region36: #{bottleneck_forward.6} parent=0 // pred_region
    _
  $region37: #{bottleneck_forward.6} parent=0 // pred_fallthru
    _
  // Predicated region
  $region38: #{bottleneck_forward.6} parent=0 // pred_check
    _
  $region39: #{bottleneck_forward.6} parent=0 // pred_check_branch
    %805 = sbr.rel (0) target = $region41
  $region40: #{bottleneck_forward.6} parent=0 // pred_region
    _
  $region41: #{bottleneck_forward.6} parent=0 // pred_fallthru
    _
  // Predicated region
  $region42: #{bottleneck_forward.6} parent=0 // pred_check
    _
  $region43: #{bottleneck_forward.6} parent=0 // pred_check_branch
    %807 = sbr.rel (0) target = $region45
  $region44: #{bottleneck_forward.6} parent=0 // pred_region
    _
  $region45: #{bottleneck_forward.6} parent=0 // pred_fallthru
    _
  // Predicated region
  $region46: #{bottleneck_forward.6} parent=0 // pred_check
    _
  $region47: #{bottleneck_forward.6} parent=0 // pred_check_branch
    %809 = sbr.rel (0) target = $region49
  $region48: #{bottleneck_forward.6} parent=0 // pred_region
    _
  $region49: #{bottleneck_forward.6} parent=0 // pred_fallthru
    _
  // Predicated region
  $region50: #{bottleneck_forward.6} parent=0 // pred_check
    _
  $region51: #{bottleneck_forward.6} parent=0 // pred_check_branch
    %811 = sbr.rel (0) target = $region53
  $region52: #{bottleneck_forward.6} parent=0 // pred_region
    _
  $region53: #{bottleneck_forward.6} parent=0 // pred_fallthru
    _
  // Predicated region
  $region54: #{bottleneck_forward.6} parent=0 // pred_check
    _
  $region55: #{bottleneck_forward.6} parent=0 // pred_check_branch
    %813 = sbr.rel (0) target = $region57
  $region56: #{bottleneck_forward.6} parent=0 // pred_region
    _
  $region57: #{bottleneck_forward.6} parent=0 // pred_fallthru
    _
  // Predicated region
  $region58: #{bottleneck_forward.6} parent=0 // pred_check
    _
  $region59: #{bottleneck_forward.6} parent=0 // pred_check_branch
    %815 = sbr.rel (0) target = $region61
  $region60: #{bottleneck_forward.6} parent=0 // pred_region
    _
  $region61: #{bottleneck_forward.6} parent=0 // pred_fallthru
    _
  // Predicated region
  $region62: #{bottleneck_forward.6} parent=0 // pred_check
    _
  $region63: #{bottleneck_forward.6} parent=0 // pred_check_branch
    %817 = sbr.rel (0) target = $region65
  $region64: #{bottleneck_forward.6} parent=0 // pred_region
    _
  $region65: #{bottleneck_forward.6} parent=0 // pred_fallthru
    _
  // Predicated region
  $region66: #{bottleneck_forward.6} parent=0 // pred_check
    _
  $region67: #{bottleneck_forward.6} parent=0 // pred_check_branch
    %819 = sbr.rel (0) target = $region69
  $region68: #{bottleneck_forward.6} parent=0 // pred_region
    _
  $region69: #{bottleneck_forward.6} parent=0 // pred_fallthru
    _
  // Predicated region
  $region70: #{bottleneck_forward.6} parent=0 // pred_check
    _
  $region71: #{bottleneck_forward.6} parent=0 // pred_check_branch
    %821 = sbr.rel (0) target = $region73
  $region72: #{bottleneck_forward.6} parent=0 // pred_region
    _
  $region73: #{bottleneck_forward.6} parent=0 // pred_fallthru
    _

// kernel: bottleneck_forward.7
$region0: #{bottleneck_forward.7}
  #allocation0 [shape = 'u32[]', space=smem, size = 0x4, offset = 0x4, fixed_abs, tag = 'smem constant byte address 0x4 - core index']
  #allocation1 [shape = 'u32[144,128]{1,0:T(1,128)}', space=vmem, size = 0x12000, scoped, tag = 'internal scratch']
  %s0 = inlined_call_operand.vmem [shape: bf16[128,128], index: 0, kind: input, shape index: {}]
  %s1 = inlined_call_operand.vmem [shape: bf16[128,128], index: 1, kind: input, shape index: {}]
  %s2 = inlined_call_operand.vmem [shape: f32[1,128], index: 2, kind: input, shape index: {}]
  %s3 = inlined_call_operand.vmem [shape: f32[1,128], index: 3, kind: input, shape index: {}]
  %s4 = inlined_call_operand.vmem [shape: f32[1,128], index: 4, kind: input, shape index: {}]
  %s5 = inlined_call_operand.vmem [shape: f32[1,128], index: 5, kind: input, shape index: {}]
  %s6 = inlined_call_operand.vmem [shape: f32[128,128], index: 6, kind: output, shape index: {}]
  %s7 = sld [smem:[#allocation0]]
  $region34: #{bottleneck_forward.7} parent=0
    _
  %s9 = ssub.s32 1, %s7
  %s10 = scalar_select 0, %s9, %s7
  // Predicated region
  $region2: #{bottleneck_forward.7} parent=0 // pred_check
    _
  $region3: #{bottleneck_forward.7} parent=0 // pred_check_branch
    %12 = sbr.rel (0) target = $region5
  $region4: #{bottleneck_forward.7} parent=0 // pred_region
    _
  $region5: #{bottleneck_forward.7} parent=0 // pred_fallthru
    _
  // Predicated region
  $region6: #{bottleneck_forward.7} parent=0 // pred_check
    _
  $region7: #{bottleneck_forward.7} parent=0 // pred_check_branch
    %14 = sbr.rel (0) target = $region9
  $region8: #{bottleneck_forward.7} parent=0 // pred_region
    _
  $region9: #{bottleneck_forward.7} parent=0 // pred_fallthru
    _
  // Predicated region
  $region10: #{bottleneck_forward.7} parent=0 // pred_check
    _
  $region11: #{bottleneck_forward.7} parent=0 // pred_check_branch
    %16 = sbr.rel (0) target = $region13
  $region12: #{bottleneck_forward.7} parent=0 // pred_region
    _
  $region13: #{bottleneck_forward.7} parent=0 // pred_fallthru
    _
  // Predicated region
  $region14: #{bottleneck_forward.7} parent=0 // pred_check
    _
  $region15: #{bottleneck_forward.7} parent=0 // pred_check_branch
    %18 = sbr.rel (0) target = $region17
  $region16: #{bottleneck_forward.7} parent=0 // pred_region
    _
  $region17: #{bottleneck_forward.7} parent=0 // pred_fallthru
    _
  // Predicated region
  $region18: #{bottleneck_forward.7} parent=0 // pred_check
    _
  $region19: #{bottleneck_forward.7} parent=0 // pred_check_branch
    %20 = sbr.rel (0) target = $region21
  $region20: #{bottleneck_forward.7} parent=0 // pred_region
    _
  $region21: #{bottleneck_forward.7} parent=0 // pred_fallthru
    _
  // Predicated region
  $region22: #{bottleneck_forward.7} parent=0 // pred_check
    _
  $region23: #{bottleneck_forward.7} parent=0 // pred_check_branch
    %22 = sbr.rel (0) target = $region25
  $region24: #{bottleneck_forward.7} parent=0 // pred_region
    _
  $region25: #{bottleneck_forward.7} parent=0 // pred_fallthru
    _
  %v23 = vld [vmem:[%s0] sm:$0xf]
  %v24 = vld [vmem:[%s0 + $0x4] sm:$0xf]
  %v25 = vld [vmem:[%s0 + $0x8] sm:$0xf]
  %v26 = vld [vmem:[%s0 + $0xc] sm:$0xf]
  %v27 = vld [vmem:[%s0 + $0x10] sm:$0xf]
  %v28 = vld [vmem:[%s0 + $0x14] sm:$0xf]
  %v29 = vld [vmem:[%s0 + $0x18] sm:$0xf]
  %v30 = vld [vmem:[%s0 + $0x1c] sm:$0xf]
  %v31 = vld [vmem:[%s0 + $0x20] sm:$0xf]
  %v32 = vld [vmem:[%s0 + $0x24] sm:$0xf]
  %v33 = vld [vmem:[%s0 + $0x28] sm:$0xf]
  %v34 = vld [vmem:[%s0 + $0x2c] sm:$0xf]
  %v35 = vld [vmem:[%s0 + $0x30] sm:$0xf]
  %v36 = vld [vmem:[%s0 + $0x34] sm:$0xf]
  %v37 = vld [vmem:[%s0 + $0x38] sm:$0xf]
  %v38 = vld [vmem:[%s0 + $0x3c] sm:$0xf]
  %v39 = vunpack.c.l.bf16 %v23
  %v40 = vunpack.c.l.bf16 %v24
  %v41 = vunpack.c.l.bf16 %v25
  %v42 = vunpack.c.l.bf16 %v26
  %v43 = vunpack.c.l.bf16 %v27
  %v44 = vunpack.c.l.bf16 %v28
  %v45 = vunpack.c.l.bf16 %v29
  %v46 = vunpack.c.l.bf16 %v30
  %v47 = vunpack.c.l.bf16 %v31
  %v48 = vunpack.c.l.bf16 %v32
  %v49 = vunpack.c.l.bf16 %v33
  %v50 = vunpack.c.l.bf16 %v34
  %v51 = vunpack.c.l.bf16 %v35
  %v52 = vunpack.c.l.bf16 %v36
  %v53 = vunpack.c.l.bf16 %v37
  %v54 = vunpack.c.l.bf16 %v38
  %v55 = vld [vmem:[%s2] sm:$0x1]
  %v57 = vlaneseq
  %v58 = vshrl.u32 %v57, 7
  %v59 = vsub.s32 0, %v58
  %v60 = vrot.slane %v55, %v59
  %v62 = vmul.f32 %v39, %v60
  %v63 = vmul.f32 %v40, %v60
  %v64 = vmul.f32 %v41, %v60
  %v65 = vmul.f32 %v42, %v60
  %v66 = vmul.f32 %v43, %v60
  %v67 = vmul.f32 %v44, %v60
  %v68 = vmul.f32 %v45, %v60
  %v69 = vmul.f32 %v46, %v60
  %v70 = vmul.f32 %v47, %v60
  %v71 = vmul.f32 %v48, %v60
  %v72 = vmul.f32 %v49, %v60
  %v73 = vmul.f32 %v50, %v60
  %v74 = vmul.f32 %v51, %v60
  %v75 = vmul.f32 %v52, %v60
  %v76 = vmul.f32 %v53, %v60
  %v77 = vmul.f32 %v54, %v60
  %v78 = vld [vmem:[%s3] sm:$0x1]
  %v80 = vlaneseq
  %v81 = vshrl.u32 %v80, 7
  %v82 = vsub.s32 0, %v81
  %v83 = vrot.slane %v78, %v82
  %v85 = vadd.f32 %v62, %v83
  %v86 = vadd.f32 %v63, %v83
  %v87 = vadd.f32 %v64, %v83
  %v88 = vadd.f32 %v65, %v83
  %v89 = vadd.f32 %v66, %v83
  %v90 = vadd.f32 %v67, %v83
  %v91 = vadd.f32 %v68, %v83
  %v92 = vadd.f32 %v69, %v83
  %v93 = vadd.f32 %v70, %v83
  %v94 = vadd.f32 %v71, %v83
  %v95 = vadd.f32 %v72, %v83
  %v96 = vadd.f32 %v73, %v83
  %v97 = vadd.f32 %v74, %v83
  %v98 = vadd.f32 %v75, %v83
  %v99 = vadd.f32 %v76, %v83
  %v100 = vadd.f32 %v77, %v83
  %v101 = vld [vmem:[%s1] sm:$0xf]
  %v102 = vld [vmem:[%s1 + $0x4] sm:$0xf]
  %v103 = vld [vmem:[%s1 + $0x8] sm:$0xf]
  %v104 = vld [vmem:[%s1 + $0xc] sm:$0xf]
  %v105 = vld [vmem:[%s1 + $0x10] sm:$0xf]
  %v106 = vld [vmem:[%s1 + $0x14] sm:$0xf]
  %v107 = vld [vmem:[%s1 + $0x18] sm:$0xf]
  %v108 = vld [vmem:[%s1 + $0x1c] sm:$0xf]
  %v109 = vld [vmem:[%s1 + $0x20] sm:$0xf]
  %v110 = vld [vmem:[%s1 + $0x24] sm:$0xf]
  %v111 = vld [vmem:[%s1 + $0x28] sm:$0xf]
  %v112 = vld [vmem:[%s1 + $0x2c] sm:$0xf]
  %v113 = vld [vmem:[%s1 + $0x30] sm:$0xf]
  %v114 = vld [vmem:[%s1 + $0x34] sm:$0xf]
  %v115 = vld [vmem:[%s1 + $0x38] sm:$0xf]
  %v116 = vld [vmem:[%s1 + $0x3c] sm:$0xf]
  %v117 = vunpack.c.l.bf16 %v101
  %v118 = vunpack.c.l.bf16 %v102
  %v119 = vunpack.c.l.bf16 %v103
  %v120 = vunpack.c.l.bf16 %v104
  %v121 = vunpack.c.l.bf16 %v105
  %v122 = vunpack.c.l.bf16 %v106
  %v123 = vunpack.c.l.bf16 %v107
  %v124 = vunpack.c.l.bf16 %v108
  %v125 = vunpack.c.l.bf16 %v109
  %v126 = vunpack.c.l.bf16 %v110
  %v127 = vunpack.c.l.bf16 %v111
  %v128 = vunpack.c.l.bf16 %v112
  %v129 = vunpack.c.l.bf16 %v113
  %v130 = vunpack.c.l.bf16 %v114
  %v131 = vunpack.c.l.bf16 %v115
  %v132 = vunpack.c.l.bf16 %v116
  %v133 = vld [vmem:[%s4] sm:$0x1]
  %v135 = vlaneseq
  %v136 = vshrl.u32 %v135, 7
  %v137 = vsub.s32 0, %v136
  %v138 = vrot.slane %v133, %v137
  %v140 = vmul.f32 %v117, %v138
  %v141 = vmul.f32 %v118, %v138
  %v142 = vmul.f32 %v119, %v138
  %v143 = vmul.f32 %v120, %v138
  %v144 = vmul.f32 %v121, %v138
  %v145 = vmul.f32 %v122, %v138
  %v146 = vmul.f32 %v123, %v138
  %v147 = vmul.f32 %v124, %v138
  %v148 = vmul.f32 %v125, %v138
  %v149 = vmul.f32 %v126, %v138
  %v150 = vmul.f32 %v127, %v138
  %v151 = vmul.f32 %v128, %v138
  %v152 = vmul.f32 %v129, %v138
  %v153 = vmul.f32 %v130, %v138
  %v154 = vmul.f32 %v131, %v138
  %v155 = vmul.f32 %v132, %v138
  %v156 = vadd.f32 %v85, %v140
  %v157 = vadd.f32 %v86, %v141
  %v158 = vadd.f32 %v87, %v142
  %v159 = vadd.f32 %v88, %v143
  %v160 = vadd.f32 %v89, %v144
  %v161 = vadd.f32 %v90, %v145
  %v162 = vadd.f32 %v91, %v146
  %v163 = vadd.f32 %v92, %v147
  %v164 = vadd.f32 %v93, %v148
  %v165 = vadd.f32 %v94, %v149
  %v166 = vadd.f32 %v95, %v150
  %v167 = vadd.f32 %v96, %v151
  %v168 = vadd.f32 %v97, %v152
  %v169 = vadd.f32 %v98, %v153
  %v170 = vadd.f32 %v99, %v154
  %v171 = vadd.f32 %v100, %v155
  %v172 = vld [vmem:[%s5] sm:$0x1]
  %v174 = vlaneseq
  %v175 = vshrl.u32 %v174, 7
  %v176 = vsub.s32 0, %v175
  %v177 = vrot.slane %v172, %v176
  %v179 = vadd.f32 %v156, %v177
  %v180 = vadd.f32 %v157, %v177
  %v181 = vadd.f32 %v158, %v177
  %v182 = vadd.f32 %v159, %v177
  %v183 = vadd.f32 %v160, %v177
  %v184 = vadd.f32 %v161, %v177
  %v185 = vadd.f32 %v162, %v177
  %v186 = vadd.f32 %v163, %v177
  %v187 = vadd.f32 %v164, %v177
  %v188 = vadd.f32 %v165, %v177
  %v189 = vadd.f32 %v166, %v177
  %v190 = vadd.f32 %v167, %v177
  %v191 = vadd.f32 %v168, %v177
  %v192 = vadd.f32 %v169, %v177
  %v193 = vadd.f32 %v170, %v177
  %v194 = vadd.f32 %v171, %v177
  %v195 = vmax.f32 %v179, 0.0
  %v196 = vmax.f32 %v180, 0.0
  %v197 = vmax.f32 %v181, 0.0
  %v198 = vmax.f32 %v182, 0.0
  %v199 = vmax.f32 %v183, 0.0
  %v200 = vmax.f32 %v184, 0.0
  %v201 = vmax.f32 %v185, 0.0
  %v202 = vmax.f32 %v186, 0.0
  %v203 = vmax.f32 %v187, 0.0
  %v204 = vmax.f32 %v188, 0.0
  %v205 = vmax.f32 %v189, 0.0
  %v206 = vmax.f32 %v190, 0.0
  %v207 = vmax.f32 %v191, 0.0
  %v208 = vmax.f32 %v192, 0.0
  %v209 = vmax.f32 %v193, 0.0
  %v210 = vmax.f32 %v194, 0.0
  %211 = vst [vmem:[%s6] sm:$0xff] %v195
  %212 = vst [vmem:[%s6 + $0x8] sm:$0xff] %v196
  %213 = vst [vmem:[%s6 + $0x10] sm:$0xff] %v197
  %214 = vst [vmem:[%s6 + $0x18] sm:$0xff] %v198
  %215 = vst [vmem:[%s6 + $0x20] sm:$0xff] %v199
  %216 = vst [vmem:[%s6 + $0x28] sm:$0xff] %v200
  %217 = vst [vmem:[%s6 + $0x30] sm:$0xff] %v201
  %218 = vst [vmem:[%s6 + $0x38] sm:$0xff] %v202
  %219 = vst [vmem:[%s6 + $0x40] sm:$0xff] %v203
  %220 = vst [vmem:[%s6 + $0x48] sm:$0xff] %v204
  %221 = vst [vmem:[%s6 + $0x50] sm:$0xff] %v205
  %222 = vst [vmem:[%s6 + $0x58] sm:$0xff] %v206
  %223 = vst [vmem:[%s6 + $0x60] sm:$0xff] %v207
  %224 = vst [vmem:[%s6 + $0x68] sm:$0xff] %v208
  %225 = vst [vmem:[%s6 + $0x70] sm:$0xff] %v209
  %226 = vst [vmem:[%s6 + $0x78] sm:$0xff] %v210
  // Predicated region
  $region26: #{bottleneck_forward.7} parent=0 // pred_check
    _
  $region27: #{bottleneck_forward.7} parent=0 // pred_check_branch
    %228 = sbr.rel (0) target = $region29
  $region28: #{bottleneck_forward.7} parent=0 // pred_region
    _
  $region29: #{bottleneck_forward.7} parent=0 // pred_fallthru
    _
  // Predicated region
  $region30: #{bottleneck_forward.7} parent=0 // pred_check
    _
  $region31: #{bottleneck_forward.7} parent=0 // pred_check_branch
    %230 = sbr.rel (0) target = $region33
  $region32: #{bottleneck_forward.7} parent=0 // pred_region
    _
  $region33: #{bottleneck_forward.7} parent=0 // pred_fallthru
    _

</llo_original>
